<compile_context>
chip_gen: v6e
topology: v6e:2x2x1
jax: 0.10.0
libtpu: 0.0.40
codegen_flags: <defaults>
</compile_context>

<pallas_src>
import functools

import jax
import jax.numpy as jnp
from jax.experimental import pallas as pl
from jax.experimental.pallas import tpu as pltpu

# Deterministic stand-in for the module's random shift_direction (+1 or -1),
# which PyTorch fixes at module-init time, hence a static Python int here.
SHIFT = 1

_N = 28               # rows (the rolled axis)
_M = 28               # cols (the conv axis)
_NM = _N * _M         # 784 flattened spatial (lane dim)
_CI = 24              # in-channels per o-group
_CO = 96              # out-channels per o-group
_K = 7                # conv taps
_HALO = 31            # max |28*shift - (k-3)| for |shift| == 1
_OFF = 128            # lane-aligned offset of the main x copy in the halo scratch
_HB_W = 960           # halo scratch width: needs >= _OFF + _NM + _HALO = 943


def _make_kernel(shift):
    # halo buffer satisfies hb[q] = x_flat[(q - _OFF) mod 784] for q in [97, 943).
    # Tap k needs x_flat[(p - 28*shift + (k-3)) mod 784]  ->  hb[p + start0 + k]
    # with start0 = _OFF - 28*shift - 3  (97 for shift=+1, 153 for shift=-1).
    start0 = _OFF - _N * shift - 3

    def kernel(x_ref, w2_ref, o_ref, hb_ref, x2_ref):
        # x_ref : (2, 24, 784)   in-channels x flattened spatial, per group
        # w2_ref: (96, 168)      out-channel x (tap*24 + in-channel), prepacked
        # o_ref : (2, 96, 784)   out-channel x flattened spatial (already rolled)
        # hb_ref: (24, 960)      circular-halo staging scratch (VMEM)
        # x2_ref: (168, 784)     im2col staging scratch (VMEM)
        col_m = jax.lax.broadcasted_iota(jnp.int32, (_CI, _NM), 1) % _M
        for o in range(2):                                   # static, unrolled
            # Build the halo'd copy of this group's input in VMEM.
            hb_ref[:, _OFF:_OFF + _NM] = x_ref[o]            # aligned main copy
            hb_ref[:, _OFF - _HALO:_OFF] = x_ref[o, :, _NM - _HALO:_NM]
            hb_ref[:, _OFF + _NM:_OFF + _NM + _HALO] = x_ref[o, :, 0:_HALO]
            # im2col: 7 shifted windows (n-roll folded in), conv zero-pad masks.
            for k in range(_K):
                d = k - 3                                    # tap offset [-3, 3]
                v = hb_ref[:, pl.ds(start0 + k, _NM)]        # (24, 784)
                if d < 0:
                    v = jnp.where(col_m >= -d, v, 0.0)
                elif d > 0:
                    v = jnp.where(col_m < _M - d, v, 0.0)
                x2_ref[pl.ds(k * _CI, _CI), :] = v
            # One MXU matmul per group; result is lane-dense and already in
            # (j, n, m) order for this group's output slab.
            o_ref[o] = jnp.dot(w2_ref[...], x2_ref[...],
                               preferred_element_type=jnp.float32
                               ).astype(o_ref.dtype)

    return kernel


def pack_weights(w):
    """One-time (module-init) repack: (24,96,7) -> (96, 168) with col = k*24+i."""
    return jnp.transpose(w, (1, 2, 0)).reshape(_CO, _K * _CI)


@functools.partial(jax.jit, static_argnames=("shift_direction",))
def kernel_generated_3_forward(x, w2, shift_direction=SHIFT):
    # x: (1, 48, 28, 28) float32 NCHW;  w2: (96, 168) float32 (pre-packed weights)
    assert shift_direction in (1, -1), "halo/window math assumes |shift| == 1"
    x_flat = x.reshape(2, _CI, _NM)                      # metadata-only reshape

    out = pl.pallas_call(
        _make_kernel(shift_direction),
        out_shape=jax.ShapeDtypeStruct((2, _CO, _NM), jnp.float32),
        grid_spec=pltpu.PrefetchScalarGridSpec(
            num_scalar_prefetch=0,
            grid=(1,),
            in_specs=[
                pl.BlockSpec((2, _CI, _NM), lambda i: (0, 0, 0)),
                pl.BlockSpec((_CO, _K * _CI), lambda i: (0, 0)),
            ],
            out_specs=pl.BlockSpec((2, _CO, _NM), lambda i: (0, 0, 0)),
            scratch_shapes=[
                pltpu.VMEM((_CI, _HB_W), jnp.float32),      # halo scratch
                pltpu.VMEM((_K * _CI, _NM), jnp.float32),   # im2col scratch
            ],
        ),
        compiler_params=pltpu.CompilerParams(
            dimension_semantics=("arbitrary",)),
        cost_estimate=pl.CostEstimate(
            flops=2 * 2 * _CO * (_K * _CI) * _NM,           # ~50.6 MFLOP
            bytes_accessed=(2 * _CI * _NM + _CO * _K * _CI + 2 * _CO * _NM) * 4,
            transcendentals=0),
    )(x_flat, w2)

    # (2, 96, 784) is already (o, j, n, m) order -> metadata-only reshape to NCHW.
    return out.reshape(1, 2 * _CO, _N, _M)


def reference_forward(x, w, shift_direction=SHIFT):
    """Pure-JAX mirror of the PyTorch forward, for correctness checking."""
    x5 = x.reshape(1, 2, 24, 28, 28)
    xpad = jnp.pad(x5, ((0, 0), (0, 0), (0, 0), (0, 0), (3, 3)))
    # t2[l,o,i,n,k,m] = xpad[l,o,i,n,m+k]
    t2 = jnp.stack([xpad[..., k:k + 28] for k in range(7)], axis=4)
    t3 = jnp.einsum('loinkm,ijk->lojnm', t2, w,
                    precision=jax.lax.Precision.HIGHEST)
    t4 = t3.reshape(1, 192, 28, 28)
    return jnp.roll(t4, shift_direction, axis=2)


if __name__ == "__main__":
    key = jax.random.PRNGKey(0)
    kx, kw = jax.random.split(key)
    # Shapes are fixed by the module's hard-coded reshapes: 1*2*24*28*28 elements.
    x = jax.random.normal(kx, (1, 48, 28, 28), dtype=jnp.float32)
    w = jax.random.normal(kw, (24, 96, 7), dtype=jnp.float32)

    # One-time parameter repack (module-init equivalent), outside the per-call path.
    w2 = jax.block_until_ready(pack_weights(w))

    y = jax.block_until_ready(kernel_generated_3_forward(x, w2, SHIFT))
    assert y.shape == (1, 192, 28, 28)
    assert jnp.allclose(y, reference_forward(x, w, SHIFT), atol=2e-3, rtol=2e-3), \
        "mismatch vs reference (shift=+1)"

    # Also exercise the other branch of the module's random shift_direction.
    y_neg = jax.block_until_ready(
        kernel_generated_3_forward(x, w2, shift_direction=-1))
    assert jnp.allclose(y_neg, reference_forward(x, w, -1), atol=2e-3, rtol=2e-3), \
        "mismatch vs reference (shift=-1)"

    print("KERNEL_OK")
</pallas_src>

<mosaic_0001>
module attributes {stable_mosaic.version = 11 : i64} {
  func.func @kernel(%arg0: i32, %arg1: memref<2x24x784xf32, #tpu.memory_space<vmem>>, %arg2: memref<96x168xf32, #tpu.memory_space<vmem>>, %arg3: memref<2x96x784xf32, #tpu.memory_space<vmem>>, %arg4: memref<24x960xf32, #tpu.memory_space<vmem>>, %arg5: memref<168x784xf32, #tpu.memory_space<vmem>>) attributes {dimension_semantics = [#tpu.dimension_semantics<arbitrary>], iteration_bounds = array<i64: 1>, scalar_prefetch = 0 : i64, scratch_operands = 2 : i64, tpu.core_type = #tpu.core_type<tc>, window_params = [{pipeline_mode = #tpu.pipeline_mode<synchronous>, transform_indices = @transform_0, window_bounds = array<i64: 2, 24, 784>}, {pipeline_mode = #tpu.pipeline_mode<synchronous>, transform_indices = @transform_1, window_bounds = array<i64: 96, 168>}, {pipeline_mode = #tpu.pipeline_mode<synchronous>, transform_indices = @transform_2, window_bounds = array<i64: 2, 96, 784>}]} {
    %0 = tpu.iota {dimensions = array<i32: 1>} : vector<24x784xi32>
    %c28_i32 = arith.constant 28 : i32
    %c0_i32 = arith.constant 0 : i32
    %1 = arith.cmpi eq, %c28_i32, %c0_i32 : i32
    %c1_i32 = arith.constant 1 : i32
    %2 = arith.select %1, %c1_i32, %c28_i32 : i32
    %3 = vector.broadcast %2 : i32 to vector<24x784xi32>
    %4 = arith.remsi %0, %3 : vector<24x784xi32>
    %c0_i32_0 = arith.constant 0 : i32
    %5 = vector.broadcast %c0_i32_0 : i32 to vector<24x784xi32>
    %6 = arith.cmpi ne, %4, %5 : vector<24x784xi32>
    %c0_i32_1 = arith.constant 0 : i32
    %7 = vector.broadcast %c0_i32_1 : i32 to vector<24x784xi32>
    %8 = arith.cmpi slt, %4, %7 : vector<24x784xi32>
    %c0_i32_2 = arith.constant 0 : i32
    %9 = arith.cmpi slt, %2, %c0_i32_2 : i32
    %10 = vector.broadcast %9 : i1 to vector<24x784xi1>
    %11 = vector.broadcast %10 : vector<24x784xi1> to vector<24x784xi1>
    %12 = arith.xori %8, %11 : vector<24x784xi1>
    %13 = arith.andi %12, %6 : vector<24x784xi1>
    %14 = vector.broadcast %2 : i32 to vector<24x784xi32>
    %15 = arith.addi %4, %14 : vector<24x784xi32>
    %16 = arith.select %13, %15, %4 : vector<24x784xi1>, vector<24x784xi32>
    %c0 = arith.constant 0 : index
    %c0_3 = arith.constant 0 : index
    %c0_4 = arith.constant 0 : index
    %17 = vector.load %arg1[%c0, %c0_3, %c0_4] : memref<2x24x784xf32, #tpu.memory_space<vmem>>, vector<1x24x784xf32>
    %18 = vector.shape_cast %17 : vector<1x24x784xf32> to vector<24x784xf32>
    %c0_5 = arith.constant 0 : index
    %c128 = arith.constant 128 : index
    %19 = vector.load %arg4[%c0_5, %c128] : memref<24x960xf32, #tpu.memory_space<vmem>>, vector<24x784xf32>
    tpu.vector_store %arg4[%c0_5, %c128], %18 {strides = array<i32>} : memref<24x960xf32, #tpu.memory_space<vmem>>, vector<24x784xf32>,
    %c0_6 = arith.constant 0 : index
    %c0_7 = arith.constant 0 : index
    %c753 = arith.constant 753 : index
    %20 = vector.load %arg1[%c0_6, %c0_7, %c753] : memref<2x24x784xf32, #tpu.memory_space<vmem>>, vector<1x24x31xf32>
    %21 = vector.shape_cast %20 : vector<1x24x31xf32> to vector<24x31xf32>
    %c0_8 = arith.constant 0 : index
    %c97 = arith.constant 97 : index
    %22 = vector.load %arg4[%c0_8, %c97] : memref<24x960xf32, #tpu.memory_space<vmem>>, vector<24x31xf32>
    tpu.vector_store %arg4[%c0_8, %c97], %21 {strides = array<i32>} : memref<24x960xf32, #tpu.memory_space<vmem>>, vector<24x31xf32>,
    %c0_9 = arith.constant 0 : index
    %c0_10 = arith.constant 0 : index
    %c0_11 = arith.constant 0 : index
    %23 = vector.load %arg1[%c0_9, %c0_10, %c0_11] : memref<2x24x784xf32, #tpu.memory_space<vmem>>, vector<1x24x31xf32>
    %24 = vector.shape_cast %23 : vector<1x24x31xf32> to vector<24x31xf32>
    %c0_12 = arith.constant 0 : index
    %c912 = arith.constant 912 : index
    %25 = vector.load %arg4[%c0_12, %c912] : memref<24x960xf32, #tpu.memory_space<vmem>>, vector<24x31xf32>
    tpu.vector_store %arg4[%c0_12, %c912], %24 {strides = array<i32>} : memref<24x960xf32, #tpu.memory_space<vmem>>, vector<24x31xf32>,
    %c0_13 = arith.constant 0 : index
    %c97_14 = arith.constant 97 : index
    %26 = vector.load %arg4[%c0_13, %c97_14] : memref<24x960xf32, #tpu.memory_space<vmem>>, vector<24x784xf32>
    %c3_i32 = arith.constant 3 : i32
    %27 = vector.broadcast %c3_i32 : i32 to vector<24x784xi32>
    %28 = arith.cmpi sge, %16, %27 : vector<24x784xi32>
    %cst = arith.constant 0.000000e+00 : f32
    %29 = vector.broadcast %cst : f32 to vector<24x784xf32>
    %30 = arith.select %28, %26, %29 : vector<24x784xi1>, vector<24x784xf32>
    %c0_15 = arith.constant 0 : index
    %c0_16 = arith.constant 0 : index
    %31 = vector.load %arg5[%c0_15, %c0_16] : memref<168x784xf32, #tpu.memory_space<vmem>>, vector<24x784xf32>
    tpu.vector_store %arg5[%c0_15, %c0_16], %30 {strides = array<i32>} : memref<168x784xf32, #tpu.memory_space<vmem>>, vector<24x784xf32>,
    %c0_17 = arith.constant 0 : index
    %c98 = arith.constant 98 : index
    %32 = vector.load %arg4[%c0_17, %c98] : memref<24x960xf32, #tpu.memory_space<vmem>>, vector<24x784xf32>
    %c2_i32 = arith.constant 2 : i32
    %33 = vector.broadcast %c2_i32 : i32 to vector<24x784xi32>
    %34 = arith.cmpi sge, %16, %33 : vector<24x784xi32>
    %cst_18 = arith.constant 0.000000e+00 : f32
    %35 = vector.broadcast %cst_18 : f32 to vector<24x784xf32>
    %36 = arith.select %34, %32, %35 : vector<24x784xi1>, vector<24x784xf32>
    %c24 = arith.constant 24 : index
    %c0_19 = arith.constant 0 : index
    %37 = vector.load %arg5[%c24, %c0_19] : memref<168x784xf32, #tpu.memory_space<vmem>>, vector<24x784xf32>
    tpu.vector_store %arg5[%c24, %c0_19], %36 {strides = array<i32>} : memref<168x784xf32, #tpu.memory_space<vmem>>, vector<24x784xf32>,
    %c0_20 = arith.constant 0 : index
    %c99 = arith.constant 99 : index
    %38 = vector.load %arg4[%c0_20, %c99] : memref<24x960xf32, #tpu.memory_space<vmem>>, vector<24x784xf32>
    %c1_i32_21 = arith.constant 1 : i32
    %39 = vector.broadcast %c1_i32_21 : i32 to vector<24x784xi32>
    %40 = arith.cmpi sge, %16, %39 : vector<24x784xi32>
    %cst_22 = arith.constant 0.000000e+00 : f32
    %41 = vector.broadcast %cst_22 : f32 to vector<24x784xf32>
    %42 = arith.select %40, %38, %41 : vector<24x784xi1>, vector<24x784xf32>
    %c48 = arith.constant 48 : index
    %c0_23 = arith.constant 0 : index
    %43 = vector.load %arg5[%c48, %c0_23] : memref<168x784xf32, #tpu.memory_space<vmem>>, vector<24x784xf32>
    tpu.vector_store %arg5[%c48, %c0_23], %42 {strides = array<i32>} : memref<168x784xf32, #tpu.memory_space<vmem>>, vector<24x784xf32>,
    %c0_24 = arith.constant 0 : index
    %c100 = arith.constant 100 : index
    %44 = vector.load %arg4[%c0_24, %c100] : memref<24x960xf32, #tpu.memory_space<vmem>>, vector<24x784xf32>
    %c72 = arith.constant 72 : index
    %c0_25 = arith.constant 0 : index
    %45 = vector.load %arg5[%c72, %c0_25] : memref<168x784xf32, #tpu.memory_space<vmem>>, vector<24x784xf32>
    tpu.vector_store %arg5[%c72, %c0_25], %44 {strides = array<i32>} : memref<168x784xf32, #tpu.memory_space<vmem>>, vector<24x784xf32>,
    %c0_26 = arith.constant 0 : index
    %c101 = arith.constant 101 : index
    %46 = vector.load %arg4[%c0_26, %c101] : memref<24x960xf32, #tpu.memory_space<vmem>>, vector<24x784xf32>
    %c27_i32 = arith.constant 27 : i32
    %47 = vector.broadcast %c27_i32 : i32 to vector<24x784xi32>
    %48 = arith.cmpi slt, %16, %47 : vector<24x784xi32>
    %cst_27 = arith.constant 0.000000e+00 : f32
    %49 = vector.broadcast %cst_27 : f32 to vector<24x784xf32>
    %50 = arith.select %48, %46, %49 : vector<24x784xi1>, vector<24x784xf32>
    %c96 = arith.constant 96 : index
    %c0_28 = arith.constant 0 : index
    %51 = vector.load %arg5[%c96, %c0_28] : memref<168x784xf32, #tpu.memory_space<vmem>>, vector<24x784xf32>
    tpu.vector_store %arg5[%c96, %c0_28], %50 {strides = array<i32>} : memref<168x784xf32, #tpu.memory_space<vmem>>, vector<24x784xf32>,
    %c0_29 = arith.constant 0 : index
    %c102 = arith.constant 102 : index
    %52 = vector.load %arg4[%c0_29, %c102] : memref<24x960xf32, #tpu.memory_space<vmem>>, vector<24x784xf32>
    %c26_i32 = arith.constant 26 : i32
    %53 = vector.broadcast %c26_i32 : i32 to vector<24x784xi32>
    %54 = arith.cmpi slt, %16, %53 : vector<24x784xi32>
    %cst_30 = arith.constant 0.000000e+00 : f32
    %55 = vector.broadcast %cst_30 : f32 to vector<24x784xf32>
    %56 = arith.select %54, %52, %55 : vector<24x784xi1>, vector<24x784xf32>
    %c120 = arith.constant 120 : index
    %c0_31 = arith.constant 0 : index
    %57 = vector.load %arg5[%c120, %c0_31] : memref<168x784xf32, #tpu.memory_space<vmem>>, vector<24x784xf32>
    tpu.vector_store %arg5[%c120, %c0_31], %56 {strides = array<i32>} : memref<168x784xf32, #tpu.memory_space<vmem>>, vector<24x784xf32>,
    %c0_32 = arith.constant 0 : index
    %c103 = arith.constant 103 : index
    %58 = vector.load %arg4[%c0_32, %c103] : memref<24x960xf32, #tpu.memory_space<vmem>>, vector<24x784xf32>
    %c25_i32 = arith.constant 25 : i32
    %59 = vector.broadcast %c25_i32 : i32 to vector<24x784xi32>
    %60 = arith.cmpi slt, %16, %59 : vector<24x784xi32>
    %cst_33 = arith.constant 0.000000e+00 : f32
    %61 = vector.broadcast %cst_33 : f32 to vector<24x784xf32>
    %62 = arith.select %60, %58, %61 : vector<24x784xi1>, vector<24x784xf32>
    %c144 = arith.constant 144 : index
    %c0_34 = arith.constant 0 : index
    %63 = vector.load %arg5[%c144, %c0_34] : memref<168x784xf32, #tpu.memory_space<vmem>>, vector<24x784xf32>
    tpu.vector_store %arg5[%c144, %c0_34], %62 {strides = array<i32>} : memref<168x784xf32, #tpu.memory_space<vmem>>, vector<24x784xf32>,
    %c0_35 = arith.constant 0 : index
    %c0_36 = arith.constant 0 : index
    %64 = vector.load %arg2[%c0_35, %c0_36] : memref<96x168xf32, #tpu.memory_space<vmem>>, vector<96x168xf32>
    %c0_37 = arith.constant 0 : index
    %c0_38 = arith.constant 0 : index
    %65 = vector.load %arg5[%c0_37, %c0_38] : memref<168x784xf32, #tpu.memory_space<vmem>>, vector<168x784xf32>
    %cst_39 = arith.constant dense<0.000000e+00> : vector<96x784xf32>
    %66 = tpu.matmul %64, %65, %cst_39 {dimension_numbers = #tpu.dot_dimension_numbers<[1], [0], [0], [1], [0, 0, 1, 1], [], []>} : vector<96x168xf32>, vector<168x784xf32>, vector<96x784xf32> -> vector<96x784xf32>
    %c0_40 = arith.constant 0 : index
    %c0_41 = arith.constant 0 : index
    %c0_42 = arith.constant 0 : index
    %67 = vector.load %arg3[%c0_40, %c0_41, %c0_42] : memref<2x96x784xf32, #tpu.memory_space<vmem>>, vector<1x96x784xf32>
    %68 = vector.shape_cast %67 : vector<1x96x784xf32> to vector<96x784xf32>
    %69 = vector.shape_cast %66 : vector<96x784xf32> to vector<1x96x784xf32>
    tpu.vector_store %arg3[%c0_40, %c0_41, %c0_42], %69 {strides = array<i32>} : memref<2x96x784xf32, #tpu.memory_space<vmem>>, vector<1x96x784xf32>,
    %c1 = arith.constant 1 : index
    %c0_43 = arith.constant 0 : index
    %c0_44 = arith.constant 0 : index
    %70 = vector.load %arg1[%c1, %c0_43, %c0_44] : memref<2x24x784xf32, #tpu.memory_space<vmem>>, vector<1x24x784xf32>
    %71 = vector.shape_cast %70 : vector<1x24x784xf32> to vector<24x784xf32>
    %c0_45 = arith.constant 0 : index
    %c128_46 = arith.constant 128 : index
    %72 = vector.load %arg4[%c0_45, %c128_46] : memref<24x960xf32, #tpu.memory_space<vmem>>, vector<24x784xf32>
    tpu.vector_store %arg4[%c0_45, %c128_46], %71 {strides = array<i32>} : memref<24x960xf32, #tpu.memory_space<vmem>>, vector<24x784xf32>,
    %c1_47 = arith.constant 1 : index
    %c0_48 = arith.constant 0 : index
    %c753_49 = arith.constant 753 : index
    %73 = vector.load %arg1[%c1_47, %c0_48, %c753_49] : memref<2x24x784xf32, #tpu.memory_space<vmem>>, vector<1x24x31xf32>
    %74 = vector.shape_cast %73 : vector<1x24x31xf32> to vector<24x31xf32>
    %c0_50 = arith.constant 0 : index
    %c97_51 = arith.constant 97 : index
    %75 = vector.load %arg4[%c0_50, %c97_51] : memref<24x960xf32, #tpu.memory_space<vmem>>, vector<24x31xf32>
    tpu.vector_store %arg4[%c0_50, %c97_51], %74 {strides = array<i32>} : memref<24x960xf32, #tpu.memory_space<vmem>>, vector<24x31xf32>,
    %c1_52 = arith.constant 1 : index
    %c0_53 = arith.constant 0 : index
    %c0_54 = arith.constant 0 : index
    %76 = vector.load %arg1[%c1_52, %c0_53, %c0_54] : memref<2x24x784xf32, #tpu.memory_space<vmem>>, vector<1x24x31xf32>
    %77 = vector.shape_cast %76 : vector<1x24x31xf32> to vector<24x31xf32>
    %c0_55 = arith.constant 0 : index
    %c912_56 = arith.constant 912 : index
    %78 = vector.load %arg4[%c0_55, %c912_56] : memref<24x960xf32, #tpu.memory_space<vmem>>, vector<24x31xf32>
    tpu.vector_store %arg4[%c0_55, %c912_56], %77 {strides = array<i32>} : memref<24x960xf32, #tpu.memory_space<vmem>>, vector<24x31xf32>,
    %c0_57 = arith.constant 0 : index
    %c97_58 = arith.constant 97 : index
    %79 = vector.load %arg4[%c0_57, %c97_58] : memref<24x960xf32, #tpu.memory_space<vmem>>, vector<24x784xf32>
    %c3_i32_59 = arith.constant 3 : i32
    %80 = vector.broadcast %c3_i32_59 : i32 to vector<24x784xi32>
    %81 = arith.cmpi sge, %16, %80 : vector<24x784xi32>
    %cst_60 = arith.constant 0.000000e+00 : f32
    %82 = vector.broadcast %cst_60 : f32 to vector<24x784xf32>
    %83 = arith.select %81, %79, %82 : vector<24x784xi1>, vector<24x784xf32>
    %c0_61 = arith.constant 0 : index
    %c0_62 = arith.constant 0 : index
    %84 = vector.load %arg5[%c0_61, %c0_62] : memref<168x784xf32, #tpu.memory_space<vmem>>, vector<24x784xf32>
    tpu.vector_store %arg5[%c0_61, %c0_62], %83 {strides = array<i32>} : memref<168x784xf32, #tpu.memory_space<vmem>>, vector<24x784xf32>,
    %c0_63 = arith.constant 0 : index
    %c98_64 = arith.constant 98 : index
    %85 = vector.load %arg4[%c0_63, %c98_64] : memref<24x960xf32, #tpu.memory_space<vmem>>, vector<24x784xf32>
    %c2_i32_65 = arith.constant 2 : i32
    %86 = vector.broadcast %c2_i32_65 : i32 to vector<24x784xi32>
    %87 = arith.cmpi sge, %16, %86 : vector<24x784xi32>
    %cst_66 = arith.constant 0.000000e+00 : f32
    %88 = vector.broadcast %cst_66 : f32 to vector<24x784xf32>
    %89 = arith.select %87, %85, %88 : vector<24x784xi1>, vector<24x784xf32>
    %c24_67 = arith.constant 24 : index
    %c0_68 = arith.constant 0 : index
    %90 = vector.load %arg5[%c24_67, %c0_68] : memref<168x784xf32, #tpu.memory_space<vmem>>, vector<24x784xf32>
    tpu.vector_store %arg5[%c24_67, %c0_68], %89 {strides = array<i32>} : memref<168x784xf32, #tpu.memory_space<vmem>>, vector<24x784xf32>,
    %c0_69 = arith.constant 0 : index
    %c99_70 = arith.constant 99 : index
    %91 = vector.load %arg4[%c0_69, %c99_70] : memref<24x960xf32, #tpu.memory_space<vmem>>, vector<24x784xf32>
    %c1_i32_71 = arith.constant 1 : i32
    %92 = vector.broadcast %c1_i32_71 : i32 to vector<24x784xi32>
    %93 = arith.cmpi sge, %16, %92 : vector<24x784xi32>
    %cst_72 = arith.constant 0.000000e+00 : f32
    %94 = vector.broadcast %cst_72 : f32 to vector<24x784xf32>
    %95 = arith.select %93, %91, %94 : vector<24x784xi1>, vector<24x784xf32>
    %c48_73 = arith.constant 48 : index
    %c0_74 = arith.constant 0 : index
    %96 = vector.load %arg5[%c48_73, %c0_74] : memref<168x784xf32, #tpu.memory_space<vmem>>, vector<24x784xf32>
    tpu.vector_store %arg5[%c48_73, %c0_74], %95 {strides = array<i32>} : memref<168x784xf32, #tpu.memory_space<vmem>>, vector<24x784xf32>,
    %c0_75 = arith.constant 0 : index
    %c100_76 = arith.constant 100 : index
    %97 = vector.load %arg4[%c0_75, %c100_76] : memref<24x960xf32, #tpu.memory_space<vmem>>, vector<24x784xf32>
    %c72_77 = arith.constant 72 : index
    %c0_78 = arith.constant 0 : index
    %98 = vector.load %arg5[%c72_77, %c0_78] : memref<168x784xf32, #tpu.memory_space<vmem>>, vector<24x784xf32>
    tpu.vector_store %arg5[%c72_77, %c0_78], %97 {strides = array<i32>} : memref<168x784xf32, #tpu.memory_space<vmem>>, vector<24x784xf32>,
    %c0_79 = arith.constant 0 : index
    %c101_80 = arith.constant 101 : index
    %99 = vector.load %arg4[%c0_79, %c101_80] : memref<24x960xf32, #tpu.memory_space<vmem>>, vector<24x784xf32>
    %c27_i32_81 = arith.constant 27 : i32
    %100 = vector.broadcast %c27_i32_81 : i32 to vector<24x784xi32>
    %101 = arith.cmpi slt, %16, %100 : vector<24x784xi32>
    %cst_82 = arith.constant 0.000000e+00 : f32
    %102 = vector.broadcast %cst_82 : f32 to vector<24x784xf32>
    %103 = arith.select %101, %99, %102 : vector<24x784xi1>, vector<24x784xf32>
    %c96_83 = arith.constant 96 : index
    %c0_84 = arith.constant 0 : index
    %104 = vector.load %arg5[%c96_83, %c0_84] : memref<168x784xf32, #tpu.memory_space<vmem>>, vector<24x784xf32>
    tpu.vector_store %arg5[%c96_83, %c0_84], %103 {strides = array<i32>} : memref<168x784xf32, #tpu.memory_space<vmem>>, vector<24x784xf32>,
    %c0_85 = arith.constant 0 : index
    %c102_86 = arith.constant 102 : index
    %105 = vector.load %arg4[%c0_85, %c102_86] : memref<24x960xf32, #tpu.memory_space<vmem>>, vector<24x784xf32>
    %c26_i32_87 = arith.constant 26 : i32
    %106 = vector.broadcast %c26_i32_87 : i32 to vector<24x784xi32>
    %107 = arith.cmpi slt, %16, %106 : vector<24x784xi32>
    %cst_88 = arith.constant 0.000000e+00 : f32
    %108 = vector.broadcast %cst_88 : f32 to vector<24x784xf32>
    %109 = arith.select %107, %105, %108 : vector<24x784xi1>, vector<24x784xf32>
    %c120_89 = arith.constant 120 : index
    %c0_90 = arith.constant 0 : index
    %110 = vector.load %arg5[%c120_89, %c0_90] : memref<168x784xf32, #tpu.memory_space<vmem>>, vector<24x784xf32>
    tpu.vector_store %arg5[%c120_89, %c0_90], %109 {strides = array<i32>} : memref<168x784xf32, #tpu.memory_space<vmem>>, vector<24x784xf32>,
    %c0_91 = arith.constant 0 : index
    %c103_92 = arith.constant 103 : index
    %111 = vector.load %arg4[%c0_91, %c103_92] : memref<24x960xf32, #tpu.memory_space<vmem>>, vector<24x784xf32>
    %c25_i32_93 = arith.constant 25 : i32
    %112 = vector.broadcast %c25_i32_93 : i32 to vector<24x784xi32>
    %113 = arith.cmpi slt, %16, %112 : vector<24x784xi32>
    %cst_94 = arith.constant 0.000000e+00 : f32
    %114 = vector.broadcast %cst_94 : f32 to vector<24x784xf32>
    %115 = arith.select %113, %111, %114 : vector<24x784xi1>, vector<24x784xf32>
    %c144_95 = arith.constant 144 : index
    %c0_96 = arith.constant 0 : index
    %116 = vector.load %arg5[%c144_95, %c0_96] : memref<168x784xf32, #tpu.memory_space<vmem>>, vector<24x784xf32>
    tpu.vector_store %arg5[%c144_95, %c0_96], %115 {strides = array<i32>} : memref<168x784xf32, #tpu.memory_space<vmem>>, vector<24x784xf32>,
    %c0_97 = arith.constant 0 : index
    %c0_98 = arith.constant 0 : index
    %117 = vector.load %arg2[%c0_97, %c0_98] : memref<96x168xf32, #tpu.memory_space<vmem>>, vector<96x168xf32>
    %c0_99 = arith.constant 0 : index
    %c0_100 = arith.constant 0 : index
    %118 = vector.load %arg5[%c0_99, %c0_100] : memref<168x784xf32, #tpu.memory_space<vmem>>, vector<168x784xf32>
    %cst_101 = arith.constant dense<0.000000e+00> : vector<96x784xf32>
    %119 = tpu.matmul %117, %118, %cst_101 {dimension_numbers = #tpu.dot_dimension_numbers<[1], [0], [0], [1], [0, 0, 1, 1], [], []>} : vector<96x168xf32>, vector<168x784xf32>, vector<96x784xf32> -> vector<96x784xf32>
    %c1_102 = arith.constant 1 : index
    %c0_103 = arith.constant 0 : index
    %c0_104 = arith.constant 0 : index
    %120 = vector.load %arg3[%c1_102, %c0_103, %c0_104] : memref<2x96x784xf32, #tpu.memory_space<vmem>>, vector<1x96x784xf32>
    %121 = vector.shape_cast %120 : vector<1x96x784xf32> to vector<96x784xf32>
    %122 = vector.shape_cast %119 : vector<96x784xf32> to vector<1x96x784xf32>
    tpu.vector_store %arg3[%c1_102, %c0_103, %c0_104], %122 {strides = array<i32>} : memref<2x96x784xf32, #tpu.memory_space<vmem>>, vector<1x96x784xf32>,
    return
  }
  func.func @transform_0(%arg0: i32) -> (i32, i32, i32) {
    %c0_i32 = arith.constant 0 : i32
    %c0_i32_0 = arith.constant 0 : i32
    %c0_i32_1 = arith.constant 0 : i32
    %c0_i32_2 = arith.constant 0 : i32
    return %c0_i32, %c0_i32_0, %c0_i32_1 : i32, i32, i32
  }
  func.func @transform_1(%arg0: i32) -> (i32, i32) {
    %c0_i32 = arith.constant 0 : i32
    %c0_i32_0 = arith.constant 0 : i32
    %c0_i32_1 = arith.constant 0 : i32
    return %c0_i32, %c0_i32_0 : i32, i32
  }
  func.func @transform_2(%arg0: i32) -> (i32, i32, i32) {
    %c0_i32 = arith.constant 0 : i32
    %c0_i32_0 = arith.constant 0 : i32
    %c0_i32_1 = arith.constant 0 : i32
    %c0_i32_2 = arith.constant 0 : i32
    return %c0_i32, %c0_i32_0, %c0_i32_1 : i32, i32, i32
  }
}

</mosaic_0001>

<llo_original>
// kernel: kernel_generated_3_forward.1
$region0: #{kernel_generated_3_forward.1}
  #allocation0 [shape = 'u32[]', space=smem, size = 0x4, offset = 0x4, fixed_abs, tag = 'smem constant byte address 0x4 - core index']
  #allocation1 [shape = 'u32[144,128]{1,0:T(1,128)}', space=vmem, size = 0x12000, scoped, tag = 'internal scratch']
  #allocation2 [shape = 'f32[24,960]{1,0:T(8,128)}', space=vmem, size = 0x18000, scoped, tag = 'scratch operand']
  #allocation3 [shape = 'f32[168,784]{1,0:T(8,128)}', space=vmem, size = 0x93000, scoped, tag = 'scratch operand']
  %s0 = inlined_call_operand.vmem [shape: f32[2,24,784], index: 0, kind: input, shape index: {}]
  %s1 = inlined_call_operand.vmem [shape: f32[96,168], index: 1, kind: input, shape index: {}]
  %s2 = inlined_call_operand.vmem [shape: f32[2,96,784], index: 2, kind: output, shape index: {}]
  %s3 = sld [smem:[#allocation0]]
  $region18: #{kernel_generated_3_forward.1} parent=0
    _
  %s5 = ssub.s32 1, %s3
  %s6 = scalar_select 0, %s5, %s3
  // Predicated region
  $region2: #{kernel_generated_3_forward.1} parent=0 // pred_check
    _
  $region3: #{kernel_generated_3_forward.1} parent=0 // pred_check_branch
    %8 = sbr.rel (0) target = $region5
  $region4: #{kernel_generated_3_forward.1} parent=0 // pred_region
    _
  $region5: #{kernel_generated_3_forward.1} parent=0 // pred_fallthru
    _
  // Predicated region
  $region6: #{kernel_generated_3_forward.1} parent=0 // pred_check
    _
  $region7: #{kernel_generated_3_forward.1} parent=0 // pred_check_branch
    %10 = sbr.rel (0) target = $region9
  $region8: #{kernel_generated_3_forward.1} parent=0 // pred_region
    _
  $region9: #{kernel_generated_3_forward.1} parent=0 // pred_fallthru
    _
  %v11 = vlaneseq
  %v12 = vand.u32 %v11, 127
  %v13 = vadd.s32 %v12, 128
  %v14 = vadd.s32 %v12, 256
  %v15 = vadd.s32 %v12, 384
  %v16 = vadd.s32 %v12, 512
  %v17 = vadd.s32 %v12, 640
  %v18 = vadd.s32 %v12, 768
  %vm19 = vcmp.lt.s32.totalorder %v12, 0
  %v20 = vsub.s32 0, %v12
  %v21 = vsel %vm19, %v20, %v12
  %v22 = vmul.u32.u64.compose %v21, 2454267026
  %v23 = vextract.low.u32 %v22
  %v24 = vextract.high.u32 %v22
  %vm25 = vc.u32 %v23, 2454267026
  %v26 = vsel %vm25, 1, 0
  %v27 = vadd.s32 %v24, %v26
  %v28 = vshrl.u32 %v27, 4
  %v29 = vmul.u32 %v28, 28
  %v30 = vsub.s32 %v21, %v29
  %v31 = vsub.s32 0, %v30
  %v32 = vsel %vm19, %v31, %v30
  %vm33 = vcmp.lt.s32.totalorder %v13, 0
  %v34 = vsub.s32 0, %v13
  %v35 = vsel %vm33, %v34, %v13
  %v36 = vmul.u32.u64.compose %v35, 2454267026
  %v37 = vextract.low.u32 %v36
  %v38 = vextract.high.u32 %v36
  %vm39 = vc.u32 %v37, 2454267026
  %v40 = vsel %vm39, 1, 0
  %v41 = vadd.s32 %v38, %v40
  %v42 = vshrl.u32 %v41, 4
  %v43 = vmul.u32 %v42, 28
  %v44 = vsub.s32 %v35, %v43
  %v45 = vsub.s32 0, %v44
  %v46 = vsel %vm33, %v45, %v44
  %vm47 = vcmp.lt.s32.totalorder %v14, 0
  %v48 = vsub.s32 0, %v14
  %v49 = vsel %vm47, %v48, %v14
  %v50 = vmul.u32.u64.compose %v49, 2454267026
  %v51 = vextract.low.u32 %v50
  %v52 = vextract.high.u32 %v50
  %vm53 = vc.u32 %v51, 2454267026
  %v54 = vsel %vm53, 1, 0
  %v55 = vadd.s32 %v52, %v54
  %v56 = vshrl.u32 %v55, 4
  %v57 = vmul.u32 %v56, 28
  %v58 = vsub.s32 %v49, %v57
  %v59 = vsub.s32 0, %v58
  %v60 = vsel %vm47, %v59, %v58
  %vm61 = vcmp.lt.s32.totalorder %v15, 0
  %v62 = vsub.s32 0, %v15
  %v63 = vsel %vm61, %v62, %v15
  %v64 = vmul.u32.u64.compose %v63, 2454267026
  %v65 = vextract.low.u32 %v64
  %v66 = vextract.high.u32 %v64
  %vm67 = vc.u32 %v65, 2454267026
  %v68 = vsel %vm67, 1, 0
  %v69 = vadd.s32 %v66, %v68
  %v70 = vshrl.u32 %v69, 4
  %v71 = vmul.u32 %v70, 28
  %v72 = vsub.s32 %v63, %v71
  %v73 = vsub.s32 0, %v72
  %v74 = vsel %vm61, %v73, %v72
  %vm75 = vcmp.lt.s32.totalorder %v16, 0
  %v76 = vsub.s32 0, %v16
  %v77 = vsel %vm75, %v76, %v16
  %v78 = vmul.u32.u64.compose %v77, 2454267026
  %v79 = vextract.low.u32 %v78
  %v80 = vextract.high.u32 %v78
  %vm81 = vc.u32 %v79, 2454267026
  %v82 = vsel %vm81, 1, 0
  %v83 = vadd.s32 %v80, %v82
  %v84 = vshrl.u32 %v83, 4
  %v85 = vmul.u32 %v84, 28
  %v86 = vsub.s32 %v77, %v85
  %v87 = vsub.s32 0, %v86
  %v88 = vsel %vm75, %v87, %v86
  %vm89 = vcmp.lt.s32.totalorder %v17, 0
  %v90 = vsub.s32 0, %v17
  %v91 = vsel %vm89, %v90, %v17
  %v92 = vmul.u32.u64.compose %v91, 2454267026
  %v93 = vextract.low.u32 %v92
  %v94 = vextract.high.u32 %v92
  %vm95 = vc.u32 %v93, 2454267026
  %v96 = vsel %vm95, 1, 0
  %v97 = vadd.s32 %v94, %v96
  %v98 = vshrl.u32 %v97, 4
  %v99 = vmul.u32 %v98, 28
  %v100 = vsub.s32 %v91, %v99
  %v101 = vsub.s32 0, %v100
  %v102 = vsel %vm89, %v101, %v100
  %vm103 = vcmp.lt.s32.totalorder %v18, 0
  %v104 = vsub.s32 0, %v18
  %v105 = vsel %vm103, %v104, %v18
  %v106 = vmul.u32.u64.compose %v105, 2454267026
  %v107 = vextract.low.u32 %v106
  %v108 = vextract.high.u32 %v106
  %vm109 = vc.u32 %v107, 2454267026
  %v110 = vsel %vm109, 1, 0
  %v111 = vadd.s32 %v108, %v110
  %v112 = vshrl.u32 %v111, 4
  %v113 = vmul.u32 %v112, 28
  %v114 = vsub.s32 %v105, %v113
  %v115 = vsub.s32 0, %v114
  %v116 = vsel %vm103, %v115, %v114
  %vm117 = vcmp.ne.s32.totalorder %v32, 0
  %vm118 = vcmp.ne.s32.totalorder %v46, 0
  %vm119 = vcmp.ne.s32.totalorder %v60, 0
  %vm120 = vcmp.ne.s32.totalorder %v74, 0
  %vm121 = vcmp.ne.s32.totalorder %v88, 0
  %vm122 = vcmp.ne.s32.totalorder %v102, 0
  %vm123 = vcmp.ne.s32.totalorder %v116, 0
  %vm124 = vcmp.lt.s32.totalorder %v32, 0
  %vm125 = vcmp.lt.s32.totalorder %v46, 0
  %vm126 = vcmp.lt.s32.totalorder %v60, 0
  %vm127 = vcmp.lt.s32.totalorder %v74, 0
  %vm128 = vcmp.lt.s32.totalorder %v88, 0
  %vm129 = vcmp.lt.s32.totalorder %v102, 0
  %vm130 = vcmp.lt.s32.totalorder %v116, 0
  %vm131 = vmand %vm124, %vm117
  %vm132 = vmand %vm125, %vm118
  %vm133 = vmand %vm126, %vm119
  %vm134 = vmand %vm127, %vm120
  %vm135 = vmand %vm128, %vm121
  %vm136 = vmand %vm129, %vm122
  %vm137 = vmand %vm130, %vm123
  %v138 = vadd.s32 %v32, 28
  %v139 = vadd.s32 %v46, 28
  %v140 = vadd.s32 %v60, 28
  %v141 = vadd.s32 %v74, 28
  %v142 = vadd.s32 %v88, 28
  %v143 = vadd.s32 %v102, 28
  %v144 = vadd.s32 %v116, 28
  %v145 = vsel %vm131, %v138, %v32
  %v146 = vsel %vm132, %v139, %v46
  %v147 = vsel %vm133, %v140, %v60
  %v148 = vsel %vm134, %v141, %v74
  %v149 = vsel %vm135, %v142, %v88
  %v150 = vsel %vm136, %v143, %v102
  %v151 = vsel %vm137, %v144, %v116
  %v152 = vld [vmem:[%s0] sm:$0xff]
  %v153 = vld [vmem:[%s0 + $0x8] sm:$0xff]
  %v154 = vld [vmem:[%s0 + $0x10] sm:$0xff]
  %v155 = vld [vmem:[%s0 + $0x18] sm:$0xff]
  %v156 = vld [vmem:[%s0 + $0x20] sm:$0xff]
  %v157 = vld [vmem:[%s0 + $0x28] sm:$0xff]
  %v158 = vld [vmem:[%s0 + $0x30] sm:$0xff]
  %v159 = vld [vmem:[%s0 + $0x38] sm:$0xff]
  %v160 = vld [vmem:[%s0 + $0x40] sm:$0xff]
  %v161 = vld [vmem:[%s0 + $0x48] sm:$0xff]
  %v162 = vld [vmem:[%s0 + $0x50] sm:$0xff]
  %v163 = vld [vmem:[%s0 + $0x58] sm:$0xff]
  %v164 = vld [vmem:[%s0 + $0x60] sm:$0xff]
  %v165 = vld [vmem:[%s0 + $0x68] sm:$0xff]
  %v166 = vld [vmem:[%s0 + $0x70] sm:$0xff]
  %v167 = vld [vmem:[%s0 + $0x78] sm:$0xff]
  %v168 = vld [vmem:[%s0 + $0x80] sm:$0xff]
  %v169 = vld [vmem:[%s0 + $0x88] sm:$0xff]
  %v170 = vld [vmem:[%s0 + $0x90] sm:$0xff]
  %v171 = vld [vmem:[%s0 + $0x98] sm:$0xff]
  %v172 = vld [vmem:[%s0 + $0xa0] sm:$0xff]
  %173 = vst [vmem:[#allocation2 + $0x8] sm:$0xff] %v152
  %174 = vst [vmem:[#allocation2 + $0x10] sm:$0xff] %v153
  %175 = vst [vmem:[#allocation2 + $0x18] sm:$0xff] %v154
  %176 = vst [vmem:[#allocation2 + $0x20] sm:$0xff] %v155
  %177 = vst [vmem:[#allocation2 + $0x28] sm:$0xff] %v156
  %178 = vst [vmem:[#allocation2 + $0x30] sm:$0xff] %v157
  %vm179 = vcmask 130048
  %180 = vst.msk [vmem:[#allocation2 + $0x38] sm:$0xff] %vm179, %v158
  %181 = vst [vmem:[#allocation2 + $0x48] sm:$0xff] %v159
  %182 = vst [vmem:[#allocation2 + $0x50] sm:$0xff] %v160
  %183 = vst [vmem:[#allocation2 + $0x58] sm:$0xff] %v161
  %184 = vst [vmem:[#allocation2 + $0x60] sm:$0xff] %v162
  %185 = vst [vmem:[#allocation2 + $0x68] sm:$0xff] %v163
  %186 = vst [vmem:[#allocation2 + $0x70] sm:$0xff] %v164
  %187 = vst.msk [vmem:[#allocation2 + $0x78] sm:$0xff] %vm179, %v165
  %188 = vst [vmem:[#allocation2 + $0x88] sm:$0xff] %v166
  %189 = vst [vmem:[#allocation2 + $0x90] sm:$0xff] %v167
  %190 = vst [vmem:[#allocation2 + $0x98] sm:$0xff] %v168
  %191 = vst [vmem:[#allocation2 + $0xa0] sm:$0xff] %v169
  %192 = vst [vmem:[#allocation2 + $0xa8] sm:$0xff] %v170
  %193 = vst [vmem:[#allocation2 + $0xb0] sm:$0xff] %v171
  %194 = vst.msk [vmem:[#allocation2 + $0xb8] sm:$0xff] %vm179, %v172
  %v195 = vld [vmem:[%s0 + $0x28] sm:$0xff]
  %v196 = vld [vmem:[%s0 + $0x30] sm:$0xff]
  %v197 = vld [vmem:[%s0 + $0x60] sm:$0xff]
  %v198 = vld [vmem:[%s0 + $0x68] sm:$0xff]
  %v199 = vld [vmem:[%s0 + $0x98] sm:$0xff]
  %v200 = vld [vmem:[%s0 + $0xa0] sm:$0xff]
  %207 = vrot.lane.b32.xlu0 %v195, 112
  %v208 = vpop.permute.xlu0 %207
  %209 = vrot.lane.b32.xlu0 %v196, 112
  %v210 = vpop.permute.xlu0 %209
  %211 = vrot.lane.b32.xlu0 %v197, 112
  %v212 = vpop.permute.xlu0 %211
  %213 = vrot.lane.b32.xlu0 %v198, 112
  %v214 = vpop.permute.xlu0 %213
  %215 = vrot.lane.b32.xlu0 %v199, 112
  %v216 = vpop.permute.xlu0 %215
  %217 = vrot.lane.b32.xlu0 %v200, 112
  %v218 = vpop.permute.xlu0 %217
  %vm219 = vcmask 916480
  %v220 = vsel %vm219, %v208, %v210
  %v221 = vsel %vm219, %v212, %v214
  %v222 = vsel %vm219, %v216, %v218
  %vm226 = vcmask 1048328
  %227 = vst.msk [vmem:[#allocation2] sm:$0xff] %vm226, %v220
  %228 = vst.msk [vmem:[#allocation2 + $0x40] sm:$0xff] %vm226, %v221
  %229 = vst.msk [vmem:[#allocation2 + $0x80] sm:$0xff] %vm226, %v222
  %v230 = vld [vmem:[%s0] sm:$0xff]
  %v231 = vld [vmem:[%s0 + $0x38] sm:$0xff]
  %v232 = vld [vmem:[%s0 + $0x70] sm:$0xff]
  %236 = vrot.lane.b32.xlu0 %v230, 16
  %v237 = vpop.permute.xlu0 %236
  %238 = vrot.lane.b32.xlu0 %v231, 16
  %v239 = vpop.permute.xlu0 %238
  %240 = vrot.lane.b32.xlu0 %v232, 16
  %v241 = vpop.permute.xlu0 %240
  %vm245 = vcmask 384128
  %246 = vst.msk [vmem:[#allocation2 + $0x38] sm:$0xff] %vm245, %v237
  %247 = vst.msk [vmem:[#allocation2 + $0x78] sm:$0xff] %vm245, %v239
  %248 = vst.msk [vmem:[#allocation2 + $0xb8] sm:$0xff] %vm245, %v241
  %v249 = vld [vmem:[#allocation2] sm:$0xff]
  %v250 = vld [vmem:[#allocation2 + $0x8] sm:$0xff]
  %v251 = vld [vmem:[#allocation2 + $0x10] sm:$0xff]
  %v252 = vld [vmem:[#allocation2 + $0x18] sm:$0xff]
  %v253 = vld [vmem:[#allocation2 + $0x20] sm:$0xff]
  %v254 = vld [vmem:[#allocation2 + $0x28] sm:$0xff]
  %v255 = vld [vmem:[#allocation2 + $0x30] sm:$0xff]
  %v256 = vld [vmem:[#allocation2 + $0x40] sm:$0xff]
  %v257 = vld [vmem:[#allocation2 + $0x48] sm:$0xff]
  %v258 = vld [vmem:[#allocation2 + $0x50] sm:$0xff]
  %v259 = vld [vmem:[#allocation2 + $0x58] sm:$0xff]
  %v260 = vld [vmem:[#allocation2 + $0x60] sm:$0xff]
  %v261 = vld [vmem:[#allocation2 + $0x68] sm:$0xff]
  %v262 = vld [vmem:[#allocation2 + $0x70] sm:$0xff]
  %v263 = vld [vmem:[#allocation2 + $0x80] sm:$0xff]
  %v264 = vld [vmem:[#allocation2 + $0x88] sm:$0xff]
  %v265 = vld [vmem:[#allocation2 + $0x90] sm:$0xff]
  %v266 = vld [vmem:[#allocation2 + $0x98] sm:$0xff]
  %v267 = vld [vmem:[#allocation2 + $0xa0] sm:$0xff]
  %v268 = vld [vmem:[#allocation2 + $0xa8] sm:$0xff]
  %v269 = vld [vmem:[#allocation2 + $0xb0] sm:$0xff]
  %vm270 = vcmp.ge.s32.totalorder %v145, 3
  %vm271 = vcmp.ge.s32.totalorder %v146, 3
  %vm272 = vcmp.ge.s32.totalorder %v147, 3
  %vm273 = vcmp.ge.s32.totalorder %v148, 3
  %vm274 = vcmp.ge.s32.totalorder %v149, 3
  %vm275 = vcmp.ge.s32.totalorder %v150, 3
  %vm276 = vcmp.ge.s32.totalorder %v151, 3
  %298 = vrot.lane.b32.xlu0 %v249, 31
  %v299 = vpop.permute.xlu0 %298
  %300 = vrot.lane.b32.xlu0 %v250, 31
  %v301 = vpop.permute.xlu0 %300
  %302 = vrot.lane.b32.xlu0 %v251, 31
  %v303 = vpop.permute.xlu0 %302
  %304 = vrot.lane.b32.xlu0 %v252, 31
  %v305 = vpop.permute.xlu0 %304
  %306 = vrot.lane.b32.xlu0 %v253, 31
  %v307 = vpop.permute.xlu0 %306
  %308 = vrot.lane.b32.xlu0 %v254, 31
  %v309 = vpop.permute.xlu0 %308
  %310 = vrot.lane.b32.xlu0 %v255, 31
  %v311 = vpop.permute.xlu0 %310
  %312 = vrot.lane.b32.xlu0 %v256, 31
  %v313 = vpop.permute.xlu0 %312
  %314 = vrot.lane.b32.xlu0 %v257, 31
  %v315 = vpop.permute.xlu0 %314
  %316 = vrot.lane.b32.xlu0 %v258, 31
  %v317 = vpop.permute.xlu0 %316
  %318 = vrot.lane.b32.xlu0 %v259, 31
  %v319 = vpop.permute.xlu0 %318
  %320 = vrot.lane.b32.xlu0 %v260, 31
  %v321 = vpop.permute.xlu0 %320
  %322 = vrot.lane.b32.xlu0 %v261, 31
  %v323 = vpop.permute.xlu0 %322
  %324 = vrot.lane.b32.xlu0 %v262, 31
  %v325 = vpop.permute.xlu0 %324
  %326 = vrot.lane.b32.xlu0 %v263, 31
  %v327 = vpop.permute.xlu0 %326
  %328 = vrot.lane.b32.xlu0 %v264, 31
  %v329 = vpop.permute.xlu0 %328
  %330 = vrot.lane.b32.xlu0 %v265, 31
  %v331 = vpop.permute.xlu0 %330
  %332 = vrot.lane.b32.xlu0 %v266, 31
  %v333 = vpop.permute.xlu0 %332
  %334 = vrot.lane.b32.xlu0 %v267, 31
  %v335 = vpop.permute.xlu0 %334
  %336 = vrot.lane.b32.xlu0 %v268, 31
  %v337 = vpop.permute.xlu0 %336
  %338 = vrot.lane.b32.xlu0 %v269, 31
  %v339 = vpop.permute.xlu0 %338
  %vm340 = vcmask 252928
  %v341 = vsel %vm340, %v299, %v301
  %v342 = vsel %vm340, %v301, %v303
  %v343 = vsel %vm340, %v303, %v305
  %v344 = vsel %vm340, %v305, %v307
  %v345 = vsel %vm340, %v307, %v309
  %v346 = vsel %vm340, %v309, %v311
  %v347 = vsel %vm340, %v313, %v315
  %v348 = vsel %vm340, %v315, %v317
  %v349 = vsel %vm340, %v317, %v319
  %v350 = vsel %vm340, %v319, %v321
  %v351 = vsel %vm340, %v321, %v323
  %v352 = vsel %vm340, %v323, %v325
  %v353 = vsel %vm340, %v327, %v329
  %v354 = vsel %vm340, %v329, %v331
  %v355 = vsel %vm340, %v331, %v333
  %v356 = vsel %vm340, %v333, %v335
  %v357 = vsel %vm340, %v335, %v337
  %v358 = vsel %vm340, %v337, %v339
  %v380 = vsel %vm270, %v341, 0.0
  %v381 = vsel %vm271, %v342, 0.0
  %v382 = vsel %vm272, %v343, 0.0
  %v383 = vsel %vm273, %v344, 0.0
  %v384 = vsel %vm274, %v345, 0.0
  %v385 = vsel %vm275, %v346, 0.0
  %v386 = vsel %vm276, %v311, 0.0
  %v387 = vsel %vm270, %v347, 0.0
  %v388 = vsel %vm271, %v348, 0.0
  %v389 = vsel %vm272, %v349, 0.0
  %v390 = vsel %vm273, %v350, 0.0
  %v391 = vsel %vm274, %v351, 0.0
  %v392 = vsel %vm275, %v352, 0.0
  %v393 = vsel %vm276, %v325, 0.0
  %v394 = vsel %vm270, %v353, 0.0
  %v395 = vsel %vm271, %v354, 0.0
  %v396 = vsel %vm272, %v355, 0.0
  %v397 = vsel %vm273, %v356, 0.0
  %v398 = vsel %vm274, %v357, 0.0
  %v399 = vsel %vm275, %v358, 0.0
  %v400 = vsel %vm276, %v339, 0.0
  %401 = vst [vmem:[#allocation3] sm:$0xff] %v380
  %402 = vst [vmem:[#allocation3 + $0x8] sm:$0xff] %v381
  %403 = vst [vmem:[#allocation3 + $0x10] sm:$0xff] %v382
  %404 = vst [vmem:[#allocation3 + $0x18] sm:$0xff] %v383
  %405 = vst [vmem:[#allocation3 + $0x20] sm:$0xff] %v384
  %406 = vst [vmem:[#allocation3 + $0x28] sm:$0xff] %v385
  %407 = vst.msk [vmem:[#allocation3 + $0x30] sm:$0xff] %vm179, %v386
  %408 = vst [vmem:[#allocation3 + $0x38] sm:$0xff] %v387
  %409 = vst [vmem:[#allocation3 + $0x40] sm:$0xff] %v388
  %410 = vst [vmem:[#allocation3 + $0x48] sm:$0xff] %v389
  %411 = vst [vmem:[#allocation3 + $0x50] sm:$0xff] %v390
  %412 = vst [vmem:[#allocation3 + $0x58] sm:$0xff] %v391
  %413 = vst [vmem:[#allocation3 + $0x60] sm:$0xff] %v392
  %414 = vst.msk [vmem:[#allocation3 + $0x68] sm:$0xff] %vm179, %v393
  %415 = vst [vmem:[#allocation3 + $0x70] sm:$0xff] %v394
  %416 = vst [vmem:[#allocation3 + $0x78] sm:$0xff] %v395
  %417 = vst [vmem:[#allocation3 + $0x80] sm:$0xff] %v396
  %418 = vst [vmem:[#allocation3 + $0x88] sm:$0xff] %v397
  %419 = vst [vmem:[#allocation3 + $0x90] sm:$0xff] %v398
  %420 = vst [vmem:[#allocation3 + $0x98] sm:$0xff] %v399
  %421 = vst.msk [vmem:[#allocation3 + $0xa0] sm:$0xff] %vm179, %v400
  %v422 = vld [vmem:[#allocation2] sm:$0xff]
  %v423 = vld [vmem:[#allocation2 + $0x8] sm:$0xff]
  %v424 = vld [vmem:[#allocation2 + $0x10] sm:$0xff]
  %v425 = vld [vmem:[#allocation2 + $0x18] sm:$0xff]
  %v426 = vld [vmem:[#allocation2 + $0x20] sm:$0xff]
  %v427 = vld [vmem:[#allocation2 + $0x28] sm:$0xff]
  %v428 = vld [vmem:[#allocation2 + $0x30] sm:$0xff]
  %v429 = vld [vmem:[#allocation2 + $0x40] sm:$0xff]
  %v430 = vld [vmem:[#allocation2 + $0x48] sm:$0xff]
  %v431 = vld [vmem:[#allocation2 + $0x50] sm:$0xff]
  %v432 = vld [vmem:[#allocation2 + $0x58] sm:$0xff]
  %v433 = vld [vmem:[#allocation2 + $0x60] sm:$0xff]
  %v434 = vld [vmem:[#allocation2 + $0x68] sm:$0xff]
  %v435 = vld [vmem:[#allocation2 + $0x70] sm:$0xff]
  %v436 = vld [vmem:[#allocation2 + $0x80] sm:$0xff]
  %v437 = vld [vmem:[#allocation2 + $0x88] sm:$0xff]
  %v438 = vld [vmem:[#allocation2 + $0x90] sm:$0xff]
  %v439 = vld [vmem:[#allocation2 + $0x98] sm:$0xff]
  %v440 = vld [vmem:[#allocation2 + $0xa0] sm:$0xff]
  %v441 = vld [vmem:[#allocation2 + $0xa8] sm:$0xff]
  %v442 = vld [vmem:[#allocation2 + $0xb0] sm:$0xff]
  %vm443 = vcmp.ge.s32.totalorder %v145, 2
  %vm444 = vcmp.ge.s32.totalorder %v146, 2
  %vm445 = vcmp.ge.s32.totalorder %v147, 2
  %vm446 = vcmp.ge.s32.totalorder %v148, 2
  %vm447 = vcmp.ge.s32.totalorder %v149, 2
  %vm448 = vcmp.ge.s32.totalorder %v150, 2
  %vm449 = vcmp.ge.s32.totalorder %v151, 2
  %471 = vrot.lane.b32.xlu0 %v422, 30
  %v472 = vpop.permute.xlu0 %471
  %473 = vrot.lane.b32.xlu0 %v423, 30
  %v474 = vpop.permute.xlu0 %473
  %475 = vrot.lane.b32.xlu0 %v424, 30
  %v476 = vpop.permute.xlu0 %475
  %477 = vrot.lane.b32.xlu0 %v425, 30
  %v478 = vpop.permute.xlu0 %477
  %479 = vrot.lane.b32.xlu0 %v426, 30
  %v480 = vpop.permute.xlu0 %479
  %481 = vrot.lane.b32.xlu0 %v427, 30
  %v482 = vpop.permute.xlu0 %481
  %483 = vrot.lane.b32.xlu0 %v428, 30
  %v484 = vpop.permute.xlu0 %483
  %485 = vrot.lane.b32.xlu0 %v429, 30
  %v486 = vpop.permute.xlu0 %485
  %487 = vrot.lane.b32.xlu0 %v430, 30
  %v488 = vpop.permute.xlu0 %487
  %489 = vrot.lane.b32.xlu0 %v431, 30
  %v490 = vpop.permute.xlu0 %489
  %491 = vrot.lane.b32.xlu0 %v432, 30
  %v492 = vpop.permute.xlu0 %491
  %493 = vrot.lane.b32.xlu0 %v433, 30
  %v494 = vpop.permute.xlu0 %493
  %495 = vrot.lane.b32.xlu0 %v434, 30
  %v496 = vpop.permute.xlu0 %495
  %497 = vrot.lane.b32.xlu0 %v435, 30
  %v498 = vpop.permute.xlu0 %497
  %499 = vrot.lane.b32.xlu0 %v436, 30
  %v500 = vpop.permute.xlu0 %499
  %501 = vrot.lane.b32.xlu0 %v437, 30
  %v502 = vpop.permute.xlu0 %501
  %503 = vrot.lane.b32.xlu0 %v438, 30
  %v504 = vpop.permute.xlu0 %503
  %505 = vrot.lane.b32.xlu0 %v439, 30
  %v506 = vpop.permute.xlu0 %505
  %507 = vrot.lane.b32.xlu0 %v440, 30
  %v508 = vpop.permute.xlu0 %507
  %509 = vrot.lane.b32.xlu0 %v441, 30
  %v510 = vpop.permute.xlu0 %509
  %511 = vrot.lane.b32.xlu0 %v442, 30
  %v512 = vpop.permute.xlu0 %511
  %vm513 = vcmask 244736
  %v514 = vsel %vm513, %v472, %v474
  %v515 = vsel %vm513, %v474, %v476
  %v516 = vsel %vm513, %v476, %v478
  %v517 = vsel %vm513, %v478, %v480
  %v518 = vsel %vm513, %v480, %v482
  %v519 = vsel %vm513, %v482, %v484
  %v520 = vsel %vm513, %v486, %v488
  %v521 = vsel %vm513, %v488, %v490
  %v522 = vsel %vm513, %v490, %v492
  %v523 = vsel %vm513, %v492, %v494
  %v524 = vsel %vm513, %v494, %v496
  %v525 = vsel %vm513, %v496, %v498
  %v526 = vsel %vm513, %v500, %v502
  %v527 = vsel %vm513, %v502, %v504
  %v528 = vsel %vm513, %v504, %v506
  %v529 = vsel %vm513, %v506, %v508
  %v530 = vsel %vm513, %v508, %v510
  %v531 = vsel %vm513, %v510, %v512
  %v553 = vsel %vm443, %v514, 0.0
  %v554 = vsel %vm444, %v515, 0.0
  %v555 = vsel %vm445, %v516, 0.0
  %v556 = vsel %vm446, %v517, 0.0
  %v557 = vsel %vm447, %v518, 0.0
  %v558 = vsel %vm448, %v519, 0.0
  %v559 = vsel %vm449, %v484, 0.0
  %v560 = vsel %vm443, %v520, 0.0
  %v561 = vsel %vm444, %v521, 0.0
  %v562 = vsel %vm445, %v522, 0.0
  %v563 = vsel %vm446, %v523, 0.0
  %v564 = vsel %vm447, %v524, 0.0
  %v565 = vsel %vm448, %v525, 0.0
  %v566 = vsel %vm449, %v498, 0.0
  %v567 = vsel %vm443, %v526, 0.0
  %v568 = vsel %vm444, %v527, 0.0
  %v569 = vsel %vm445, %v528, 0.0
  %v570 = vsel %vm446, %v529, 0.0
  %v571 = vsel %vm447, %v530, 0.0
  %v572 = vsel %vm448, %v531, 0.0
  %v573 = vsel %vm449, %v512, 0.0
  %574 = vst [vmem:[#allocation3 + $0xa8] sm:$0xff] %v553
  %575 = vst [vmem:[#allocation3 + $0xb0] sm:$0xff] %v554
  %576 = vst [vmem:[#allocation3 + $0xb8] sm:$0xff] %v555
  %577 = vst [vmem:[#allocation3 + $0xc0] sm:$0xff] %v556
  %578 = vst [vmem:[#allocation3 + $0xc8] sm:$0xff] %v557
  %579 = vst [vmem:[#allocation3 + $0xd0] sm:$0xff] %v558
  %580 = vst.msk [vmem:[#allocation3 + $0xd8] sm:$0xff] %vm179, %v559
  %581 = vst [vmem:[#allocation3 + $0xe0] sm:$0xff] %v560
  %582 = vst [vmem:[#allocation3 + $0xe8] sm:$0xff] %v561
  %583 = vst [vmem:[#allocation3 + $0xf0] sm:$0xff] %v562
  %584 = vst [vmem:[#allocation3 + $0xf8] sm:$0xff] %v563
  %585 = vst [vmem:[#allocation3 + $0x100] sm:$0xff] %v564
  %586 = vst [vmem:[#allocation3 + $0x108] sm:$0xff] %v565
  %587 = vst.msk [vmem:[#allocation3 + $0x110] sm:$0xff] %vm179, %v566
  %588 = vst [vmem:[#allocation3 + $0x118] sm:$0xff] %v567
  %589 = vst [vmem:[#allocation3 + $0x120] sm:$0xff] %v568
  %590 = vst [vmem:[#allocation3 + $0x128] sm:$0xff] %v569
  %591 = vst [vmem:[#allocation3 + $0x130] sm:$0xff] %v570
  %592 = vst [vmem:[#allocation3 + $0x138] sm:$0xff] %v571
  %593 = vst [vmem:[#allocation3 + $0x140] sm:$0xff] %v572
  %594 = vst.msk [vmem:[#allocation3 + $0x148] sm:$0xff] %vm179, %v573
  %v595 = vld [vmem:[#allocation2] sm:$0xff]
  %v596 = vld [vmem:[#allocation2 + $0x8] sm:$0xff]
  %v597 = vld [vmem:[#allocation2 + $0x10] sm:$0xff]
  %v598 = vld [vmem:[#allocation2 + $0x18] sm:$0xff]
  %v599 = vld [vmem:[#allocation2 + $0x20] sm:$0xff]
  %v600 = vld [vmem:[#allocation2 + $0x28] sm:$0xff]
  %v601 = vld [vmem:[#allocation2 + $0x30] sm:$0xff]
  %v602 = vld [vmem:[#allocation2 + $0x40] sm:$0xff]
  %v603 = vld [vmem:[#allocation2 + $0x48] sm:$0xff]
  %v604 = vld [vmem:[#allocation2 + $0x50] sm:$0xff]
  %v605 = vld [vmem:[#allocation2 + $0x58] sm:$0xff]
  %v606 = vld [vmem:[#allocation2 + $0x60] sm:$0xff]
  %v607 = vld [vmem:[#allocation2 + $0x68] sm:$0xff]
  %v608 = vld [vmem:[#allocation2 + $0x70] sm:$0xff]
  %v609 = vld [vmem:[#allocation2 + $0x80] sm:$0xff]
  %v610 = vld [vmem:[#allocation2 + $0x88] sm:$0xff]
  %v611 = vld [vmem:[#allocation2 + $0x90] sm:$0xff]
  %v612 = vld [vmem:[#allocation2 + $0x98] sm:$0xff]
  %v613 = vld [vmem:[#allocation2 + $0xa0] sm:$0xff]
  %v614 = vld [vmem:[#allocation2 + $0xa8] sm:$0xff]
  %v615 = vld [vmem:[#allocation2 + $0xb0] sm:$0xff]
  %vm616 = vcmp.ge.s32.totalorder %v145, 1
  %vm617 = vcmp.ge.s32.totalorder %v146, 1
  %vm618 = vcmp.ge.s32.totalorder %v147, 1
  %vm619 = vcmp.ge.s32.totalorder %v148, 1
  %vm620 = vcmp.ge.s32.totalorder %v149, 1
  %vm621 = vcmp.ge.s32.totalorder %v150, 1
  %vm622 = vcmp.ge.s32.totalorder %v151, 1
  %644 = vrot.lane.b32.xlu0 %v595, 29
  %v645 = vpop.permute.xlu0 %644
  %646 = vrot.lane.b32.xlu0 %v596, 29
  %v647 = vpop.permute.xlu0 %646
  %648 = vrot.lane.b32.xlu0 %v597, 29
  %v649 = vpop.permute.xlu0 %648
  %650 = vrot.lane.b32.xlu0 %v598, 29
  %v651 = vpop.permute.xlu0 %650
  %652 = vrot.lane.b32.xlu0 %v599, 29
  %v653 = vpop.permute.xlu0 %652
  %654 = vrot.lane.b32.xlu0 %v600, 29
  %v655 = vpop.permute.xlu0 %654
  %656 = vrot.lane.b32.xlu0 %v601, 29
  %v657 = vpop.permute.xlu0 %656
  %658 = vrot.lane.b32.xlu0 %v602, 29
  %v659 = vpop.permute.xlu0 %658
  %660 = vrot.lane.b32.xlu0 %v603, 29
  %v661 = vpop.permute.xlu0 %660
  %662 = vrot.lane.b32.xlu0 %v604, 29
  %v663 = vpop.permute.xlu0 %662
  %664 = vrot.lane.b32.xlu0 %v605, 29
  %v665 = vpop.permute.xlu0 %664
  %666 = vrot.lane.b32.xlu0 %v606, 29
  %v667 = vpop.permute.xlu0 %666
  %668 = vrot.lane.b32.xlu0 %v607, 29
  %v669 = vpop.permute.xlu0 %668
  %670 = vrot.lane.b32.xlu0 %v608, 29
  %v671 = vpop.permute.xlu0 %670
  %672 = vrot.lane.b32.xlu0 %v609, 29
  %v673 = vpop.permute.xlu0 %672
  %674 = vrot.lane.b32.xlu0 %v610, 29
  %v675 = vpop.permute.xlu0 %674
  %676 = vrot.lane.b32.xlu0 %v611, 29
  %v677 = vpop.permute.xlu0 %676
  %678 = vrot.lane.b32.xlu0 %v612, 29
  %v679 = vpop.permute.xlu0 %678
  %680 = vrot.lane.b32.xlu0 %v613, 29
  %v681 = vpop.permute.xlu0 %680
  %682 = vrot.lane.b32.xlu0 %v614, 29
  %v683 = vpop.permute.xlu0 %682
  %684 = vrot.lane.b32.xlu0 %v615, 29
  %v685 = vpop.permute.xlu0 %684
  %vm686 = vcmask 236544
  %v687 = vsel %vm686, %v645, %v647
  %v688 = vsel %vm686, %v647, %v649
  %v689 = vsel %vm686, %v649, %v651
  %v690 = vsel %vm686, %v651, %v653
  %v691 = vsel %vm686, %v653, %v655
  %v692 = vsel %vm686, %v655, %v657
  %v693 = vsel %vm686, %v659, %v661
  %v694 = vsel %vm686, %v661, %v663
  %v695 = vsel %vm686, %v663, %v665
  %v696 = vsel %vm686, %v665, %v667
  %v697 = vsel %vm686, %v667, %v669
  %v698 = vsel %vm686, %v669, %v671
  %v699 = vsel %vm686, %v673, %v675
  %v700 = vsel %vm686, %v675, %v677
  %v701 = vsel %vm686, %v677, %v679
  %v702 = vsel %vm686, %v679, %v681
  %v703 = vsel %vm686, %v681, %v683
  %v704 = vsel %vm686, %v683, %v685
  %v726 = vsel %vm616, %v687, 0.0
  %v727 = vsel %vm617, %v688, 0.0
  %v728 = vsel %vm618, %v689, 0.0
  %v729 = vsel %vm619, %v690, 0.0
  %v730 = vsel %vm620, %v691, 0.0
  %v731 = vsel %vm621, %v692, 0.0
  %v732 = vsel %vm622, %v657, 0.0
  %v733 = vsel %vm616, %v693, 0.0
  %v734 = vsel %vm617, %v694, 0.0
  %v735 = vsel %vm618, %v695, 0.0
  %v736 = vsel %vm619, %v696, 0.0
  %v737 = vsel %vm620, %v697, 0.0
  %v738 = vsel %vm621, %v698, 0.0
  %v739 = vsel %vm622, %v671, 0.0
  %v740 = vsel %vm616, %v699, 0.0
  %v741 = vsel %vm617, %v700, 0.0
  %v742 = vsel %vm618, %v701, 0.0
  %v743 = vsel %vm619, %v702, 0.0
  %v744 = vsel %vm620, %v703, 0.0
  %v745 = vsel %vm621, %v704, 0.0
  %v746 = vsel %vm622, %v685, 0.0
  %747 = vst [vmem:[#allocation3 + $0x150] sm:$0xff] %v726
  %748 = vst [vmem:[#allocation3 + $0x158] sm:$0xff] %v727
  %749 = vst [vmem:[#allocation3 + $0x160] sm:$0xff] %v728
  %750 = vst [vmem:[#allocation3 + $0x168] sm:$0xff] %v729
  %751 = vst [vmem:[#allocation3 + $0x170] sm:$0xff] %v730
  %752 = vst [vmem:[#allocation3 + $0x178] sm:$0xff] %v731
  %753 = vst.msk [vmem:[#allocation3 + $0x180] sm:$0xff] %vm179, %v732
  %754 = vst [vmem:[#allocation3 + $0x188] sm:$0xff] %v733
  %755 = vst [vmem:[#allocation3 + $0x190] sm:$0xff] %v734
  %756 = vst [vmem:[#allocation3 + $0x198] sm:$0xff] %v735
  %757 = vst [vmem:[#allocation3 + $0x1a0] sm:$0xff] %v736
  %758 = vst [vmem:[#allocation3 + $0x1a8] sm:$0xff] %v737
  %759 = vst [vmem:[#allocation3 + $0x1b0] sm:$0xff] %v738
  %760 = vst.msk [vmem:[#allocation3 + $0x1b8] sm:$0xff] %vm179, %v739
  %761 = vst [vmem:[#allocation3 + $0x1c0] sm:$0xff] %v740
  %762 = vst [vmem:[#allocation3 + $0x1c8] sm:$0xff] %v741
  %763 = vst [vmem:[#allocation3 + $0x1d0] sm:$0xff] %v742
  %764 = vst [vmem:[#allocation3 + $0x1d8] sm:$0xff] %v743
  %765 = vst [vmem:[#allocation3 + $0x1e0] sm:$0xff] %v744
  %766 = vst [vmem:[#allocation3 + $0x1e8] sm:$0xff] %v745
  %767 = vst.msk [vmem:[#allocation3 + $0x1f0] sm:$0xff] %vm179, %v746
  %v768 = vld [vmem:[#allocation2] sm:$0xff]
  %v769 = vld [vmem:[#allocation2 + $0x8] sm:$0xff]
  %v770 = vld [vmem:[#allocation2 + $0x10] sm:$0xff]
  %v771 = vld [vmem:[#allocation2 + $0x18] sm:$0xff]
  %v772 = vld [vmem:[#allocation2 + $0x20] sm:$0xff]
  %v773 = vld [vmem:[#allocation2 + $0x28] sm:$0xff]
  %v774 = vld [vmem:[#allocation2 + $0x30] sm:$0xff]
  %v775 = vld [vmem:[#allocation2 + $0x40] sm:$0xff]
  %v776 = vld [vmem:[#allocation2 + $0x48] sm:$0xff]
  %v777 = vld [vmem:[#allocation2 + $0x50] sm:$0xff]
  %v778 = vld [vmem:[#allocation2 + $0x58] sm:$0xff]
  %v779 = vld [vmem:[#allocation2 + $0x60] sm:$0xff]
  %v780 = vld [vmem:[#allocation2 + $0x68] sm:$0xff]
  %v781 = vld [vmem:[#allocation2 + $0x70] sm:$0xff]
  %v782 = vld [vmem:[#allocation2 + $0x80] sm:$0xff]
  %v783 = vld [vmem:[#allocation2 + $0x88] sm:$0xff]
  %v784 = vld [vmem:[#allocation2 + $0x90] sm:$0xff]
  %v785 = vld [vmem:[#allocation2 + $0x98] sm:$0xff]
  %v786 = vld [vmem:[#allocation2 + $0xa0] sm:$0xff]
  %v787 = vld [vmem:[#allocation2 + $0xa8] sm:$0xff]
  %v788 = vld [vmem:[#allocation2 + $0xb0] sm:$0xff]
  %810 = vrot.lane.b32.xlu0 %v768, 28
  %v811 = vpop.permute.xlu0 %810
  %812 = vrot.lane.b32.xlu0 %v769, 28
  %v813 = vpop.permute.xlu0 %812
  %814 = vrot.lane.b32.xlu0 %v770, 28
  %v815 = vpop.permute.xlu0 %814
  %816 = vrot.lane.b32.xlu0 %v771, 28
  %v817 = vpop.permute.xlu0 %816
  %818 = vrot.lane.b32.xlu0 %v772, 28
  %v819 = vpop.permute.xlu0 %818
  %820 = vrot.lane.b32.xlu0 %v773, 28
  %v821 = vpop.permute.xlu0 %820
  %822 = vrot.lane.b32.xlu0 %v774, 28
  %v823 = vpop.permute.xlu0 %822
  %824 = vrot.lane.b32.xlu0 %v775, 28
  %v825 = vpop.permute.xlu0 %824
  %826 = vrot.lane.b32.xlu0 %v776, 28
  %v827 = vpop.permute.xlu0 %826
  %828 = vrot.lane.b32.xlu0 %v777, 28
  %v829 = vpop.permute.xlu0 %828
  %830 = vrot.lane.b32.xlu0 %v778, 28
  %v831 = vpop.permute.xlu0 %830
  %832 = vrot.lane.b32.xlu0 %v779, 28
  %v833 = vpop.permute.xlu0 %832
  %834 = vrot.lane.b32.xlu0 %v780, 28
  %v835 = vpop.permute.xlu0 %834
  %836 = vrot.lane.b32.xlu0 %v781, 28
  %v837 = vpop.permute.xlu0 %836
  %838 = vrot.lane.b32.xlu0 %v782, 28
  %v839 = vpop.permute.xlu0 %838
  %840 = vrot.lane.b32.xlu0 %v783, 28
  %v841 = vpop.permute.xlu0 %840
  %842 = vrot.lane.b32.xlu0 %v784, 28
  %v843 = vpop.permute.xlu0 %842
  %844 = vrot.lane.b32.xlu0 %v785, 28
  %v845 = vpop.permute.xlu0 %844
  %846 = vrot.lane.b32.xlu0 %v786, 28
  %v847 = vpop.permute.xlu0 %846
  %848 = vrot.lane.b32.xlu0 %v787, 28
  %v849 = vpop.permute.xlu0 %848
  %850 = vrot.lane.b32.xlu0 %v788, 28
  %v851 = vpop.permute.xlu0 %850
  %vm852 = vcmask 228352
  %v853 = vsel %vm852, %v811, %v813
  %v854 = vsel %vm852, %v813, %v815
  %v855 = vsel %vm852, %v815, %v817
  %v856 = vsel %vm852, %v817, %v819
  %v857 = vsel %vm852, %v819, %v821
  %v858 = vsel %vm852, %v821, %v823
  %v859 = vsel %vm852, %v825, %v827
  %v860 = vsel %vm852, %v827, %v829
  %v861 = vsel %vm852, %v829, %v831
  %v862 = vsel %vm852, %v831, %v833
  %v863 = vsel %vm852, %v833, %v835
  %v864 = vsel %vm852, %v835, %v837
  %v865 = vsel %vm852, %v839, %v841
  %v866 = vsel %vm852, %v841, %v843
  %v867 = vsel %vm852, %v843, %v845
  %v868 = vsel %vm852, %v845, %v847
  %v869 = vsel %vm852, %v847, %v849
  %v870 = vsel %vm852, %v849, %v851
  %892 = vst [vmem:[#allocation3 + $0x1f8] sm:$0xff] %v853
  %893 = vst [vmem:[#allocation3 + $0x200] sm:$0xff] %v854
  %894 = vst [vmem:[#allocation3 + $0x208] sm:$0xff] %v855
  %895 = vst [vmem:[#allocation3 + $0x210] sm:$0xff] %v856
  %896 = vst [vmem:[#allocation3 + $0x218] sm:$0xff] %v857
  %897 = vst [vmem:[#allocation3 + $0x220] sm:$0xff] %v858
  %898 = vst.msk [vmem:[#allocation3 + $0x228] sm:$0xff] %vm179, %v823
  %899 = vst [vmem:[#allocation3 + $0x230] sm:$0xff] %v859
  %900 = vst [vmem:[#allocation3 + $0x238] sm:$0xff] %v860
  %901 = vst [vmem:[#allocation3 + $0x240] sm:$0xff] %v861
  %902 = vst [vmem:[#allocation3 + $0x248] sm:$0xff] %v862
  %903 = vst [vmem:[#allocation3 + $0x250] sm:$0xff] %v863
  %904 = vst [vmem:[#allocation3 + $0x258] sm:$0xff] %v864
  %905 = vst.msk [vmem:[#allocation3 + $0x260] sm:$0xff] %vm179, %v837
  %906 = vst [vmem:[#allocation3 + $0x268] sm:$0xff] %v865
  %907 = vst [vmem:[#allocation3 + $0x270] sm:$0xff] %v866
  %908 = vst [vmem:[#allocation3 + $0x278] sm:$0xff] %v867
  %909 = vst [vmem:[#allocation3 + $0x280] sm:$0xff] %v868
  %910 = vst [vmem:[#allocation3 + $0x288] sm:$0xff] %v869
  %911 = vst [vmem:[#allocation3 + $0x290] sm:$0xff] %v870
  %912 = vst.msk [vmem:[#allocation3 + $0x298] sm:$0xff] %vm179, %v851
  %v913 = vld [vmem:[#allocation2] sm:$0xff]
  %v914 = vld [vmem:[#allocation2 + $0x8] sm:$0xff]
  %v915 = vld [vmem:[#allocation2 + $0x10] sm:$0xff]
  %v916 = vld [vmem:[#allocation2 + $0x18] sm:$0xff]
  %v917 = vld [vmem:[#allocation2 + $0x20] sm:$0xff]
  %v918 = vld [vmem:[#allocation2 + $0x28] sm:$0xff]
  %v919 = vld [vmem:[#allocation2 + $0x30] sm:$0xff]
  %v920 = vld [vmem:[#allocation2 + $0x40] sm:$0xff]
  %v921 = vld [vmem:[#allocation2 + $0x48] sm:$0xff]
  %v922 = vld [vmem:[#allocation2 + $0x50] sm:$0xff]
  %v923 = vld [vmem:[#allocation2 + $0x58] sm:$0xff]
  %v924 = vld [vmem:[#allocation2 + $0x60] sm:$0xff]
  %v925 = vld [vmem:[#allocation2 + $0x68] sm:$0xff]
  %v926 = vld [vmem:[#allocation2 + $0x70] sm:$0xff]
  %v927 = vld [vmem:[#allocation2 + $0x80] sm:$0xff]
  %v928 = vld [vmem:[#allocation2 + $0x88] sm:$0xff]
  %v929 = vld [vmem:[#allocation2 + $0x90] sm:$0xff]
  %v930 = vld [vmem:[#allocation2 + $0x98] sm:$0xff]
  %v931 = vld [vmem:[#allocation2 + $0xa0] sm:$0xff]
  %v932 = vld [vmem:[#allocation2 + $0xa8] sm:$0xff]
  %v933 = vld [vmem:[#allocation2 + $0xb0] sm:$0xff]
  %vm934 = vcmp.lt.s32.totalorder %v145, 27
  %vm935 = vcmp.lt.s32.totalorder %v146, 27
  %vm936 = vcmp.lt.s32.totalorder %v147, 27
  %vm937 = vcmp.lt.s32.totalorder %v148, 27
  %vm938 = vcmp.lt.s32.totalorder %v149, 27
  %vm939 = vcmp.lt.s32.totalorder %v150, 27
  %vm940 = vcmp.lt.s32.totalorder %v151, 27
  %962 = vrot.lane.b32.xlu0 %v913, 27
  %v963 = vpop.permute.xlu0 %962
  %964 = vrot.lane.b32.xlu0 %v914, 27
  %v965 = vpop.permute.xlu0 %964
  %966 = vrot.lane.b32.xlu0 %v915, 27
  %v967 = vpop.permute.xlu0 %966
  %968 = vrot.lane.b32.xlu0 %v916, 27
  %v969 = vpop.permute.xlu0 %968
  %970 = vrot.lane.b32.xlu0 %v917, 27
  %v971 = vpop.permute.xlu0 %970
  %972 = vrot.lane.b32.xlu0 %v918, 27
  %v973 = vpop.permute.xlu0 %972
  %974 = vrot.lane.b32.xlu0 %v919, 27
  %v975 = vpop.permute.xlu0 %974
  %976 = vrot.lane.b32.xlu0 %v920, 27
  %v977 = vpop.permute.xlu0 %976
  %978 = vrot.lane.b32.xlu0 %v921, 27
  %v979 = vpop.permute.xlu0 %978
  %980 = vrot.lane.b32.xlu0 %v922, 27
  %v981 = vpop.permute.xlu0 %980
  %982 = vrot.lane.b32.xlu0 %v923, 27
  %v983 = vpop.permute.xlu0 %982
  %984 = vrot.lane.b32.xlu0 %v924, 27
  %v985 = vpop.permute.xlu0 %984
  %986 = vrot.lane.b32.xlu0 %v925, 27
  %v987 = vpop.permute.xlu0 %986
  %988 = vrot.lane.b32.xlu0 %v926, 27
  %v989 = vpop.permute.xlu0 %988
  %990 = vrot.lane.b32.xlu0 %v927, 27
  %v991 = vpop.permute.xlu0 %990
  %992 = vrot.lane.b32.xlu0 %v928, 27
  %v993 = vpop.permute.xlu0 %992
  %994 = vrot.lane.b32.xlu0 %v929, 27
  %v995 = vpop.permute.xlu0 %994
  %996 = vrot.lane.b32.xlu0 %v930, 27
  %v997 = vpop.permute.xlu0 %996
  %998 = vrot.lane.b32.xlu0 %v931, 27
  %v999 = vpop.permute.xlu0 %998
  %1000 = vrot.lane.b32.xlu0 %v932, 27
  %v1001 = vpop.permute.xlu0 %1000
  %1002 = vrot.lane.b32.xlu0 %v933, 27
  %v1003 = vpop.permute.xlu0 %1002
  %vm1004 = vcmask 220160
  %v1005 = vsel %vm1004, %v963, %v965
  %v1006 = vsel %vm1004, %v965, %v967
  %v1007 = vsel %vm1004, %v967, %v969
  %v1008 = vsel %vm1004, %v969, %v971
  %v1009 = vsel %vm1004, %v971, %v973
  %v1010 = vsel %vm1004, %v973, %v975
  %v1011 = vsel %vm1004, %v977, %v979
  %v1012 = vsel %vm1004, %v979, %v981
  %v1013 = vsel %vm1004, %v981, %v983
  %v1014 = vsel %vm1004, %v983, %v985
  %v1015 = vsel %vm1004, %v985, %v987
  %v1016 = vsel %vm1004, %v987, %v989
  %v1017 = vsel %vm1004, %v991, %v993
  %v1018 = vsel %vm1004, %v993, %v995
  %v1019 = vsel %vm1004, %v995, %v997
  %v1020 = vsel %vm1004, %v997, %v999
  %v1021 = vsel %vm1004, %v999, %v1001
  %v1022 = vsel %vm1004, %v1001, %v1003
  %v1044 = vsel %vm934, %v1005, 0.0
  %v1045 = vsel %vm935, %v1006, 0.0
  %v1046 = vsel %vm936, %v1007, 0.0
  %v1047 = vsel %vm937, %v1008, 0.0
  %v1048 = vsel %vm938, %v1009, 0.0
  %v1049 = vsel %vm939, %v1010, 0.0
  %v1050 = vsel %vm940, %v975, 0.0
  %v1051 = vsel %vm934, %v1011, 0.0
  %v1052 = vsel %vm935, %v1012, 0.0
  %v1053 = vsel %vm936, %v1013, 0.0
  %v1054 = vsel %vm937, %v1014, 0.0
  %v1055 = vsel %vm938, %v1015, 0.0
  %v1056 = vsel %vm939, %v1016, 0.0
  %v1057 = vsel %vm940, %v989, 0.0
  %v1058 = vsel %vm934, %v1017, 0.0
  %v1059 = vsel %vm935, %v1018, 0.0
  %v1060 = vsel %vm936, %v1019, 0.0
  %v1061 = vsel %vm937, %v1020, 0.0
  %v1062 = vsel %vm938, %v1021, 0.0
  %v1063 = vsel %vm939, %v1022, 0.0
  %v1064 = vsel %vm940, %v1003, 0.0
  %1065 = vst [vmem:[#allocation3 + $0x2a0] sm:$0xff] %v1044
  %1066 = vst [vmem:[#allocation3 + $0x2a8] sm:$0xff] %v1045
  %1067 = vst [vmem:[#allocation3 + $0x2b0] sm:$0xff] %v1046
  %1068 = vst [vmem:[#allocation3 + $0x2b8] sm:$0xff] %v1047
  %1069 = vst [vmem:[#allocation3 + $0x2c0] sm:$0xff] %v1048
  %1070 = vst [vmem:[#allocation3 + $0x2c8] sm:$0xff] %v1049
  %1071 = vst.msk [vmem:[#allocation3 + $0x2d0] sm:$0xff] %vm179, %v1050
  %1072 = vst [vmem:[#allocation3 + $0x2d8] sm:$0xff] %v1051
  %1073 = vst [vmem:[#allocation3 + $0x2e0] sm:$0xff] %v1052
  %1074 = vst [vmem:[#allocation3 + $0x2e8] sm:$0xff] %v1053
  %1075 = vst [vmem:[#allocation3 + $0x2f0] sm:$0xff] %v1054
  %1076 = vst [vmem:[#allocation3 + $0x2f8] sm:$0xff] %v1055
  %1077 = vst [vmem:[#allocation3 + $0x300] sm:$0xff] %v1056
  %1078 = vst.msk [vmem:[#allocation3 + $0x308] sm:$0xff] %vm179, %v1057
  %1079 = vst [vmem:[#allocation3 + $0x310] sm:$0xff] %v1058
  %1080 = vst [vmem:[#allocation3 + $0x318] sm:$0xff] %v1059
  %1081 = vst [vmem:[#allocation3 + $0x320] sm:$0xff] %v1060
  %1082 = vst [vmem:[#allocation3 + $0x328] sm:$0xff] %v1061
  %1083 = vst [vmem:[#allocation3 + $0x330] sm:$0xff] %v1062
  %1084 = vst [vmem:[#allocation3 + $0x338] sm:$0xff] %v1063
  %1085 = vst.msk [vmem:[#allocation3 + $0x340] sm:$0xff] %vm179, %v1064
  %v1086 = vld [vmem:[#allocation2] sm:$0xff]
  %v1087 = vld [vmem:[#allocation2 + $0x8] sm:$0xff]
  %v1088 = vld [vmem:[#allocation2 + $0x10] sm:$0xff]
  %v1089 = vld [vmem:[#allocation2 + $0x18] sm:$0xff]
  %v1090 = vld [vmem:[#allocation2 + $0x20] sm:$0xff]
  %v1091 = vld [vmem:[#allocation2 + $0x28] sm:$0xff]
  %v1092 = vld [vmem:[#allocation2 + $0x30] sm:$0xff]
  %v1093 = vld [vmem:[#allocation2 + $0x40] sm:$0xff]
  %v1094 = vld [vmem:[#allocation2 + $0x48] sm:$0xff]
  %v1095 = vld [vmem:[#allocation2 + $0x50] sm:$0xff]
  %v1096 = vld [vmem:[#allocation2 + $0x58] sm:$0xff]
  %v1097 = vld [vmem:[#allocation2 + $0x60] sm:$0xff]
  %v1098 = vld [vmem:[#allocation2 + $0x68] sm:$0xff]
  %v1099 = vld [vmem:[#allocation2 + $0x70] sm:$0xff]
  %v1100 = vld [vmem:[#allocation2 + $0x80] sm:$0xff]
  %v1101 = vld [vmem:[#allocation2 + $0x88] sm:$0xff]
  %v1102 = vld [vmem:[#allocation2 + $0x90] sm:$0xff]
  %v1103 = vld [vmem:[#allocation2 + $0x98] sm:$0xff]
  %v1104 = vld [vmem:[#allocation2 + $0xa0] sm:$0xff]
  %v1105 = vld [vmem:[#allocation2 + $0xa8] sm:$0xff]
  %v1106 = vld [vmem:[#allocation2 + $0xb0] sm:$0xff]
  %vm1107 = vcmp.lt.s32.totalorder %v145, 26
  %vm1108 = vcmp.lt.s32.totalorder %v146, 26
  %vm1109 = vcmp.lt.s32.totalorder %v147, 26
  %vm1110 = vcmp.lt.s32.totalorder %v148, 26
  %vm1111 = vcmp.lt.s32.totalorder %v149, 26
  %vm1112 = vcmp.lt.s32.totalorder %v150, 26
  %vm1113 = vcmp.lt.s32.totalorder %v151, 26
  %1135 = vrot.lane.b32.xlu0 %v1086, 26
  %v1136 = vpop.permute.xlu0 %1135
  %1137 = vrot.lane.b32.xlu0 %v1087, 26
  %v1138 = vpop.permute.xlu0 %1137
  %1139 = vrot.lane.b32.xlu0 %v1088, 26
  %v1140 = vpop.permute.xlu0 %1139
  %1141 = vrot.lane.b32.xlu0 %v1089, 26
  %v1142 = vpop.permute.xlu0 %1141
  %1143 = vrot.lane.b32.xlu0 %v1090, 26
  %v1144 = vpop.permute.xlu0 %1143
  %1145 = vrot.lane.b32.xlu0 %v1091, 26
  %v1146 = vpop.permute.xlu0 %1145
  %1147 = vrot.lane.b32.xlu0 %v1092, 26
  %v1148 = vpop.permute.xlu0 %1147
  %1149 = vrot.lane.b32.xlu0 %v1093, 26
  %v1150 = vpop.permute.xlu0 %1149
  %1151 = vrot.lane.b32.xlu0 %v1094, 26
  %v1152 = vpop.permute.xlu0 %1151
  %1153 = vrot.lane.b32.xlu0 %v1095, 26
  %v1154 = vpop.permute.xlu0 %1153
  %1155 = vrot.lane.b32.xlu0 %v1096, 26
  %v1156 = vpop.permute.xlu0 %1155
  %1157 = vrot.lane.b32.xlu0 %v1097, 26
  %v1158 = vpop.permute.xlu0 %1157
  %1159 = vrot.lane.b32.xlu0 %v1098, 26
  %v1160 = vpop.permute.xlu0 %1159
  %1161 = vrot.lane.b32.xlu0 %v1099, 26
  %v1162 = vpop.permute.xlu0 %1161
  %1163 = vrot.lane.b32.xlu0 %v1100, 26
  %v1164 = vpop.permute.xlu0 %1163
  %1165 = vrot.lane.b32.xlu0 %v1101, 26
  %v1166 = vpop.permute.xlu0 %1165
  %1167 = vrot.lane.b32.xlu0 %v1102, 26
  %v1168 = vpop.permute.xlu0 %1167
  %1169 = vrot.lane.b32.xlu0 %v1103, 26
  %v1170 = vpop.permute.xlu0 %1169
  %1171 = vrot.lane.b32.xlu0 %v1104, 26
  %v1172 = vpop.permute.xlu0 %1171
  %1173 = vrot.lane.b32.xlu0 %v1105, 26
  %v1174 = vpop.permute.xlu0 %1173
  %1175 = vrot.lane.b32.xlu0 %v1106, 26
  %v1176 = vpop.permute.xlu0 %1175
  %vm1177 = vcmask 211968
  %v1178 = vsel %vm1177, %v1136, %v1138
  %v1179 = vsel %vm1177, %v1138, %v1140
  %v1180 = vsel %vm1177, %v1140, %v1142
  %v1181 = vsel %vm1177, %v1142, %v1144
  %v1182 = vsel %vm1177, %v1144, %v1146
  %v1183 = vsel %vm1177, %v1146, %v1148
  %v1184 = vsel %vm1177, %v1150, %v1152
  %v1185 = vsel %vm1177, %v1152, %v1154
  %v1186 = vsel %vm1177, %v1154, %v1156
  %v1187 = vsel %vm1177, %v1156, %v1158
  %v1188 = vsel %vm1177, %v1158, %v1160
  %v1189 = vsel %vm1177, %v1160, %v1162
  %v1190 = vsel %vm1177, %v1164, %v1166
  %v1191 = vsel %vm1177, %v1166, %v1168
  %v1192 = vsel %vm1177, %v1168, %v1170
  %v1193 = vsel %vm1177, %v1170, %v1172
  %v1194 = vsel %vm1177, %v1172, %v1174
  %v1195 = vsel %vm1177, %v1174, %v1176
  %v1217 = vsel %vm1107, %v1178, 0.0
  %v1218 = vsel %vm1108, %v1179, 0.0
  %v1219 = vsel %vm1109, %v1180, 0.0
  %v1220 = vsel %vm1110, %v1181, 0.0
  %v1221 = vsel %vm1111, %v1182, 0.0
  %v1222 = vsel %vm1112, %v1183, 0.0
  %v1223 = vsel %vm1113, %v1148, 0.0
  %v1224 = vsel %vm1107, %v1184, 0.0
  %v1225 = vsel %vm1108, %v1185, 0.0
  %v1226 = vsel %vm1109, %v1186, 0.0
  %v1227 = vsel %vm1110, %v1187, 0.0
  %v1228 = vsel %vm1111, %v1188, 0.0
  %v1229 = vsel %vm1112, %v1189, 0.0
  %v1230 = vsel %vm1113, %v1162, 0.0
  %v1231 = vsel %vm1107, %v1190, 0.0
  %v1232 = vsel %vm1108, %v1191, 0.0
  %v1233 = vsel %vm1109, %v1192, 0.0
  %v1234 = vsel %vm1110, %v1193, 0.0
  %v1235 = vsel %vm1111, %v1194, 0.0
  %v1236 = vsel %vm1112, %v1195, 0.0
  %v1237 = vsel %vm1113, %v1176, 0.0
  %1238 = vst [vmem:[#allocation3 + $0x348] sm:$0xff] %v1217
  %1239 = vst [vmem:[#allocation3 + $0x350] sm:$0xff] %v1218
  %1240 = vst [vmem:[#allocation3 + $0x358] sm:$0xff] %v1219
  %1241 = vst [vmem:[#allocation3 + $0x360] sm:$0xff] %v1220
  %1242 = vst [vmem:[#allocation3 + $0x368] sm:$0xff] %v1221
  %1243 = vst [vmem:[#allocation3 + $0x370] sm:$0xff] %v1222
  %1244 = vst.msk [vmem:[#allocation3 + $0x378] sm:$0xff] %vm179, %v1223
  %1245 = vst [vmem:[#allocation3 + $0x380] sm:$0xff] %v1224
  %1246 = vst [vmem:[#allocation3 + $0x388] sm:$0xff] %v1225
  %1247 = vst [vmem:[#allocation3 + $0x390] sm:$0xff] %v1226
  %1248 = vst [vmem:[#allocation3 + $0x398] sm:$0xff] %v1227
  %1249 = vst [vmem:[#allocation3 + $0x3a0] sm:$0xff] %v1228
  %1250 = vst [vmem:[#allocation3 + $0x3a8] sm:$0xff] %v1229
  %1251 = vst.msk [vmem:[#allocation3 + $0x3b0] sm:$0xff] %vm179, %v1230
  %1252 = vst [vmem:[#allocation3 + $0x3b8] sm:$0xff] %v1231
  %1253 = vst [vmem:[#allocation3 + $0x3c0] sm:$0xff] %v1232
  %1254 = vst [vmem:[#allocation3 + $0x3c8] sm:$0xff] %v1233
  %1255 = vst [vmem:[#allocation3 + $0x3d0] sm:$0xff] %v1234
  %1256 = vst [vmem:[#allocation3 + $0x3d8] sm:$0xff] %v1235
  %1257 = vst [vmem:[#allocation3 + $0x3e0] sm:$0xff] %v1236
  %1258 = vst.msk [vmem:[#allocation3 + $0x3e8] sm:$0xff] %vm179, %v1237
  %v1259 = vld [vmem:[#allocation2] sm:$0xff]
  %v1260 = vld [vmem:[#allocation2 + $0x8] sm:$0xff]
  %v1261 = vld [vmem:[#allocation2 + $0x10] sm:$0xff]
  %v1262 = vld [vmem:[#allocation2 + $0x18] sm:$0xff]
  %v1263 = vld [vmem:[#allocation2 + $0x20] sm:$0xff]
  %v1264 = vld [vmem:[#allocation2 + $0x28] sm:$0xff]
  %v1265 = vld [vmem:[#allocation2 + $0x30] sm:$0xff]
  %v1266 = vld [vmem:[#allocation2 + $0x40] sm:$0xff]
  %v1267 = vld [vmem:[#allocation2 + $0x48] sm:$0xff]
  %v1268 = vld [vmem:[#allocation2 + $0x50] sm:$0xff]
  %v1269 = vld [vmem:[#allocation2 + $0x58] sm:$0xff]
  %v1270 = vld [vmem:[#allocation2 + $0x60] sm:$0xff]
  %v1271 = vld [vmem:[#allocation2 + $0x68] sm:$0xff]
  %v1272 = vld [vmem:[#allocation2 + $0x70] sm:$0xff]
  %v1273 = vld [vmem:[#allocation2 + $0x80] sm:$0xff]
  %v1274 = vld [vmem:[#allocation2 + $0x88] sm:$0xff]
  %v1275 = vld [vmem:[#allocation2 + $0x90] sm:$0xff]
  %v1276 = vld [vmem:[#allocation2 + $0x98] sm:$0xff]
  %v1277 = vld [vmem:[#allocation2 + $0xa0] sm:$0xff]
  %v1278 = vld [vmem:[#allocation2 + $0xa8] sm:$0xff]
  %v1279 = vld [vmem:[#allocation2 + $0xb0] sm:$0xff]
  %vm1280 = vcmp.lt.s32.totalorder %v145, 25
  %vm1281 = vcmp.lt.s32.totalorder %v146, 25
  %vm1282 = vcmp.lt.s32.totalorder %v147, 25
  %vm1283 = vcmp.lt.s32.totalorder %v148, 25
  %vm1284 = vcmp.lt.s32.totalorder %v149, 25
  %vm1285 = vcmp.lt.s32.totalorder %v150, 25
  %vm1286 = vcmp.lt.s32.totalorder %v151, 25
  %1308 = vrot.lane.b32.xlu0 %v1259, 25
  %v1309 = vpop.permute.xlu0 %1308
  %1310 = vrot.lane.b32.xlu0 %v1260, 25
  %v1311 = vpop.permute.xlu0 %1310
  %1312 = vrot.lane.b32.xlu0 %v1261, 25
  %v1313 = vpop.permute.xlu0 %1312
  %1314 = vrot.lane.b32.xlu0 %v1262, 25
  %v1315 = vpop.permute.xlu0 %1314
  %1316 = vrot.lane.b32.xlu0 %v1263, 25
  %v1317 = vpop.permute.xlu0 %1316
  %1318 = vrot.lane.b32.xlu0 %v1264, 25
  %v1319 = vpop.permute.xlu0 %1318
  %1320 = vrot.lane.b32.xlu0 %v1265, 25
  %v1321 = vpop.permute.xlu0 %1320
  %1322 = vrot.lane.b32.xlu0 %v1266, 25
  %v1323 = vpop.permute.xlu0 %1322
  %1324 = vrot.lane.b32.xlu0 %v1267, 25
  %v1325 = vpop.permute.xlu0 %1324
  %1326 = vrot.lane.b32.xlu0 %v1268, 25
  %v1327 = vpop.permute.xlu0 %1326
  %1328 = vrot.lane.b32.xlu0 %v1269, 25
  %v1329 = vpop.permute.xlu0 %1328
  %1330 = vrot.lane.b32.xlu0 %v1270, 25
  %v1331 = vpop.permute.xlu0 %1330
  %1332 = vrot.lane.b32.xlu0 %v1271, 25
  %v1333 = vpop.permute.xlu0 %1332
  %1334 = vrot.lane.b32.xlu0 %v1272, 25
  %v1335 = vpop.permute.xlu0 %1334
  %1336 = vrot.lane.b32.xlu0 %v1273, 25
  %v1337 = vpop.permute.xlu0 %1336
  %1338 = vrot.lane.b32.xlu0 %v1274, 25
  %v1339 = vpop.permute.xlu0 %1338
  %1340 = vrot.lane.b32.xlu0 %v1275, 25
  %v1341 = vpop.permute.xlu0 %1340
  %1342 = vrot.lane.b32.xlu0 %v1276, 25
  %v1343 = vpop.permute.xlu0 %1342
  %1344 = vrot.lane.b32.xlu0 %v1277, 25
  %v1345 = vpop.permute.xlu0 %1344
  %1346 = vrot.lane.b32.xlu0 %v1278, 25
  %v1347 = vpop.permute.xlu0 %1346
  %1348 = vrot.lane.b32.xlu0 %v1279, 25
  %v1349 = vpop.permute.xlu0 %1348
  %vm1350 = vcmask 203776
  %v1351 = vsel %vm1350, %v1309, %v1311
  %v1352 = vsel %vm1350, %v1311, %v1313
  %v1353 = vsel %vm1350, %v1313, %v1315
  %v1354 = vsel %vm1350, %v1315, %v1317
  %v1355 = vsel %vm1350, %v1317, %v1319
  %v1356 = vsel %vm1350, %v1319, %v1321
  %v1357 = vsel %vm1350, %v1323, %v1325
  %v1358 = vsel %vm1350, %v1325, %v1327
  %v1359 = vsel %vm1350, %v1327, %v1329
  %v1360 = vsel %vm1350, %v1329, %v1331
  %v1361 = vsel %vm1350, %v1331, %v1333
  %v1362 = vsel %vm1350, %v1333, %v1335
  %v1363 = vsel %vm1350, %v1337, %v1339
  %v1364 = vsel %vm1350, %v1339, %v1341
  %v1365 = vsel %vm1350, %v1341, %v1343
  %v1366 = vsel %vm1350, %v1343, %v1345
  %v1367 = vsel %vm1350, %v1345, %v1347
  %v1368 = vsel %vm1350, %v1347, %v1349
  %v1390 = vsel %vm1280, %v1351, 0.0
  %v1391 = vsel %vm1281, %v1352, 0.0
  %v1392 = vsel %vm1282, %v1353, 0.0
  %v1393 = vsel %vm1283, %v1354, 0.0
  %v1394 = vsel %vm1284, %v1355, 0.0
  %v1395 = vsel %vm1285, %v1356, 0.0
  %v1396 = vsel %vm1286, %v1321, 0.0
  %v1397 = vsel %vm1280, %v1357, 0.0
  %v1398 = vsel %vm1281, %v1358, 0.0
  %v1399 = vsel %vm1282, %v1359, 0.0
  %v1400 = vsel %vm1283, %v1360, 0.0
  %v1401 = vsel %vm1284, %v1361, 0.0
  %v1402 = vsel %vm1285, %v1362, 0.0
  %v1403 = vsel %vm1286, %v1335, 0.0
  %v1404 = vsel %vm1280, %v1363, 0.0
  %v1405 = vsel %vm1281, %v1364, 0.0
  %v1406 = vsel %vm1282, %v1365, 0.0
  %v1407 = vsel %vm1283, %v1366, 0.0
  %v1408 = vsel %vm1284, %v1367, 0.0
  %v1409 = vsel %vm1285, %v1368, 0.0
  %v1410 = vsel %vm1286, %v1349, 0.0
  %1411 = vst [vmem:[#allocation3 + $0x3f0] sm:$0xff] %v1390
  %1412 = vst [vmem:[#allocation3 + $0x3f8] sm:$0xff] %v1391
  %1413 = vst [vmem:[#allocation3 + $0x400] sm:$0xff] %v1392
  %1414 = vst [vmem:[#allocation3 + $0x408] sm:$0xff] %v1393
  %1415 = vst [vmem:[#allocation3 + $0x410] sm:$0xff] %v1394
  %1416 = vst [vmem:[#allocation3 + $0x418] sm:$0xff] %v1395
  %1417 = vst.msk [vmem:[#allocation3 + $0x420] sm:$0xff] %vm179, %v1396
  %1418 = vst [vmem:[#allocation3 + $0x428] sm:$0xff] %v1397
  %1419 = vst [vmem:[#allocation3 + $0x430] sm:$0xff] %v1398
  %1420 = vst [vmem:[#allocation3 + $0x438] sm:$0xff] %v1399
  %1421 = vst [vmem:[#allocation3 + $0x440] sm:$0xff] %v1400
  %1422 = vst [vmem:[#allocation3 + $0x448] sm:$0xff] %v1401
  %1423 = vst [vmem:[#allocation3 + $0x450] sm:$0xff] %v1402
  %1424 = vst.msk [vmem:[#allocation3 + $0x458] sm:$0xff] %vm179, %v1403
  %1425 = vst [vmem:[#allocation3 + $0x460] sm:$0xff] %v1404
  %1426 = vst [vmem:[#allocation3 + $0x468] sm:$0xff] %v1405
  %1427 = vst [vmem:[#allocation3 + $0x470] sm:$0xff] %v1406
  %1428 = vst [vmem:[#allocation3 + $0x478] sm:$0xff] %v1407
  %1429 = vst [vmem:[#allocation3 + $0x480] sm:$0xff] %v1408
  %1430 = vst [vmem:[#allocation3 + $0x488] sm:$0xff] %v1409
  %1431 = vst.msk [vmem:[#allocation3 + $0x490] sm:$0xff] %vm179, %v1410
  %v1432 = vld [vmem:[%s1] sm:$0xff]
  %v1433 = vld [vmem:[%s1 + $0x8] sm:$0xff]
  %v1434 = vld [vmem:[%s1 + $0x10] sm:$0xff]
  %v1435 = vld [vmem:[%s1 + $0x18] sm:$0xff]
  %v1436 = vld [vmem:[%s1 + $0x20] sm:$0xff]
  %v1437 = vld [vmem:[%s1 + $0x28] sm:$0xff]
  %v1438 = vld [vmem:[%s1 + $0x30] sm:$0xff]
  %v1439 = vld [vmem:[%s1 + $0x38] sm:$0xff]
  %v1440 = vld [vmem:[%s1 + $0x40] sm:$0xff]
  %v1441 = vld [vmem:[%s1 + $0x48] sm:$0xff]
  %v1442 = vld [vmem:[%s1 + $0x50] sm:$0xff]
  %v1443 = vld [vmem:[%s1 + $0x58] sm:$0xff]
  %v1444 = vld [vmem:[%s1 + $0x60] sm:$0xff]
  %v1445 = vld [vmem:[%s1 + $0x68] sm:$0xff]
  %v1446 = vld [vmem:[%s1 + $0x70] sm:$0xff]
  %v1447 = vld [vmem:[%s1 + $0x78] sm:$0xff]
  %v1448 = vld [vmem:[%s1 + $0x80] sm:$0xff]
  %v1449 = vld [vmem:[%s1 + $0x88] sm:$0xff]
  %v1450 = vld [vmem:[%s1 + $0x90] sm:$0xff]
  %v1451 = vld [vmem:[%s1 + $0x98] sm:$0xff]
  %v1452 = vld [vmem:[%s1 + $0xa0] sm:$0xff]
  %v1453 = vld [vmem:[%s1 + $0xa8] sm:$0xff]
  %v1454 = vld [vmem:[%s1 + $0xb0] sm:$0xff]
  %v1455 = vld [vmem:[%s1 + $0xb8] sm:$0xff]
  %v1456 = vld [vmem:[#allocation3] sm:$0xff]
  %v1457 = vld [vmem:[#allocation3 + $0x8] sm:$0xff]
  %v1458 = vld [vmem:[#allocation3 + $0x10] sm:$0xff]
  %v1459 = vld [vmem:[#allocation3 + $0x18] sm:$0xff]
  %v1460 = vld [vmem:[#allocation3 + $0x20] sm:$0xff]
  %v1461 = vld [vmem:[#allocation3 + $0x28] sm:$0xff]
  %v1462 = vld [vmem:[#allocation3 + $0x30] sm:$0xff]
  %v1463 = vld [vmem:[#allocation3 + $0x38] sm:$0xff]
  %v1464 = vld [vmem:[#allocation3 + $0x40] sm:$0xff]
  %v1465 = vld [vmem:[#allocation3 + $0x48] sm:$0xff]
  %v1466 = vld [vmem:[#allocation3 + $0x50] sm:$0xff]
  %v1467 = vld [vmem:[#allocation3 + $0x58] sm:$0xff]
  %v1468 = vld [vmem:[#allocation3 + $0x60] sm:$0xff]
  %v1469 = vld [vmem:[#allocation3 + $0x68] sm:$0xff]
  %v1470 = vld [vmem:[#allocation3 + $0x70] sm:$0xff]
  %v1471 = vld [vmem:[#allocation3 + $0x78] sm:$0xff]
  %v1472 = vld [vmem:[#allocation3 + $0x80] sm:$0xff]
  %v1473 = vld [vmem:[#allocation3 + $0x88] sm:$0xff]
  %v1474 = vld [vmem:[#allocation3 + $0x90] sm:$0xff]
  %v1475 = vld [vmem:[#allocation3 + $0x98] sm:$0xff]
  %v1476 = vld [vmem:[#allocation3 + $0xa0] sm:$0xff]
  %v1477 = vld [vmem:[#allocation3 + $0xa8] sm:$0xff]
  %v1478 = vld [vmem:[#allocation3 + $0xb0] sm:$0xff]
  %v1479 = vld [vmem:[#allocation3 + $0xb8] sm:$0xff]
  %v1480 = vld [vmem:[#allocation3 + $0xc0] sm:$0xff]
  %v1481 = vld [vmem:[#allocation3 + $0xc8] sm:$0xff]
  %v1482 = vld [vmem:[#allocation3 + $0xd0] sm:$0xff]
  %v1483 = vld [vmem:[#allocation3 + $0xd8] sm:$0xff]
  %v1484 = vld [vmem:[#allocation3 + $0xe0] sm:$0xff]
  %v1485 = vld [vmem:[#allocation3 + $0xe8] sm:$0xff]
  %v1486 = vld [vmem:[#allocation3 + $0xf0] sm:$0xff]
  %v1487 = vld [vmem:[#allocation3 + $0xf8] sm:$0xff]
  %v1488 = vld [vmem:[#allocation3 + $0x100] sm:$0xff]
  %v1489 = vld [vmem:[#allocation3 + $0x108] sm:$0xff]
  %v1490 = vld [vmem:[#allocation3 + $0x110] sm:$0xff]
  %v1491 = vld [vmem:[#allocation3 + $0x118] sm:$0xff]
  %v1492 = vld [vmem:[#allocation3 + $0x120] sm:$0xff]
  %v1493 = vld [vmem:[#allocation3 + $0x128] sm:$0xff]
  %v1494 = vld [vmem:[#allocation3 + $0x130] sm:$0xff]
  %v1495 = vld [vmem:[#allocation3 + $0x138] sm:$0xff]
  %v1496 = vld [vmem:[#allocation3 + $0x140] sm:$0xff]
  %v1497 = vld [vmem:[#allocation3 + $0x148] sm:$0xff]
  %v1498 = vld [vmem:[#allocation3 + $0x150] sm:$0xff]
  %v1499 = vld [vmem:[#allocation3 + $0x158] sm:$0xff]
  %v1500 = vld [vmem:[#allocation3 + $0x160] sm:$0xff]
  %v1501 = vld [vmem:[#allocation3 + $0x168] sm:$0xff]
  %v1502 = vld [vmem:[#allocation3 + $0x170] sm:$0xff]
  %v1503 = vld [vmem:[#allocation3 + $0x178] sm:$0xff]
  %v1504 = vld [vmem:[#allocation3 + $0x180] sm:$0xff]
  %v1505 = vld [vmem:[#allocation3 + $0x188] sm:$0xff]
  %v1506 = vld [vmem:[#allocation3 + $0x190] sm:$0xff]
  %v1507 = vld [vmem:[#allocation3 + $0x198] sm:$0xff]
  %v1508 = vld [vmem:[#allocation3 + $0x1a0] sm:$0xff]
  %v1509 = vld [vmem:[#allocation3 + $0x1a8] sm:$0xff]
  %v1510 = vld [vmem:[#allocation3 + $0x1b0] sm:$0xff]
  %v1511 = vld [vmem:[#allocation3 + $0x1b8] sm:$0xff]
  %v1512 = vld [vmem:[#allocation3 + $0x1c0] sm:$0xff]
  %v1513 = vld [vmem:[#allocation3 + $0x1c8] sm:$0xff]
  %v1514 = vld [vmem:[#allocation3 + $0x1d0] sm:$0xff]
  %v1515 = vld [vmem:[#allocation3 + $0x1d8] sm:$0xff]
  %v1516 = vld [vmem:[#allocation3 + $0x1e0] sm:$0xff]
  %v1517 = vld [vmem:[#allocation3 + $0x1e8] sm:$0xff]
  %v1518 = vld [vmem:[#allocation3 + $0x1f0] sm:$0xff]
  %v1519 = vld [vmem:[#allocation3 + $0x1f8] sm:$0xff]
  %v1520 = vld [vmem:[#allocation3 + $0x200] sm:$0xff]
  %v1521 = vld [vmem:[#allocation3 + $0x208] sm:$0xff]
  %v1522 = vld [vmem:[#allocation3 + $0x210] sm:$0xff]
  %v1523 = vld [vmem:[#allocation3 + $0x218] sm:$0xff]
  %v1524 = vld [vmem:[#allocation3 + $0x220] sm:$0xff]
  %v1525 = vld [vmem:[#allocation3 + $0x228] sm:$0xff]
  %v1526 = vld [vmem:[#allocation3 + $0x230] sm:$0xff]
  %v1527 = vld [vmem:[#allocation3 + $0x238] sm:$0xff]
  %v1528 = vld [vmem:[#allocation3 + $0x240] sm:$0xff]
  %v1529 = vld [vmem:[#allocation3 + $0x248] sm:$0xff]
  %v1530 = vld [vmem:[#allocation3 + $0x250] sm:$0xff]
  %v1531 = vld [vmem:[#allocation3 + $0x258] sm:$0xff]
  %v1532 = vld [vmem:[#allocation3 + $0x260] sm:$0xff]
  %v1533 = vld [vmem:[#allocation3 + $0x268] sm:$0xff]
  %v1534 = vld [vmem:[#allocation3 + $0x270] sm:$0xff]
  %v1535 = vld [vmem:[#allocation3 + $0x278] sm:$0xff]
  %v1536 = vld [vmem:[#allocation3 + $0x280] sm:$0xff]
  %v1537 = vld [vmem:[#allocation3 + $0x288] sm:$0xff]
  %v1538 = vld [vmem:[#allocation3 + $0x290] sm:$0xff]
  %v1539 = vld [vmem:[#allocation3 + $0x298] sm:$0xff]
  %v1540 = vld [vmem:[#allocation3 + $0x2a0] sm:$0xff]
  %v1541 = vld [vmem:[#allocation3 + $0x2a8] sm:$0xff]
  %v1542 = vld [vmem:[#allocation3 + $0x2b0] sm:$0xff]
  %v1543 = vld [vmem:[#allocation3 + $0x2b8] sm:$0xff]
  %v1544 = vld [vmem:[#allocation3 + $0x2c0] sm:$0xff]
  %v1545 = vld [vmem:[#allocation3 + $0x2c8] sm:$0xff]
  %v1546 = vld [vmem:[#allocation3 + $0x2d0] sm:$0xff]
  %v1547 = vld [vmem:[#allocation3 + $0x2d8] sm:$0xff]
  %v1548 = vld [vmem:[#allocation3 + $0x2e0] sm:$0xff]
  %v1549 = vld [vmem:[#allocation3 + $0x2e8] sm:$0xff]
  %v1550 = vld [vmem:[#allocation3 + $0x2f0] sm:$0xff]
  %v1551 = vld [vmem:[#allocation3 + $0x2f8] sm:$0xff]
  %v1552 = vld [vmem:[#allocation3 + $0x300] sm:$0xff]
  %v1553 = vld [vmem:[#allocation3 + $0x308] sm:$0xff]
  %v1554 = vld [vmem:[#allocation3 + $0x310] sm:$0xff]
  %v1555 = vld [vmem:[#allocation3 + $0x318] sm:$0xff]
  %v1556 = vld [vmem:[#allocation3 + $0x320] sm:$0xff]
  %v1557 = vld [vmem:[#allocation3 + $0x328] sm:$0xff]
  %v1558 = vld [vmem:[#allocation3 + $0x330] sm:$0xff]
  %v1559 = vld [vmem:[#allocation3 + $0x338] sm:$0xff]
  %v1560 = vld [vmem:[#allocation3 + $0x340] sm:$0xff]
  %v1561 = vld [vmem:[#allocation3 + $0x348] sm:$0xff]
  %v1562 = vld [vmem:[#allocation3 + $0x350] sm:$0xff]
  %v1563 = vld [vmem:[#allocation3 + $0x358] sm:$0xff]
  %v1564 = vld [vmem:[#allocation3 + $0x360] sm:$0xff]
  %v1565 = vld [vmem:[#allocation3 + $0x368] sm:$0xff]
  %v1566 = vld [vmem:[#allocation3 + $0x370] sm:$0xff]
  %v1567 = vld [vmem:[#allocation3 + $0x378] sm:$0xff]
  %v1568 = vld [vmem:[#allocation3 + $0x380] sm:$0xff]
  %v1569 = vld [vmem:[#allocation3 + $0x388] sm:$0xff]
  %v1570 = vld [vmem:[#allocation3 + $0x390] sm:$0xff]
  %v1571 = vld [vmem:[#allocation3 + $0x398] sm:$0xff]
  %v1572 = vld [vmem:[#allocation3 + $0x3a0] sm:$0xff]
  %v1573 = vld [vmem:[#allocation3 + $0x3a8] sm:$0xff]
  %v1574 = vld [vmem:[#allocation3 + $0x3b0] sm:$0xff]
  %v1575 = vld [vmem:[#allocation3 + $0x3b8] sm:$0xff]
  %v1576 = vld [vmem:[#allocation3 + $0x3c0] sm:$0xff]
  %v1577 = vld [vmem:[#allocation3 + $0x3c8] sm:$0xff]
  %v1578 = vld [vmem:[#allocation3 + $0x3d0] sm:$0xff]
  %v1579 = vld [vmem:[#allocation3 + $0x3d8] sm:$0xff]
  %v1580 = vld [vmem:[#allocation3 + $0x3e0] sm:$0xff]
  %v1581 = vld [vmem:[#allocation3 + $0x3e8] sm:$0xff]
  %v1582 = vld [vmem:[#allocation3 + $0x3f0] sm:$0xff]
  %v1583 = vld [vmem:[#allocation3 + $0x3f8] sm:$0xff]
  %v1584 = vld [vmem:[#allocation3 + $0x400] sm:$0xff]
  %v1585 = vld [vmem:[#allocation3 + $0x408] sm:$0xff]
  %v1586 = vld [vmem:[#allocation3 + $0x410] sm:$0xff]
  %v1587 = vld [vmem:[#allocation3 + $0x418] sm:$0xff]
  %v1588 = vld [vmem:[#allocation3 + $0x420] sm:$0xff]
  %v1589 = vld [vmem:[#allocation3 + $0x428] sm:$0xff]
  %v1590 = vld [vmem:[#allocation3 + $0x430] sm:$0xff]
  %v1591 = vld [vmem:[#allocation3 + $0x438] sm:$0xff]
  %v1592 = vld [vmem:[#allocation3 + $0x440] sm:$0xff]
  %v1593 = vld [vmem:[#allocation3 + $0x448] sm:$0xff]
  %v1594 = vld [vmem:[#allocation3 + $0x450] sm:$0xff]
  %v1595 = vld [vmem:[#allocation3 + $0x458] sm:$0xff]
  %v1596 = vld [vmem:[#allocation3 + $0x460] sm:$0xff]
  %v1597 = vld [vmem:[#allocation3 + $0x468] sm:$0xff]
  %v1598 = vld [vmem:[#allocation3 + $0x470] sm:$0xff]
  %v1599 = vld [vmem:[#allocation3 + $0x478] sm:$0xff]
  %v1600 = vld [vmem:[#allocation3 + $0x480] sm:$0xff]
  %v1601 = vld [vmem:[#allocation3 + $0x488] sm:$0xff]
  %v1602 = vld [vmem:[#allocation3 + $0x490] sm:$0xff]
  %vm1603 = vcmask 326656
  %v1605 = vsel %vm1603, %v1433, 0
  %v1608 = vsel %vm1603, %v1435, 0
  %v1611 = vsel %vm1603, %v1437, 0
  %v1614 = vsel %vm1603, %v1439, 0
  %v1617 = vsel %vm1603, %v1441, 0
  %v1620 = vsel %vm1603, %v1443, 0
  %v1623 = vsel %vm1603, %v1445, 0
  %v1626 = vsel %vm1603, %v1447, 0
  %v1629 = vsel %vm1603, %v1449, 0
  %v1632 = vsel %vm1603, %v1451, 0
  %v1635 = vsel %vm1603, %v1453, 0
  %v1638 = vsel %vm1603, %v1455, 0
  %1640 = vmatprep.subr.mxu0 %v1562
  %1641 = vmatpush1.msra.mxu0 %v1561
  %1642 = vmatprep.subr.mxu0 %v1555
  %1643 = vmatpush1.msra.mxu0 %v1554
  %1644 = vmatprep.subr.mxu0 %v1548
  %1645 = vmatpush1.msra.mxu0 %v1547
  %1646 = vmatprep.subr.mxu0 %v1541
  %1647 = vmatpush1.msra.mxu0 %v1540
  %1648 = vmatprep.subr.mxu0 %v1534
  %1649 = vmatpush1.msra.mxu0 %v1533
  %1650 = vmatprep.subr.mxu0 %v1527
  %1651 = vmatpush1.msra.mxu0 %v1526
  %1652 = vmatprep.subr.mxu0 %v1520
  %1653 = vmatpush1.msra.mxu0 %v1519
  %1654 = vmatprep.subr.mxu0 %v1513
  %1655 = vmatpush1.msra.mxu0 %v1512
  %1656 = vmatprep.subr.mxu0 %v1506
  %1657 = vmatpush1.msra.mxu0 %v1505
  %1658 = vmatprep.subr.mxu0 %v1499
  %1659 = vmatpush1.msra.mxu0 %v1498
  %1660 = vmatprep.subr.mxu0 %v1492
  %1661 = vmatpush1.msra.mxu0 %v1491
  %1662 = vmatprep.subr.mxu0 %v1485
  %1663 = vmatpush1.msra.mxu0 %v1484
  %1664 = vmatprep.subr.mxu0 %v1478
  %1665 = vmatpush1.msra.mxu0 %v1477
  %1666 = vmatprep.subr.mxu0 %v1471
  %1667 = vmatpush1.msra.mxu0 %v1470
  %1668 = vmatprep.subr.mxu0 %v1464
  %1669 = vmatpush1.msra.mxu0 %v1463
  %1670 = vmatprep.subr.mxu0 %v1457
  %1671 = vmatpush1.msra.mxu0 %v1456
  %1672 = vmatprep.subr.mxu0 0.0
  %1673 = vmatpush2.msra.mxu0 0.0
  %1674 = vmatprep.subr.mxu0 0.0
  %1675 = vmatpush2.msra.mxu0 0.0
  %1676 = vmatprep.subr.mxu0 0.0
  %1677 = vmatpush2.msra.mxu0 0.0
  %1678 = vmatprep.subr.mxu0 0.0
  %1679 = vmatpush2.msra.mxu0 0.0
  %1680 = vmatprep.subr.mxu0 0.0
  %1681 = vmatpush2.msra.mxu0 0.0
  %1682 = vmatprep.subr.mxu0 0.0
  %1683 = vmatpush2.msra.mxu0 0.0
  %1684 = vmatprep.subr.mxu0 0.0
  %1685 = vmatpush2.msra.mxu0 0.0
  %1686 = vmatprep.subr.mxu0 0.0
  %1687 = vmatpush2.msra.mxu0 0.0
  %1688 = vmatprep.subr.mxu0 0.0
  %1689 = vmatpush2.msra.mxu0 0.0
  %1690 = vmatprep.subr.mxu0 0.0
  %1691 = vmatpush2.msra.mxu0 0.0
  %1692 = vmatprep.subr.mxu0 0.0
  %1693 = vmatpush2.msra.mxu0 0.0
  %1694 = vmatprep.subr.mxu0 %v1597
  %1695 = vmatpush2.msra.mxu0 %v1596
  %1696 = vmatprep.subr.mxu0 %v1590
  %1697 = vmatpush2.msra.mxu0 %v1589
  %1698 = vmatprep.subr.mxu0 %v1583
  %1699 = vmatpush2.msra.mxu0 %v1582
  %1700 = vmatprep.subr.mxu0 %v1576
  %1701 = vmatpush2.msra.mxu0 %v1575
  %1702 = vmatprep.subr.mxu0 %v1569
  %1703 = vmatpush2.msra.mxu0 %v1568
  %1704 = vmatprep.mubr.f32.mxu0 %v1605
  %1705 = vmatmul.mubr.f32.gmra.mxu0 %v1432
  %v1706 = vpop.f32.mrf.mxu0
  %v1707 = vadd.f32 0.0, %v1706
  %v1708 = vpop.f32.mrf.mxu0
  %v1709 = vadd.f32 0.0, %v1708
  %1710 = vmatprep.mubr.f32.mxu0 %v1608
  %1711 = vmatmul.mubr.f32.gmra.mxu0 %v1434
  %v1712 = vpop.f32.mrf.mxu0
  %v1713 = vadd.f32 0.0, %v1712
  %v1714 = vpop.f32.mrf.mxu0
  %v1715 = vadd.f32 0.0, %v1714
  %1716 = vmatprep.mubr.f32.mxu0 %v1611
  %1717 = vmatmul.mubr.f32.gmra.mxu0 %v1436
  %v1718 = vpop.f32.mrf.mxu0
  %v1719 = vadd.f32 0.0, %v1718
  %v1720 = vpop.f32.mrf.mxu0
  %v1721 = vadd.f32 0.0, %v1720
  %1722 = vmatprep.mubr.f32.mxu0 %v1614
  %1723 = vmatmul.mubr.f32.gmra.mxu0 %v1438
  %v1724 = vpop.f32.mrf.mxu0
  %v1725 = vadd.f32 0.0, %v1724
  %v1726 = vpop.f32.mrf.mxu0
  %v1727 = vadd.f32 0.0, %v1726
  %1728 = vmatprep.mubr.f32.mxu0 %v1617
  %1729 = vmatmul.mubr.f32.gmra.mxu0 %v1440
  %v1730 = vpop.f32.mrf.mxu0
  %v1731 = vadd.f32 0.0, %v1730
  %v1732 = vpop.f32.mrf.mxu0
  %v1733 = vadd.f32 0.0, %v1732
  %1734 = vmatprep.mubr.f32.mxu0 %v1620
  %1735 = vmatmul.mubr.f32.gmra.mxu0 %v1442
  %v1736 = vpop.f32.mrf.mxu0
  %v1737 = vadd.f32 0.0, %v1736
  %v1738 = vpop.f32.mrf.mxu0
  %v1739 = vadd.f32 0.0, %v1738
  %1740 = vmatprep.mubr.f32.mxu0 %v1623
  %1741 = vmatmul.mubr.f32.gmra.mxu0 %v1444
  %v1742 = vpop.f32.mrf.mxu0
  %v1743 = vadd.f32 0.0, %v1742
  %v1744 = vpop.f32.mrf.mxu0
  %v1745 = vadd.f32 0.0, %v1744
  %1746 = vmatprep.mubr.f32.mxu0 %v1626
  %1747 = vmatmul.mubr.f32.gmra.mxu0 %v1446
  %v1748 = vpop.f32.mrf.mxu0
  %v1749 = vadd.f32 0.0, %v1748
  %v1750 = vpop.f32.mrf.mxu0
  %v1751 = vadd.f32 0.0, %v1750
  %1752 = vmatprep.mubr.f32.mxu0 %v1629
  %1753 = vmatmul.mubr.f32.gmra.mxu0 %v1448
  %v1754 = vpop.f32.mrf.mxu0
  %v1755 = vadd.f32 0.0, %v1754
  %v1756 = vpop.f32.mrf.mxu0
  %v1757 = vadd.f32 0.0, %v1756
  %1758 = vmatprep.mubr.f32.mxu0 %v1632
  %1759 = vmatmul.mubr.f32.gmra.mxu0 %v1450
  %v1760 = vpop.f32.mrf.mxu0
  %v1761 = vadd.f32 0.0, %v1760
  %v1762 = vpop.f32.mrf.mxu0
  %v1763 = vadd.f32 0.0, %v1762
  %1764 = vmatprep.mubr.f32.mxu0 %v1635
  %1765 = vmatmul.mubr.f32.gmra.mxu0 %v1452
  %v1766 = vpop.f32.mrf.mxu0
  %v1767 = vadd.f32 0.0, %v1766
  %v1768 = vpop.f32.mrf.mxu0
  %v1769 = vadd.f32 0.0, %v1768
  %1770 = vmatprep.mubr.f32.mxu0 %v1638
  %1771 = vmatmul.mubr.f32.gmra.mxu0 %v1454
  %v1772 = vpop.f32.mrf.mxu0
  %v1773 = vadd.f32 0.0, %v1772
  %v1774 = vpop.f32.mrf.mxu0
  %v1775 = vadd.f32 0.0, %v1774
  %1776 = vdwg.mxu0
  %1777 = vmatprep.subr.mxu0 %v1564
  %1778 = vmatpush1.msra.mxu0 %v1563
  %1779 = vmatprep.subr.mxu0 %v1557
  %1780 = vmatpush1.msra.mxu0 %v1556
  %1781 = vmatprep.subr.mxu0 %v1550
  %1782 = vmatpush1.msra.mxu0 %v1549
  %1783 = vmatprep.subr.mxu0 %v1543
  %1784 = vmatpush1.msra.mxu0 %v1542
  %1785 = vmatprep.subr.mxu0 %v1536
  %1786 = vmatpush1.msra.mxu0 %v1535
  %1787 = vmatprep.subr.mxu0 %v1529
  %1788 = vmatpush1.msra.mxu0 %v1528
  %1789 = vmatprep.subr.mxu0 %v1522
  %1790 = vmatpush1.msra.mxu0 %v1521
  %1791 = vmatprep.subr.mxu0 %v1515
  %1792 = vmatpush1.msra.mxu0 %v1514
  %1793 = vmatprep.subr.mxu0 %v1508
  %1794 = vmatpush1.msra.mxu0 %v1507
  %1795 = vmatprep.subr.mxu0 %v1501
  %1796 = vmatpush1.msra.mxu0 %v1500
  %1797 = vmatprep.subr.mxu0 %v1494
  %1798 = vmatpush1.msra.mxu0 %v1493
  %1799 = vmatprep.subr.mxu0 %v1487
  %1800 = vmatpush1.msra.mxu0 %v1486
  %1801 = vmatprep.subr.mxu0 %v1480
  %1802 = vmatpush1.msra.mxu0 %v1479
  %1803 = vmatprep.subr.mxu0 %v1473
  %1804 = vmatpush1.msra.mxu0 %v1472
  %1805 = vmatprep.subr.mxu0 %v1466
  %1806 = vmatpush1.msra.mxu0 %v1465
  %1807 = vmatprep.subr.mxu0 %v1459
  %1808 = vmatpush1.msra.mxu0 %v1458
  %1809 = vmatprep.subr.mxu0 0.0
  %1810 = vmatpush2.msra.mxu0 0.0
  %1811 = vmatprep.subr.mxu0 0.0
  %1812 = vmatpush2.msra.mxu0 0.0
  %1813 = vmatprep.subr.mxu0 0.0
  %1814 = vmatpush2.msra.mxu0 0.0
  %1815 = vmatprep.subr.mxu0 0.0
  %1816 = vmatpush2.msra.mxu0 0.0
  %1817 = vmatprep.subr.mxu0 0.0
  %1818 = vmatpush2.msra.mxu0 0.0
  %1819 = vmatprep.subr.mxu0 0.0
  %1820 = vmatpush2.msra.mxu0 0.0
  %1821 = vmatprep.subr.mxu0 0.0
  %1822 = vmatpush2.msra.mxu0 0.0
  %1823 = vmatprep.subr.mxu0 0.0
  %1824 = vmatpush2.msra.mxu0 0.0
  %1825 = vmatprep.subr.mxu0 0.0
  %1826 = vmatpush2.msra.mxu0 0.0
  %1827 = vmatprep.subr.mxu0 0.0
  %1828 = vmatpush2.msra.mxu0 0.0
  %1829 = vmatprep.subr.mxu0 0.0
  %1830 = vmatpush2.msra.mxu0 0.0
  %1831 = vmatprep.subr.mxu0 %v1599
  %1832 = vmatpush2.msra.mxu0 %v1598
  %1833 = vmatprep.subr.mxu0 %v1592
  %1834 = vmatpush2.msra.mxu0 %v1591
  %1835 = vmatprep.subr.mxu0 %v1585
  %1836 = vmatpush2.msra.mxu0 %v1584
  %1837 = vmatprep.subr.mxu0 %v1578
  %1838 = vmatpush2.msra.mxu0 %v1577
  %1839 = vmatprep.subr.mxu0 %v1571
  %1840 = vmatpush2.msra.mxu0 %v1570
  %1841 = vmatprep.mubr.f32.mxu0 %v1605
  %1842 = vmatmul.mubr.f32.gmra.mxu0 %v1432
  %v1843 = vpop.f32.mrf.mxu0
  %v1844 = vadd.f32 0.0, %v1843
  %v1845 = vpop.f32.mrf.mxu0
  %v1846 = vadd.f32 0.0, %v1845
  %1847 = vmatprep.mubr.f32.mxu0 %v1608
  %1848 = vmatmul.mubr.f32.gmra.mxu0 %v1434
  %v1849 = vpop.f32.mrf.mxu0
  %v1850 = vadd.f32 0.0, %v1849
  %v1851 = vpop.f32.mrf.mxu0
  %v1852 = vadd.f32 0.0, %v1851
  %1853 = vmatprep.mubr.f32.mxu0 %v1611
  %1854 = vmatmul.mubr.f32.gmra.mxu0 %v1436
  %v1855 = vpop.f32.mrf.mxu0
  %v1856 = vadd.f32 0.0, %v1855
  %v1857 = vpop.f32.mrf.mxu0
  %v1858 = vadd.f32 0.0, %v1857
  %1859 = vmatprep.mubr.f32.mxu0 %v1614
  %1860 = vmatmul.mubr.f32.gmra.mxu0 %v1438
  %v1861 = vpop.f32.mrf.mxu0
  %v1862 = vadd.f32 0.0, %v1861
  %v1863 = vpop.f32.mrf.mxu0
  %v1864 = vadd.f32 0.0, %v1863
  %1865 = vmatprep.mubr.f32.mxu0 %v1617
  %1866 = vmatmul.mubr.f32.gmra.mxu0 %v1440
  %v1867 = vpop.f32.mrf.mxu0
  %v1868 = vadd.f32 0.0, %v1867
  %v1869 = vpop.f32.mrf.mxu0
  %v1870 = vadd.f32 0.0, %v1869
  %1871 = vmatprep.mubr.f32.mxu0 %v1620
  %1872 = vmatmul.mubr.f32.gmra.mxu0 %v1442
  %v1873 = vpop.f32.mrf.mxu0
  %v1874 = vadd.f32 0.0, %v1873
  %v1875 = vpop.f32.mrf.mxu0
  %v1876 = vadd.f32 0.0, %v1875
  %1877 = vmatprep.mubr.f32.mxu0 %v1623
  %1878 = vmatmul.mubr.f32.gmra.mxu0 %v1444
  %v1879 = vpop.f32.mrf.mxu0
  %v1880 = vadd.f32 0.0, %v1879
  %v1881 = vpop.f32.mrf.mxu0
  %v1882 = vadd.f32 0.0, %v1881
  %1883 = vmatprep.mubr.f32.mxu0 %v1626
  %1884 = vmatmul.mubr.f32.gmra.mxu0 %v1446
  %v1885 = vpop.f32.mrf.mxu0
  %v1886 = vadd.f32 0.0, %v1885
  %v1887 = vpop.f32.mrf.mxu0
  %v1888 = vadd.f32 0.0, %v1887
  %1889 = vmatprep.mubr.f32.mxu0 %v1629
  %1890 = vmatmul.mubr.f32.gmra.mxu0 %v1448
  %v1891 = vpop.f32.mrf.mxu0
  %v1892 = vadd.f32 0.0, %v1891
  %v1893 = vpop.f32.mrf.mxu0
  %v1894 = vadd.f32 0.0, %v1893
  %1895 = vmatprep.mubr.f32.mxu0 %v1632
  %1896 = vmatmul.mubr.f32.gmra.mxu0 %v1450
  %v1897 = vpop.f32.mrf.mxu0
  %v1898 = vadd.f32 0.0, %v1897
  %v1899 = vpop.f32.mrf.mxu0
  %v1900 = vadd.f32 0.0, %v1899
  %1901 = vmatprep.mubr.f32.mxu0 %v1635
  %1902 = vmatmul.mubr.f32.gmra.mxu0 %v1452
  %v1903 = vpop.f32.mrf.mxu0
  %v1904 = vadd.f32 0.0, %v1903
  %v1905 = vpop.f32.mrf.mxu0
  %v1906 = vadd.f32 0.0, %v1905
  %1907 = vmatprep.mubr.f32.mxu0 %v1638
  %1908 = vmatmul.mubr.f32.gmra.mxu0 %v1454
  %v1909 = vpop.f32.mrf.mxu0
  %v1910 = vadd.f32 0.0, %v1909
  %v1911 = vpop.f32.mrf.mxu0
  %v1912 = vadd.f32 0.0, %v1911
  %1913 = vdwg.mxu0
  %1914 = vmatprep.subr.mxu0 %v1566
  %1915 = vmatpush1.msra.mxu0 %v1565
  %1916 = vmatprep.subr.mxu0 %v1559
  %1917 = vmatpush1.msra.mxu0 %v1558
  %1918 = vmatprep.subr.mxu0 %v1552
  %1919 = vmatpush1.msra.mxu0 %v1551
  %1920 = vmatprep.subr.mxu0 %v1545
  %1921 = vmatpush1.msra.mxu0 %v1544
  %1922 = vmatprep.subr.mxu0 %v1538
  %1923 = vmatpush1.msra.mxu0 %v1537
  %1924 = vmatprep.subr.mxu0 %v1531
  %1925 = vmatpush1.msra.mxu0 %v1530
  %1926 = vmatprep.subr.mxu0 %v1524
  %1927 = vmatpush1.msra.mxu0 %v1523
  %1928 = vmatprep.subr.mxu0 %v1517
  %1929 = vmatpush1.msra.mxu0 %v1516
  %1930 = vmatprep.subr.mxu0 %v1510
  %1931 = vmatpush1.msra.mxu0 %v1509
  %1932 = vmatprep.subr.mxu0 %v1503
  %1933 = vmatpush1.msra.mxu0 %v1502
  %1934 = vmatprep.subr.mxu0 %v1496
  %1935 = vmatpush1.msra.mxu0 %v1495
  %1936 = vmatprep.subr.mxu0 %v1489
  %1937 = vmatpush1.msra.mxu0 %v1488
  %1938 = vmatprep.subr.mxu0 %v1482
  %1939 = vmatpush1.msra.mxu0 %v1481
  %1940 = vmatprep.subr.mxu0 %v1475
  %1941 = vmatpush1.msra.mxu0 %v1474
  %1942 = vmatprep.subr.mxu0 %v1468
  %1943 = vmatpush1.msra.mxu0 %v1467
  %1944 = vmatprep.subr.mxu0 %v1461
  %1945 = vmatpush1.msra.mxu0 %v1460
  %1946 = vmatprep.subr.mxu0 0.0
  %1947 = vmatpush2.msra.mxu0 0.0
  %1948 = vmatprep.subr.mxu0 0.0
  %1949 = vmatpush2.msra.mxu0 0.0
  %1950 = vmatprep.subr.mxu0 0.0
  %1951 = vmatpush2.msra.mxu0 0.0
  %1952 = vmatprep.subr.mxu0 0.0
  %1953 = vmatpush2.msra.mxu0 0.0
  %1954 = vmatprep.subr.mxu0 0.0
  %1955 = vmatpush2.msra.mxu0 0.0
  %1956 = vmatprep.subr.mxu0 0.0
  %1957 = vmatpush2.msra.mxu0 0.0
  %1958 = vmatprep.subr.mxu0 0.0
  %1959 = vmatpush2.msra.mxu0 0.0
  %1960 = vmatprep.subr.mxu0 0.0
  %1961 = vmatpush2.msra.mxu0 0.0
  %1962 = vmatprep.subr.mxu0 0.0
  %1963 = vmatpush2.msra.mxu0 0.0
  %1964 = vmatprep.subr.mxu0 0.0
  %1965 = vmatpush2.msra.mxu0 0.0
  %1966 = vmatprep.subr.mxu0 0.0
  %1967 = vmatpush2.msra.mxu0 0.0
  %1968 = vmatprep.subr.mxu0 %v1601
  %1969 = vmatpush2.msra.mxu0 %v1600
  %1970 = vmatprep.subr.mxu0 %v1594
  %1971 = vmatpush2.msra.mxu0 %v1593
  %1972 = vmatprep.subr.mxu0 %v1587
  %1973 = vmatpush2.msra.mxu0 %v1586
  %1974 = vmatprep.subr.mxu0 %v1580
  %1975 = vmatpush2.msra.mxu0 %v1579
  %1976 = vmatprep.subr.mxu0 %v1573
  %1977 = vmatpush2.msra.mxu0 %v1572
  %1978 = vmatprep.mubr.f32.mxu0 %v1605
  %1979 = vmatmul.mubr.f32.gmra.mxu0 %v1432
  %v1980 = vpop.f32.mrf.mxu0
  %v1981 = vadd.f32 0.0, %v1980
  %v1982 = vpop.f32.mrf.mxu0
  %v1983 = vadd.f32 0.0, %v1982
  %1984 = vmatprep.mubr.f32.mxu0 %v1608
  %1985 = vmatmul.mubr.f32.gmra.mxu0 %v1434
  %v1986 = vpop.f32.mrf.mxu0
  %v1987 = vadd.f32 0.0, %v1986
  %v1988 = vpop.f32.mrf.mxu0
  %v1989 = vadd.f32 0.0, %v1988
  %1990 = vmatprep.mubr.f32.mxu0 %v1611
  %1991 = vmatmul.mubr.f32.gmra.mxu0 %v1436
  %v1992 = vpop.f32.mrf.mxu0
  %v1993 = vadd.f32 0.0, %v1992
  %v1994 = vpop.f32.mrf.mxu0
  %v1995 = vadd.f32 0.0, %v1994
  %1996 = vmatprep.mubr.f32.mxu0 %v1614
  %1997 = vmatmul.mubr.f32.gmra.mxu0 %v1438
  %v1998 = vpop.f32.mrf.mxu0
  %v1999 = vadd.f32 0.0, %v1998
  %v2000 = vpop.f32.mrf.mxu0
  %v2001 = vadd.f32 0.0, %v2000
  %2002 = vmatprep.mubr.f32.mxu0 %v1617
  %2003 = vmatmul.mubr.f32.gmra.mxu0 %v1440
  %v2004 = vpop.f32.mrf.mxu0
  %v2005 = vadd.f32 0.0, %v2004
  %v2006 = vpop.f32.mrf.mxu0
  %v2007 = vadd.f32 0.0, %v2006
  %2008 = vmatprep.mubr.f32.mxu0 %v1620
  %2009 = vmatmul.mubr.f32.gmra.mxu0 %v1442
  %v2010 = vpop.f32.mrf.mxu0
  %v2011 = vadd.f32 0.0, %v2010
  %v2012 = vpop.f32.mrf.mxu0
  %v2013 = vadd.f32 0.0, %v2012
  %2014 = vmatprep.mubr.f32.mxu0 %v1623
  %2015 = vmatmul.mubr.f32.gmra.mxu0 %v1444
  %v2016 = vpop.f32.mrf.mxu0
  %v2017 = vadd.f32 0.0, %v2016
  %v2018 = vpop.f32.mrf.mxu0
  %v2019 = vadd.f32 0.0, %v2018
  %2020 = vmatprep.mubr.f32.mxu0 %v1626
  %2021 = vmatmul.mubr.f32.gmra.mxu0 %v1446
  %v2022 = vpop.f32.mrf.mxu0
  %v2023 = vadd.f32 0.0, %v2022
  %v2024 = vpop.f32.mrf.mxu0
  %v2025 = vadd.f32 0.0, %v2024
  %2026 = vmatprep.mubr.f32.mxu0 %v1629
  %2027 = vmatmul.mubr.f32.gmra.mxu0 %v1448
  %v2028 = vpop.f32.mrf.mxu0
  %v2029 = vadd.f32 0.0, %v2028
  %v2030 = vpop.f32.mrf.mxu0
  %v2031 = vadd.f32 0.0, %v2030
  %2032 = vmatprep.mubr.f32.mxu0 %v1632
  %2033 = vmatmul.mubr.f32.gmra.mxu0 %v1450
  %v2034 = vpop.f32.mrf.mxu0
  %v2035 = vadd.f32 0.0, %v2034
  %v2036 = vpop.f32.mrf.mxu0
  %v2037 = vadd.f32 0.0, %v2036
  %2038 = vmatprep.mubr.f32.mxu0 %v1635
  %2039 = vmatmul.mubr.f32.gmra.mxu0 %v1452
  %v2040 = vpop.f32.mrf.mxu0
  %v2041 = vadd.f32 0.0, %v2040
  %v2042 = vpop.f32.mrf.mxu0
  %v2043 = vadd.f32 0.0, %v2042
  %2044 = vmatprep.mubr.f32.mxu0 %v1638
  %2045 = vmatmul.mubr.f32.gmra.mxu0 %v1454
  %v2046 = vpop.f32.mrf.mxu0
  %v2047 = vadd.f32 0.0, %v2046
  %v2048 = vpop.f32.mrf.mxu0
  %v2049 = vadd.f32 0.0, %v2048
  %2050 = vdwg.mxu0
  %2051 = vmatprep.subr.mxu0 0.0
  %2052 = vmatpush1.msra.mxu0 %v1567
  %2053 = vmatprep.subr.mxu0 0.0
  %2054 = vmatpush1.msra.mxu0 %v1560
  %2055 = vmatprep.subr.mxu0 0.0
  %2056 = vmatpush1.msra.mxu0 %v1553
  %2057 = vmatprep.subr.mxu0 0.0
  %2058 = vmatpush1.msra.mxu0 %v1546
  %2059 = vmatprep.subr.mxu0 0.0
  %2060 = vmatpush1.msra.mxu0 %v1539
  %2061 = vmatprep.subr.mxu0 0.0
  %2062 = vmatpush1.msra.mxu0 %v1532
  %2063 = vmatprep.subr.mxu0 0.0
  %2064 = vmatpush1.msra.mxu0 %v1525
  %2065 = vmatprep.subr.mxu0 0.0
  %2066 = vmatpush1.msra.mxu0 %v1518
  %2067 = vmatprep.subr.mxu0 0.0
  %2068 = vmatpush1.msra.mxu0 %v1511
  %2069 = vmatprep.subr.mxu0 0.0
  %2070 = vmatpush1.msra.mxu0 %v1504
  %2071 = vmatprep.subr.mxu0 0.0
  %2072 = vmatpush1.msra.mxu0 %v1497
  %2073 = vmatprep.subr.mxu0 0.0
  %2074 = vmatpush1.msra.mxu0 %v1490
  %2075 = vmatprep.subr.mxu0 0.0
  %2076 = vmatpush1.msra.mxu0 %v1483
  %2077 = vmatprep.subr.mxu0 0.0
  %2078 = vmatpush1.msra.mxu0 %v1476
  %2079 = vmatprep.subr.mxu0 0.0
  %2080 = vmatpush1.msra.mxu0 %v1469
  %2081 = vmatprep.subr.mxu0 0.0
  %2082 = vmatpush1.msra.mxu0 %v1462
  %2083 = vmatprep.subr.mxu0 0.0
  %2084 = vmatpush2.msra.mxu0 0.0
  %2085 = vmatprep.subr.mxu0 0.0
  %2086 = vmatpush2.msra.mxu0 0.0
  %2087 = vmatprep.subr.mxu0 0.0
  %2088 = vmatpush2.msra.mxu0 0.0
  %2089 = vmatprep.subr.mxu0 0.0
  %2090 = vmatpush2.msra.mxu0 0.0
  %2091 = vmatprep.subr.mxu0 0.0
  %2092 = vmatpush2.msra.mxu0 0.0
  %2093 = vmatprep.subr.mxu0 0.0
  %2094 = vmatpush2.msra.mxu0 0.0
  %2095 = vmatprep.subr.mxu0 0.0
  %2096 = vmatpush2.msra.mxu0 0.0
  %2097 = vmatprep.subr.mxu0 0.0
  %2098 = vmatpush2.msra.mxu0 0.0
  %2099 = vmatprep.subr.mxu0 0.0
  %2100 = vmatpush2.msra.mxu0 0.0
  %2101 = vmatprep.subr.mxu0 0.0
  %2102 = vmatpush2.msra.mxu0 0.0
  %2103 = vmatprep.subr.mxu0 0.0
  %2104 = vmatpush2.msra.mxu0 0.0
  %2105 = vmatprep.subr.mxu0 0.0
  %2106 = vmatpush2.msra.mxu0 %v1602
  %2107 = vmatprep.subr.mxu0 0.0
  %2108 = vmatpush2.msra.mxu0 %v1595
  %2109 = vmatprep.subr.mxu0 0.0
  %2110 = vmatpush2.msra.mxu0 %v1588
  %2111 = vmatprep.subr.mxu0 0.0
  %2112 = vmatpush2.msra.mxu0 %v1581
  %2113 = vmatprep.subr.mxu0 0.0
  %2114 = vmatpush2.msra.mxu0 %v1574
  %2115 = vmatprep.mubr.f32.mxu0 %v1605
  %2116 = vmatmul.mubr.f32.gmra.mxu0 %v1432
  %v2117 = vpop.f32.mrf.mxu0
  %v2118 = vadd.f32 0.0, %v2117
  %v2119 = vpop.f32.mrf.mxu0
  %2120 = vmatprep.mubr.f32.mxu0 %v1608
  %2121 = vmatmul.mubr.f32.gmra.mxu0 %v1434
  %v2122 = vpop.f32.mrf.mxu0
  %v2123 = vadd.f32 0.0, %v2122
  %v2124 = vpop.f32.mrf.mxu0
  %2125 = vmatprep.mubr.f32.mxu0 %v1611
  %2126 = vmatmul.mubr.f32.gmra.mxu0 %v1436
  %v2127 = vpop.f32.mrf.mxu0
  %v2128 = vadd.f32 0.0, %v2127
  %v2129 = vpop.f32.mrf.mxu0
  %2130 = vmatprep.mubr.f32.mxu0 %v1614
  %2131 = vmatmul.mubr.f32.gmra.mxu0 %v1438
  %v2132 = vpop.f32.mrf.mxu0
  %v2133 = vadd.f32 0.0, %v2132
  %v2134 = vpop.f32.mrf.mxu0
  %2135 = vmatprep.mubr.f32.mxu0 %v1617
  %2136 = vmatmul.mubr.f32.gmra.mxu0 %v1440
  %v2137 = vpop.f32.mrf.mxu0
  %v2138 = vadd.f32 0.0, %v2137
  %v2139 = vpop.f32.mrf.mxu0
  %2140 = vmatprep.mubr.f32.mxu0 %v1620
  %2141 = vmatmul.mubr.f32.gmra.mxu0 %v1442
  %v2142 = vpop.f32.mrf.mxu0
  %v2143 = vadd.f32 0.0, %v2142
  %v2144 = vpop.f32.mrf.mxu0
  %2145 = vmatprep.mubr.f32.mxu0 %v1623
  %2146 = vmatmul.mubr.f32.gmra.mxu0 %v1444
  %v2147 = vpop.f32.mrf.mxu0
  %v2148 = vadd.f32 0.0, %v2147
  %v2149 = vpop.f32.mrf.mxu0
  %2150 = vmatprep.mubr.f32.mxu0 %v1626
  %2151 = vmatmul.mubr.f32.gmra.mxu0 %v1446
  %v2152 = vpop.f32.mrf.mxu0
  %v2153 = vadd.f32 0.0, %v2152
  %v2154 = vpop.f32.mrf.mxu0
  %2155 = vmatprep.mubr.f32.mxu0 %v1629
  %2156 = vmatmul.mubr.f32.gmra.mxu0 %v1448
  %v2157 = vpop.f32.mrf.mxu0
  %v2158 = vadd.f32 0.0, %v2157
  %v2159 = vpop.f32.mrf.mxu0
  %2160 = vmatprep.mubr.f32.mxu0 %v1632
  %2161 = vmatmul.mubr.f32.gmra.mxu0 %v1450
  %v2162 = vpop.f32.mrf.mxu0
  %v2163 = vadd.f32 0.0, %v2162
  %v2164 = vpop.f32.mrf.mxu0
  %2165 = vmatprep.mubr.f32.mxu0 %v1635
  %2166 = vmatmul.mubr.f32.gmra.mxu0 %v1452
  %v2167 = vpop.f32.mrf.mxu0
  %v2168 = vadd.f32 0.0, %v2167
  %v2169 = vpop.f32.mrf.mxu0
  %2170 = vmatprep.mubr.f32.mxu0 %v1638
  %2171 = vmatmul.mubr.f32.gmra.mxu0 %v1454
  %v2172 = vpop.f32.mrf.mxu0
  %v2173 = vadd.f32 0.0, %v2172
  %v2174 = vpop.f32.mrf.mxu0
  %2175 = vdwg.mxu0
  %2176 = vst [vmem:[%s2] sm:$0xff] %v1707
  %2177 = vst [vmem:[%s2 + $0x8] sm:$0xff] %v1709
  %2178 = vst [vmem:[%s2 + $0x10] sm:$0xff] %v1844
  %2179 = vst [vmem:[%s2 + $0x18] sm:$0xff] %v1846
  %2180 = vst [vmem:[%s2 + $0x20] sm:$0xff] %v1981
  %2181 = vst [vmem:[%s2 + $0x28] sm:$0xff] %v1983
  %2182 = vst.msk [vmem:[%s2 + $0x30] sm:$0xff] %vm179, %v2118
  %2183 = vst [vmem:[%s2 + $0x38] sm:$0xff] %v1713
  %2184 = vst [vmem:[%s2 + $0x40] sm:$0xff] %v1715
  %2185 = vst [vmem:[%s2 + $0x48] sm:$0xff] %v1850
  %2186 = vst [vmem:[%s2 + $0x50] sm:$0xff] %v1852
  %2187 = vst [vmem:[%s2 + $0x58] sm:$0xff] %v1987
  %2188 = vst [vmem:[%s2 + $0x60] sm:$0xff] %v1989
  %2189 = vst.msk [vmem:[%s2 + $0x68] sm:$0xff] %vm179, %v2123
  %2190 = vst [vmem:[%s2 + $0x70] sm:$0xff] %v1719
  %2191 = vst [vmem:[%s2 + $0x78] sm:$0xff] %v1721
  %2192 = vst [vmem:[%s2 + $0x80] sm:$0xff] %v1856
  %2193 = vst [vmem:[%s2 + $0x88] sm:$0xff] %v1858
  %2194 = vst [vmem:[%s2 + $0x90] sm:$0xff] %v1993
  %2195 = vst [vmem:[%s2 + $0x98] sm:$0xff] %v1995
  %2196 = vst.msk [vmem:[%s2 + $0xa0] sm:$0xff] %vm179, %v2128
  %2197 = vst [vmem:[%s2 + $0xa8] sm:$0xff] %v1725
  %2198 = vst [vmem:[%s2 + $0xb0] sm:$0xff] %v1727
  %2199 = vst [vmem:[%s2 + $0xb8] sm:$0xff] %v1862
  %2200 = vst [vmem:[%s2 + $0xc0] sm:$0xff] %v1864
  %2201 = vst [vmem:[%s2 + $0xc8] sm:$0xff] %v1999
  %2202 = vst [vmem:[%s2 + $0xd0] sm:$0xff] %v2001
  %2203 = vst.msk [vmem:[%s2 + $0xd8] sm:$0xff] %vm179, %v2133
  %2204 = vst [vmem:[%s2 + $0xe0] sm:$0xff] %v1731
  %2205 = vst [vmem:[%s2 + $0xe8] sm:$0xff] %v1733
  %2206 = vst [vmem:[%s2 + $0xf0] sm:$0xff] %v1868
  %2207 = vst [vmem:[%s2 + $0xf8] sm:$0xff] %v1870
  %2208 = vst [vmem:[%s2 + $0x100] sm:$0xff] %v2005
  %2209 = vst [vmem:[%s2 + $0x108] sm:$0xff] %v2007
  %2210 = vst.msk [vmem:[%s2 + $0x110] sm:$0xff] %vm179, %v2138
  %2211 = vst [vmem:[%s2 + $0x118] sm:$0xff] %v1737
  %2212 = vst [vmem:[%s2 + $0x120] sm:$0xff] %v1739
  %2213 = vst [vmem:[%s2 + $0x128] sm:$0xff] %v1874
  %2214 = vst [vmem:[%s2 + $0x130] sm:$0xff] %v1876
  %2215 = vst [vmem:[%s2 + $0x138] sm:$0xff] %v2011
  %2216 = vst [vmem:[%s2 + $0x140] sm:$0xff] %v2013
  %2217 = vst.msk [vmem:[%s2 + $0x148] sm:$0xff] %vm179, %v2143
  %2218 = vst [vmem:[%s2 + $0x150] sm:$0xff] %v1743
  %2219 = vst [vmem:[%s2 + $0x158] sm:$0xff] %v1745
  %2220 = vst [vmem:[%s2 + $0x160] sm:$0xff] %v1880
  %2221 = vst [vmem:[%s2 + $0x168] sm:$0xff] %v1882
  %2222 = vst [vmem:[%s2 + $0x170] sm:$0xff] %v2017
  %2223 = vst [vmem:[%s2 + $0x178] sm:$0xff] %v2019
  %2224 = vst.msk [vmem:[%s2 + $0x180] sm:$0xff] %vm179, %v2148
  %2225 = vst [vmem:[%s2 + $0x188] sm:$0xff] %v1749
  %2226 = vst [vmem:[%s2 + $0x190] sm:$0xff] %v1751
  %2227 = vst [vmem:[%s2 + $0x198] sm:$0xff] %v1886
  %2228 = vst [vmem:[%s2 + $0x1a0] sm:$0xff] %v1888
  %2229 = vst [vmem:[%s2 + $0x1a8] sm:$0xff] %v2023
  %2230 = vst [vmem:[%s2 + $0x1b0] sm:$0xff] %v2025
  %2231 = vst.msk [vmem:[%s2 + $0x1b8] sm:$0xff] %vm179, %v2153
  %2232 = vst [vmem:[%s2 + $0x1c0] sm:$0xff] %v1755
  %2233 = vst [vmem:[%s2 + $0x1c8] sm:$0xff] %v1757
  %2234 = vst [vmem:[%s2 + $0x1d0] sm:$0xff] %v1892
  %2235 = vst [vmem:[%s2 + $0x1d8] sm:$0xff] %v1894
  %2236 = vst [vmem:[%s2 + $0x1e0] sm:$0xff] %v2029
  %2237 = vst [vmem:[%s2 + $0x1e8] sm:$0xff] %v2031
  %2238 = vst.msk [vmem:[%s2 + $0x1f0] sm:$0xff] %vm179, %v2158
  %2239 = vst [vmem:[%s2 + $0x1f8] sm:$0xff] %v1761
  %2240 = vst [vmem:[%s2 + $0x200] sm:$0xff] %v1763
  %2241 = vst [vmem:[%s2 + $0x208] sm:$0xff] %v1898
  %2242 = vst [vmem:[%s2 + $0x210] sm:$0xff] %v1900
  %2243 = vst [vmem:[%s2 + $0x218] sm:$0xff] %v2035
  %2244 = vst [vmem:[%s2 + $0x220] sm:$0xff] %v2037
  %2245 = vst.msk [vmem:[%s2 + $0x228] sm:$0xff] %vm179, %v2163
  %2246 = vst [vmem:[%s2 + $0x230] sm:$0xff] %v1767
  %2247 = vst [vmem:[%s2 + $0x238] sm:$0xff] %v1769
  %2248 = vst [vmem:[%s2 + $0x240] sm:$0xff] %v1904
  %2249 = vst [vmem:[%s2 + $0x248] sm:$0xff] %v1906
  %2250 = vst [vmem:[%s2 + $0x250] sm:$0xff] %v2041
  %2251 = vst [vmem:[%s2 + $0x258] sm:$0xff] %v2043
  %2252 = vst.msk [vmem:[%s2 + $0x260] sm:$0xff] %vm179, %v2168
  %2253 = vst [vmem:[%s2 + $0x268] sm:$0xff] %v1773
  %2254 = vst [vmem:[%s2 + $0x270] sm:$0xff] %v1775
  %2255 = vst [vmem:[%s2 + $0x278] sm:$0xff] %v1910
  %2256 = vst [vmem:[%s2 + $0x280] sm:$0xff] %v1912
  %2257 = vst [vmem:[%s2 + $0x288] sm:$0xff] %v2047
  %2258 = vst [vmem:[%s2 + $0x290] sm:$0xff] %v2049
  %2259 = vst.msk [vmem:[%s2 + $0x298] sm:$0xff] %vm179, %v2173
  %s2260 = scalar_lea.vmem %s0, 168
  %v2261 = vld [vmem:[%s2260] sm:$0xff]
  %v2262 = vld [vmem:[%s2260 + $0x8] sm:$0xff]
  %v2263 = vld [vmem:[%s2260 + $0x10] sm:$0xff]
  %v2264 = vld [vmem:[%s2260 + $0x18] sm:$0xff]
  %v2265 = vld [vmem:[%s2260 + $0x20] sm:$0xff]
  %v2266 = vld [vmem:[%s2260 + $0x28] sm:$0xff]
  %v2267 = vld [vmem:[%s2260 + $0x30] sm:$0xff]
  %v2268 = vld [vmem:[%s2260 + $0x38] sm:$0xff]
  %v2269 = vld [vmem:[%s2260 + $0x40] sm:$0xff]
  %v2270 = vld [vmem:[%s2260 + $0x48] sm:$0xff]
  %v2271 = vld [vmem:[%s2260 + $0x50] sm:$0xff]
  %v2272 = vld [vmem:[%s2260 + $0x58] sm:$0xff]
  %v2273 = vld [vmem:[%s2260 + $0x60] sm:$0xff]
  %v2274 = vld [vmem:[%s2260 + $0x68] sm:$0xff]
  %v2275 = vld [vmem:[%s2260 + $0x70] sm:$0xff]
  %v2276 = vld [vmem:[%s2260 + $0x78] sm:$0xff]
  %v2277 = vld [vmem:[%s2260 + $0x80] sm:$0xff]
  %v2278 = vld [vmem:[%s2260 + $0x88] sm:$0xff]
  %v2279 = vld [vmem:[%s2260 + $0x90] sm:$0xff]
  %v2280 = vld [vmem:[%s2260 + $0x98] sm:$0xff]
  %v2281 = vld [vmem:[%s2260 + $0xa0] sm:$0xff]
  %2282 = vst [vmem:[#allocation2 + $0x8] sm:$0xff] %v2261
  %2283 = vst [vmem:[#allocation2 + $0x10] sm:$0xff] %v2262
  %2284 = vst [vmem:[#allocation2 + $0x18] sm:$0xff] %v2263
  %2285 = vst [vmem:[#allocation2 + $0x20] sm:$0xff] %v2264
  %2286 = vst [vmem:[#allocation2 + $0x28] sm:$0xff] %v2265
  %2287 = vst [vmem:[#allocation2 + $0x30] sm:$0xff] %v2266
  %2288 = vst.msk [vmem:[#allocation2 + $0x38] sm:$0xff] %vm179, %v2267
  %2289 = vst [vmem:[#allocation2 + $0x48] sm:$0xff] %v2268
  %2290 = vst [vmem:[#allocation2 + $0x50] sm:$0xff] %v2269
  %2291 = vst [vmem:[#allocation2 + $0x58] sm:$0xff] %v2270
  %2292 = vst [vmem:[#allocation2 + $0x60] sm:$0xff] %v2271
  %2293 = vst [vmem:[#allocation2 + $0x68] sm:$0xff] %v2272
  %2294 = vst [vmem:[#allocation2 + $0x70] sm:$0xff] %v2273
  %2295 = vst.msk [vmem:[#allocation2 + $0x78] sm:$0xff] %vm179, %v2274
  %2296 = vst [vmem:[#allocation2 + $0x88] sm:$0xff] %v2275
  %2297 = vst [vmem:[#allocation2 + $0x90] sm:$0xff] %v2276
  %2298 = vst [vmem:[#allocation2 + $0x98] sm:$0xff] %v2277
  %2299 = vst [vmem:[#allocation2 + $0xa0] sm:$0xff] %v2278
  %2300 = vst [vmem:[#allocation2 + $0xa8] sm:$0xff] %v2279
  %2301 = vst [vmem:[#allocation2 + $0xb0] sm:$0xff] %v2280
  %2302 = vst.msk [vmem:[#allocation2 + $0xb8] sm:$0xff] %vm179, %v2281
  %v2303 = vld [vmem:[%s2260 + $0x28] sm:$0xff]
  %v2304 = vld [vmem:[%s2260 + $0x30] sm:$0xff]
  %v2305 = vld [vmem:[%s2260 + $0x60] sm:$0xff]
  %v2306 = vld [vmem:[%s2260 + $0x68] sm:$0xff]
  %v2307 = vld [vmem:[%s2260 + $0x98] sm:$0xff]
  %v2308 = vld [vmem:[%s2260 + $0xa0] sm:$0xff]
  %2315 = vrot.lane.b32.xlu0 %v2303, 112
  %v2316 = vpop.permute.xlu0 %2315
  %2317 = vrot.lane.b32.xlu0 %v2304, 112
  %v2318 = vpop.permute.xlu0 %2317
  %2319 = vrot.lane.b32.xlu0 %v2305, 112
  %v2320 = vpop.permute.xlu0 %2319
  %2321 = vrot.lane.b32.xlu0 %v2306, 112
  %v2322 = vpop.permute.xlu0 %2321
  %2323 = vrot.lane.b32.xlu0 %v2307, 112
  %v2324 = vpop.permute.xlu0 %2323
  %2325 = vrot.lane.b32.xlu0 %v2308, 112
  %v2326 = vpop.permute.xlu0 %2325
  %v2327 = vsel %vm219, %v2316, %v2318
  %v2328 = vsel %vm219, %v2320, %v2322
  %v2329 = vsel %vm219, %v2324, %v2326
  %2333 = vst.msk [vmem:[#allocation2] sm:$0xff] %vm226, %v2327
  %2334 = vst.msk [vmem:[#allocation2 + $0x40] sm:$0xff] %vm226, %v2328
  %2335 = vst.msk [vmem:[#allocation2 + $0x80] sm:$0xff] %vm226, %v2329
  %v2336 = vld [vmem:[%s2260] sm:$0xff]
  %v2337 = vld [vmem:[%s2260 + $0x38] sm:$0xff]
  %v2338 = vld [vmem:[%s2260 + $0x70] sm:$0xff]
  %2342 = vrot.lane.b32.xlu0 %v2336, 16
  %v2343 = vpop.permute.xlu0 %2342
  %2344 = vrot.lane.b32.xlu0 %v2337, 16
  %v2345 = vpop.permute.xlu0 %2344
  %2346 = vrot.lane.b32.xlu0 %v2338, 16
  %v2347 = vpop.permute.xlu0 %2346
  %2351 = vst.msk [vmem:[#allocation2 + $0x38] sm:$0xff] %vm245, %v2343
  %2352 = vst.msk [vmem:[#allocation2 + $0x78] sm:$0xff] %vm245, %v2345
  %2353 = vst.msk [vmem:[#allocation2 + $0xb8] sm:$0xff] %vm245, %v2347
  %v2354 = vld [vmem:[#allocation2] sm:$0xff]
  %v2355 = vld [vmem:[#allocation2 + $0x8] sm:$0xff]
  %v2356 = vld [vmem:[#allocation2 + $0x10] sm:$0xff]
  %v2357 = vld [vmem:[#allocation2 + $0x18] sm:$0xff]
  %v2358 = vld [vmem:[#allocation2 + $0x20] sm:$0xff]
  %v2359 = vld [vmem:[#allocation2 + $0x28] sm:$0xff]
  %v2360 = vld [vmem:[#allocation2 + $0x30] sm:$0xff]
  %v2361 = vld [vmem:[#allocation2 + $0x40] sm:$0xff]
  %v2362 = vld [vmem:[#allocation2 + $0x48] sm:$0xff]
  %v2363 = vld [vmem:[#allocation2 + $0x50] sm:$0xff]
  %v2364 = vld [vmem:[#allocation2 + $0x58] sm:$0xff]
  %v2365 = vld [vmem:[#allocation2 + $0x60] sm:$0xff]
  %v2366 = vld [vmem:[#allocation2 + $0x68] sm:$0xff]
  %v2367 = vld [vmem:[#allocation2 + $0x70] sm:$0xff]
  %v2368 = vld [vmem:[#allocation2 + $0x80] sm:$0xff]
  %v2369 = vld [vmem:[#allocation2 + $0x88] sm:$0xff]
  %v2370 = vld [vmem:[#allocation2 + $0x90] sm:$0xff]
  %v2371 = vld [vmem:[#allocation2 + $0x98] sm:$0xff]
  %v2372 = vld [vmem:[#allocation2 + $0xa0] sm:$0xff]
  %v2373 = vld [vmem:[#allocation2 + $0xa8] sm:$0xff]
  %v2374 = vld [vmem:[#allocation2 + $0xb0] sm:$0xff]
  %2396 = vrot.lane.b32.xlu0 %v2354, 31
  %v2397 = vpop.permute.xlu0 %2396
  %2398 = vrot.lane.b32.xlu0 %v2355, 31
  %v2399 = vpop.permute.xlu0 %2398
  %2400 = vrot.lane.b32.xlu0 %v2356, 31
  %v2401 = vpop.permute.xlu0 %2400
  %2402 = vrot.lane.b32.xlu0 %v2357, 31
  %v2403 = vpop.permute.xlu0 %2402
  %2404 = vrot.lane.b32.xlu0 %v2358, 31
  %v2405 = vpop.permute.xlu0 %2404
  %2406 = vrot.lane.b32.xlu0 %v2359, 31
  %v2407 = vpop.permute.xlu0 %2406
  %2408 = vrot.lane.b32.xlu0 %v2360, 31
  %v2409 = vpop.permute.xlu0 %2408
  %2410 = vrot.lane.b32.xlu0 %v2361, 31
  %v2411 = vpop.permute.xlu0 %2410
  %2412 = vrot.lane.b32.xlu0 %v2362, 31
  %v2413 = vpop.permute.xlu0 %2412
  %2414 = vrot.lane.b32.xlu0 %v2363, 31
  %v2415 = vpop.permute.xlu0 %2414
  %2416 = vrot.lane.b32.xlu0 %v2364, 31
  %v2417 = vpop.permute.xlu0 %2416
  %2418 = vrot.lane.b32.xlu0 %v2365, 31
  %v2419 = vpop.permute.xlu0 %2418
  %2420 = vrot.lane.b32.xlu0 %v2366, 31
  %v2421 = vpop.permute.xlu0 %2420
  %2422 = vrot.lane.b32.xlu0 %v2367, 31
  %v2423 = vpop.permute.xlu0 %2422
  %2424 = vrot.lane.b32.xlu0 %v2368, 31
  %v2425 = vpop.permute.xlu0 %2424
  %2426 = vrot.lane.b32.xlu0 %v2369, 31
  %v2427 = vpop.permute.xlu0 %2426
  %2428 = vrot.lane.b32.xlu0 %v2370, 31
  %v2429 = vpop.permute.xlu0 %2428
  %2430 = vrot.lane.b32.xlu0 %v2371, 31
  %v2431 = vpop.permute.xlu0 %2430
  %2432 = vrot.lane.b32.xlu0 %v2372, 31
  %v2433 = vpop.permute.xlu0 %2432
  %2434 = vrot.lane.b32.xlu0 %v2373, 31
  %v2435 = vpop.permute.xlu0 %2434
  %2436 = vrot.lane.b32.xlu0 %v2374, 31
  %v2437 = vpop.permute.xlu0 %2436
  %v2438 = vsel %vm340, %v2397, %v2399
  %v2439 = vsel %vm340, %v2399, %v2401
  %v2440 = vsel %vm340, %v2401, %v2403
  %v2441 = vsel %vm340, %v2403, %v2405
  %v2442 = vsel %vm340, %v2405, %v2407
  %v2443 = vsel %vm340, %v2407, %v2409
  %v2444 = vsel %vm340, %v2411, %v2413
  %v2445 = vsel %vm340, %v2413, %v2415
  %v2446 = vsel %vm340, %v2415, %v2417
  %v2447 = vsel %vm340, %v2417, %v2419
  %v2448 = vsel %vm340, %v2419, %v2421
  %v2449 = vsel %vm340, %v2421, %v2423
  %v2450 = vsel %vm340, %v2425, %v2427
  %v2451 = vsel %vm340, %v2427, %v2429
  %v2452 = vsel %vm340, %v2429, %v2431
  %v2453 = vsel %vm340, %v2431, %v2433
  %v2454 = vsel %vm340, %v2433, %v2435
  %v2455 = vsel %vm340, %v2435, %v2437
  %v2477 = vsel %vm270, %v2438, 0.0
  %v2478 = vsel %vm271, %v2439, 0.0
  %v2479 = vsel %vm272, %v2440, 0.0
  %v2480 = vsel %vm273, %v2441, 0.0
  %v2481 = vsel %vm274, %v2442, 0.0
  %v2482 = vsel %vm275, %v2443, 0.0
  %v2483 = vsel %vm276, %v2409, 0.0
  %v2484 = vsel %vm270, %v2444, 0.0
  %v2485 = vsel %vm271, %v2445, 0.0
  %v2486 = vsel %vm272, %v2446, 0.0
  %v2487 = vsel %vm273, %v2447, 0.0
  %v2488 = vsel %vm274, %v2448, 0.0
  %v2489 = vsel %vm275, %v2449, 0.0
  %v2490 = vsel %vm276, %v2423, 0.0
  %v2491 = vsel %vm270, %v2450, 0.0
  %v2492 = vsel %vm271, %v2451, 0.0
  %v2493 = vsel %vm272, %v2452, 0.0
  %v2494 = vsel %vm273, %v2453, 0.0
  %v2495 = vsel %vm274, %v2454, 0.0
  %v2496 = vsel %vm275, %v2455, 0.0
  %v2497 = vsel %vm276, %v2437, 0.0
  %2498 = vst [vmem:[#allocation3] sm:$0xff] %v2477
  %2499 = vst [vmem:[#allocation3 + $0x8] sm:$0xff] %v2478
  %2500 = vst [vmem:[#allocation3 + $0x10] sm:$0xff] %v2479
  %2501 = vst [vmem:[#allocation3 + $0x18] sm:$0xff] %v2480
  %2502 = vst [vmem:[#allocation3 + $0x20] sm:$0xff] %v2481
  %2503 = vst [vmem:[#allocation3 + $0x28] sm:$0xff] %v2482
  %2504 = vst.msk [vmem:[#allocation3 + $0x30] sm:$0xff] %vm179, %v2483
  %2505 = vst [vmem:[#allocation3 + $0x38] sm:$0xff] %v2484
  %2506 = vst [vmem:[#allocation3 + $0x40] sm:$0xff] %v2485
  %2507 = vst [vmem:[#allocation3 + $0x48] sm:$0xff] %v2486
  %2508 = vst [vmem:[#allocation3 + $0x50] sm:$0xff] %v2487
  %2509 = vst [vmem:[#allocation3 + $0x58] sm:$0xff] %v2488
  %2510 = vst [vmem:[#allocation3 + $0x60] sm:$0xff] %v2489
  %2511 = vst.msk [vmem:[#allocation3 + $0x68] sm:$0xff] %vm179, %v2490
  %2512 = vst [vmem:[#allocation3 + $0x70] sm:$0xff] %v2491
  %2513 = vst [vmem:[#allocation3 + $0x78] sm:$0xff] %v2492
  %2514 = vst [vmem:[#allocation3 + $0x80] sm:$0xff] %v2493
  %2515 = vst [vmem:[#allocation3 + $0x88] sm:$0xff] %v2494
  %2516 = vst [vmem:[#allocation3 + $0x90] sm:$0xff] %v2495
  %2517 = vst [vmem:[#allocation3 + $0x98] sm:$0xff] %v2496
  %2518 = vst.msk [vmem:[#allocation3 + $0xa0] sm:$0xff] %vm179, %v2497
  %v2519 = vld [vmem:[#allocation2] sm:$0xff]
  %v2520 = vld [vmem:[#allocation2 + $0x8] sm:$0xff]
  %v2521 = vld [vmem:[#allocation2 + $0x10] sm:$0xff]
  %v2522 = vld [vmem:[#allocation2 + $0x18] sm:$0xff]
  %v2523 = vld [vmem:[#allocation2 + $0x20] sm:$0xff]
  %v2524 = vld [vmem:[#allocation2 + $0x28] sm:$0xff]
  %v2525 = vld [vmem:[#allocation2 + $0x30] sm:$0xff]
  %v2526 = vld [vmem:[#allocation2 + $0x40] sm:$0xff]
  %v2527 = vld [vmem:[#allocation2 + $0x48] sm:$0xff]
  %v2528 = vld [vmem:[#allocation2 + $0x50] sm:$0xff]
  %v2529 = vld [vmem:[#allocation2 + $0x58] sm:$0xff]
  %v2530 = vld [vmem:[#allocation2 + $0x60] sm:$0xff]
  %v2531 = vld [vmem:[#allocation2 + $0x68] sm:$0xff]
  %v2532 = vld [vmem:[#allocation2 + $0x70] sm:$0xff]
  %v2533 = vld [vmem:[#allocation2 + $0x80] sm:$0xff]
  %v2534 = vld [vmem:[#allocation2 + $0x88] sm:$0xff]
  %v2535 = vld [vmem:[#allocation2 + $0x90] sm:$0xff]
  %v2536 = vld [vmem:[#allocation2 + $0x98] sm:$0xff]
  %v2537 = vld [vmem:[#allocation2 + $0xa0] sm:$0xff]
  %v2538 = vld [vmem:[#allocation2 + $0xa8] sm:$0xff]
  %v2539 = vld [vmem:[#allocation2 + $0xb0] sm:$0xff]
  %2561 = vrot.lane.b32.xlu0 %v2519, 30
  %v2562 = vpop.permute.xlu0 %2561
  %2563 = vrot.lane.b32.xlu0 %v2520, 30
  %v2564 = vpop.permute.xlu0 %2563
  %2565 = vrot.lane.b32.xlu0 %v2521, 30
  %v2566 = vpop.permute.xlu0 %2565
  %2567 = vrot.lane.b32.xlu0 %v2522, 30
  %v2568 = vpop.permute.xlu0 %2567
  %2569 = vrot.lane.b32.xlu0 %v2523, 30
  %v2570 = vpop.permute.xlu0 %2569
  %2571 = vrot.lane.b32.xlu0 %v2524, 30
  %v2572 = vpop.permute.xlu0 %2571
  %2573 = vrot.lane.b32.xlu0 %v2525, 30
  %v2574 = vpop.permute.xlu0 %2573
  %2575 = vrot.lane.b32.xlu0 %v2526, 30
  %v2576 = vpop.permute.xlu0 %2575
  %2577 = vrot.lane.b32.xlu0 %v2527, 30
  %v2578 = vpop.permute.xlu0 %2577
  %2579 = vrot.lane.b32.xlu0 %v2528, 30
  %v2580 = vpop.permute.xlu0 %2579
  %2581 = vrot.lane.b32.xlu0 %v2529, 30
  %v2582 = vpop.permute.xlu0 %2581
  %2583 = vrot.lane.b32.xlu0 %v2530, 30
  %v2584 = vpop.permute.xlu0 %2583
  %2585 = vrot.lane.b32.xlu0 %v2531, 30
  %v2586 = vpop.permute.xlu0 %2585
  %2587 = vrot.lane.b32.xlu0 %v2532, 30
  %v2588 = vpop.permute.xlu0 %2587
  %2589 = vrot.lane.b32.xlu0 %v2533, 30
  %v2590 = vpop.permute.xlu0 %2589
  %2591 = vrot.lane.b32.xlu0 %v2534, 30
  %v2592 = vpop.permute.xlu0 %2591
  %2593 = vrot.lane.b32.xlu0 %v2535, 30
  %v2594 = vpop.permute.xlu0 %2593
  %2595 = vrot.lane.b32.xlu0 %v2536, 30
  %v2596 = vpop.permute.xlu0 %2595
  %2597 = vrot.lane.b32.xlu0 %v2537, 30
  %v2598 = vpop.permute.xlu0 %2597
  %2599 = vrot.lane.b32.xlu0 %v2538, 30
  %v2600 = vpop.permute.xlu0 %2599
  %2601 = vrot.lane.b32.xlu0 %v2539, 30
  %v2602 = vpop.permute.xlu0 %2601
  %v2603 = vsel %vm513, %v2562, %v2564
  %v2604 = vsel %vm513, %v2564, %v2566
  %v2605 = vsel %vm513, %v2566, %v2568
  %v2606 = vsel %vm513, %v2568, %v2570
  %v2607 = vsel %vm513, %v2570, %v2572
  %v2608 = vsel %vm513, %v2572, %v2574
  %v2609 = vsel %vm513, %v2576, %v2578
  %v2610 = vsel %vm513, %v2578, %v2580
  %v2611 = vsel %vm513, %v2580, %v2582
  %v2612 = vsel %vm513, %v2582, %v2584
  %v2613 = vsel %vm513, %v2584, %v2586
  %v2614 = vsel %vm513, %v2586, %v2588
  %v2615 = vsel %vm513, %v2590, %v2592
  %v2616 = vsel %vm513, %v2592, %v2594
  %v2617 = vsel %vm513, %v2594, %v2596
  %v2618 = vsel %vm513, %v2596, %v2598
  %v2619 = vsel %vm513, %v2598, %v2600
  %v2620 = vsel %vm513, %v2600, %v2602
  %v2642 = vsel %vm443, %v2603, 0.0
  %v2643 = vsel %vm444, %v2604, 0.0
  %v2644 = vsel %vm445, %v2605, 0.0
  %v2645 = vsel %vm446, %v2606, 0.0
  %v2646 = vsel %vm447, %v2607, 0.0
  %v2647 = vsel %vm448, %v2608, 0.0
  %v2648 = vsel %vm449, %v2574, 0.0
  %v2649 = vsel %vm443, %v2609, 0.0
  %v2650 = vsel %vm444, %v2610, 0.0
  %v2651 = vsel %vm445, %v2611, 0.0
  %v2652 = vsel %vm446, %v2612, 0.0
  %v2653 = vsel %vm447, %v2613, 0.0
  %v2654 = vsel %vm448, %v2614, 0.0
  %v2655 = vsel %vm449, %v2588, 0.0
  %v2656 = vsel %vm443, %v2615, 0.0
  %v2657 = vsel %vm444, %v2616, 0.0
  %v2658 = vsel %vm445, %v2617, 0.0
  %v2659 = vsel %vm446, %v2618, 0.0
  %v2660 = vsel %vm447, %v2619, 0.0
  %v2661 = vsel %vm448, %v2620, 0.0
  %v2662 = vsel %vm449, %v2602, 0.0
  %2663 = vst [vmem:[#allocation3 + $0xa8] sm:$0xff] %v2642
  %2664 = vst [vmem:[#allocation3 + $0xb0] sm:$0xff] %v2643
  %2665 = vst [vmem:[#allocation3 + $0xb8] sm:$0xff] %v2644
  %2666 = vst [vmem:[#allocation3 + $0xc0] sm:$0xff] %v2645
  %2667 = vst [vmem:[#allocation3 + $0xc8] sm:$0xff] %v2646
  %2668 = vst [vmem:[#allocation3 + $0xd0] sm:$0xff] %v2647
  %2669 = vst.msk [vmem:[#allocation3 + $0xd8] sm:$0xff] %vm179, %v2648
  %2670 = vst [vmem:[#allocation3 + $0xe0] sm:$0xff] %v2649
  %2671 = vst [vmem:[#allocation3 + $0xe8] sm:$0xff] %v2650
  %2672 = vst [vmem:[#allocation3 + $0xf0] sm:$0xff] %v2651
  %2673 = vst [vmem:[#allocation3 + $0xf8] sm:$0xff] %v2652
  %2674 = vst [vmem:[#allocation3 + $0x100] sm:$0xff] %v2653
  %2675 = vst [vmem:[#allocation3 + $0x108] sm:$0xff] %v2654
  %2676 = vst.msk [vmem:[#allocation3 + $0x110] sm:$0xff] %vm179, %v2655
  %2677 = vst [vmem:[#allocation3 + $0x118] sm:$0xff] %v2656
  %2678 = vst [vmem:[#allocation3 + $0x120] sm:$0xff] %v2657
  %2679 = vst [vmem:[#allocation3 + $0x128] sm:$0xff] %v2658
  %2680 = vst [vmem:[#allocation3 + $0x130] sm:$0xff] %v2659
  %2681 = vst [vmem:[#allocation3 + $0x138] sm:$0xff] %v2660
  %2682 = vst [vmem:[#allocation3 + $0x140] sm:$0xff] %v2661
  %2683 = vst.msk [vmem:[#allocation3 + $0x148] sm:$0xff] %vm179, %v2662
  %v2684 = vld [vmem:[#allocation2] sm:$0xff]
  %v2685 = vld [vmem:[#allocation2 + $0x8] sm:$0xff]
  %v2686 = vld [vmem:[#allocation2 + $0x10] sm:$0xff]
  %v2687 = vld [vmem:[#allocation2 + $0x18] sm:$0xff]
  %v2688 = vld [vmem:[#allocation2 + $0x20] sm:$0xff]
  %v2689 = vld [vmem:[#allocation2 + $0x28] sm:$0xff]
  %v2690 = vld [vmem:[#allocation2 + $0x30] sm:$0xff]
  %v2691 = vld [vmem:[#allocation2 + $0x40] sm:$0xff]
  %v2692 = vld [vmem:[#allocation2 + $0x48] sm:$0xff]
  %v2693 = vld [vmem:[#allocation2 + $0x50] sm:$0xff]
  %v2694 = vld [vmem:[#allocation2 + $0x58] sm:$0xff]
  %v2695 = vld [vmem:[#allocation2 + $0x60] sm:$0xff]
  %v2696 = vld [vmem:[#allocation2 + $0x68] sm:$0xff]
  %v2697 = vld [vmem:[#allocation2 + $0x70] sm:$0xff]
  %v2698 = vld [vmem:[#allocation2 + $0x80] sm:$0xff]
  %v2699 = vld [vmem:[#allocation2 + $0x88] sm:$0xff]
  %v2700 = vld [vmem:[#allocation2 + $0x90] sm:$0xff]
  %v2701 = vld [vmem:[#allocation2 + $0x98] sm:$0xff]
  %v2702 = vld [vmem:[#allocation2 + $0xa0] sm:$0xff]
  %v2703 = vld [vmem:[#allocation2 + $0xa8] sm:$0xff]
  %v2704 = vld [vmem:[#allocation2 + $0xb0] sm:$0xff]
  %2726 = vrot.lane.b32.xlu0 %v2684, 29
  %v2727 = vpop.permute.xlu0 %2726
  %2728 = vrot.lane.b32.xlu0 %v2685, 29
  %v2729 = vpop.permute.xlu0 %2728
  %2730 = vrot.lane.b32.xlu0 %v2686, 29
  %v2731 = vpop.permute.xlu0 %2730
  %2732 = vrot.lane.b32.xlu0 %v2687, 29
  %v2733 = vpop.permute.xlu0 %2732
  %2734 = vrot.lane.b32.xlu0 %v2688, 29
  %v2735 = vpop.permute.xlu0 %2734
  %2736 = vrot.lane.b32.xlu0 %v2689, 29
  %v2737 = vpop.permute.xlu0 %2736
  %2738 = vrot.lane.b32.xlu0 %v2690, 29
  %v2739 = vpop.permute.xlu0 %2738
  %2740 = vrot.lane.b32.xlu0 %v2691, 29
  %v2741 = vpop.permute.xlu0 %2740
  %2742 = vrot.lane.b32.xlu0 %v2692, 29
  %v2743 = vpop.permute.xlu0 %2742
  %2744 = vrot.lane.b32.xlu0 %v2693, 29
  %v2745 = vpop.permute.xlu0 %2744
  %2746 = vrot.lane.b32.xlu0 %v2694, 29
  %v2747 = vpop.permute.xlu0 %2746
  %2748 = vrot.lane.b32.xlu0 %v2695, 29
  %v2749 = vpop.permute.xlu0 %2748
  %2750 = vrot.lane.b32.xlu0 %v2696, 29
  %v2751 = vpop.permute.xlu0 %2750
  %2752 = vrot.lane.b32.xlu0 %v2697, 29
  %v2753 = vpop.permute.xlu0 %2752
  %2754 = vrot.lane.b32.xlu0 %v2698, 29
  %v2755 = vpop.permute.xlu0 %2754
  %2756 = vrot.lane.b32.xlu0 %v2699, 29
  %v2757 = vpop.permute.xlu0 %2756
  %2758 = vrot.lane.b32.xlu0 %v2700, 29
  %v2759 = vpop.permute.xlu0 %2758
  %2760 = vrot.lane.b32.xlu0 %v2701, 29
  %v2761 = vpop.permute.xlu0 %2760
  %2762 = vrot.lane.b32.xlu0 %v2702, 29
  %v2763 = vpop.permute.xlu0 %2762
  %2764 = vrot.lane.b32.xlu0 %v2703, 29
  %v2765 = vpop.permute.xlu0 %2764
  %2766 = vrot.lane.b32.xlu0 %v2704, 29
  %v2767 = vpop.permute.xlu0 %2766
  %v2768 = vsel %vm686, %v2727, %v2729
  %v2769 = vsel %vm686, %v2729, %v2731
  %v2770 = vsel %vm686, %v2731, %v2733
  %v2771 = vsel %vm686, %v2733, %v2735
  %v2772 = vsel %vm686, %v2735, %v2737
  %v2773 = vsel %vm686, %v2737, %v2739
  %v2774 = vsel %vm686, %v2741, %v2743
  %v2775 = vsel %vm686, %v2743, %v2745
  %v2776 = vsel %vm686, %v2745, %v2747
  %v2777 = vsel %vm686, %v2747, %v2749
  %v2778 = vsel %vm686, %v2749, %v2751
  %v2779 = vsel %vm686, %v2751, %v2753
  %v2780 = vsel %vm686, %v2755, %v2757
  %v2781 = vsel %vm686, %v2757, %v2759
  %v2782 = vsel %vm686, %v2759, %v2761
  %v2783 = vsel %vm686, %v2761, %v2763
  %v2784 = vsel %vm686, %v2763, %v2765
  %v2785 = vsel %vm686, %v2765, %v2767
  %v2807 = vsel %vm616, %v2768, 0.0
  %v2808 = vsel %vm617, %v2769, 0.0
  %v2809 = vsel %vm618, %v2770, 0.0
  %v2810 = vsel %vm619, %v2771, 0.0
  %v2811 = vsel %vm620, %v2772, 0.0
  %v2812 = vsel %vm621, %v2773, 0.0
  %v2813 = vsel %vm622, %v2739, 0.0
  %v2814 = vsel %vm616, %v2774, 0.0
  %v2815 = vsel %vm617, %v2775, 0.0
  %v2816 = vsel %vm618, %v2776, 0.0
  %v2817 = vsel %vm619, %v2777, 0.0
  %v2818 = vsel %vm620, %v2778, 0.0
  %v2819 = vsel %vm621, %v2779, 0.0
  %v2820 = vsel %vm622, %v2753, 0.0
  %v2821 = vsel %vm616, %v2780, 0.0
  %v2822 = vsel %vm617, %v2781, 0.0
  %v2823 = vsel %vm618, %v2782, 0.0
  %v2824 = vsel %vm619, %v2783, 0.0
  %v2825 = vsel %vm620, %v2784, 0.0
  %v2826 = vsel %vm621, %v2785, 0.0
  %v2827 = vsel %vm622, %v2767, 0.0
  %2828 = vst [vmem:[#allocation3 + $0x150] sm:$0xff] %v2807
  %2829 = vst [vmem:[#allocation3 + $0x158] sm:$0xff] %v2808
  %2830 = vst [vmem:[#allocation3 + $0x160] sm:$0xff] %v2809
  %2831 = vst [vmem:[#allocation3 + $0x168] sm:$0xff] %v2810
  %2832 = vst [vmem:[#allocation3 + $0x170] sm:$0xff] %v2811
  %2833 = vst [vmem:[#allocation3 + $0x178] sm:$0xff] %v2812
  %2834 = vst.msk [vmem:[#allocation3 + $0x180] sm:$0xff] %vm179, %v2813
  %2835 = vst [vmem:[#allocation3 + $0x188] sm:$0xff] %v2814
  %2836 = vst [vmem:[#allocation3 + $0x190] sm:$0xff] %v2815
  %2837 = vst [vmem:[#allocation3 + $0x198] sm:$0xff] %v2816
  %2838 = vst [vmem:[#allocation3 + $0x1a0] sm:$0xff] %v2817
  %2839 = vst [vmem:[#allocation3 + $0x1a8] sm:$0xff] %v2818
  %2840 = vst [vmem:[#allocation3 + $0x1b0] sm:$0xff] %v2819
  %2841 = vst.msk [vmem:[#allocation3 + $0x1b8] sm:$0xff] %vm179, %v2820
  %2842 = vst [vmem:[#allocation3 + $0x1c0] sm:$0xff] %v2821
  %2843 = vst [vmem:[#allocation3 + $0x1c8] sm:$0xff] %v2822
  %2844 = vst [vmem:[#allocation3 + $0x1d0] sm:$0xff] %v2823
  %2845 = vst [vmem:[#allocation3 + $0x1d8] sm:$0xff] %v2824
  %2846 = vst [vmem:[#allocation3 + $0x1e0] sm:$0xff] %v2825
  %2847 = vst [vmem:[#allocation3 + $0x1e8] sm:$0xff] %v2826
  %2848 = vst.msk [vmem:[#allocation3 + $0x1f0] sm:$0xff] %vm179, %v2827
  %v2849 = vld [vmem:[#allocation2] sm:$0xff]
  %v2850 = vld [vmem:[#allocation2 + $0x8] sm:$0xff]
  %v2851 = vld [vmem:[#allocation2 + $0x10] sm:$0xff]
  %v2852 = vld [vmem:[#allocation2 + $0x18] sm:$0xff]
  %v2853 = vld [vmem:[#allocation2 + $0x20] sm:$0xff]
  %v2854 = vld [vmem:[#allocation2 + $0x28] sm:$0xff]
  %v2855 = vld [vmem:[#allocation2 + $0x30] sm:$0xff]
  %v2856 = vld [vmem:[#allocation2 + $0x40] sm:$0xff]
  %v2857 = vld [vmem:[#allocation2 + $0x48] sm:$0xff]
  %v2858 = vld [vmem:[#allocation2 + $0x50] sm:$0xff]
  %v2859 = vld [vmem:[#allocation2 + $0x58] sm:$0xff]
  %v2860 = vld [vmem:[#allocation2 + $0x60] sm:$0xff]
  %v2861 = vld [vmem:[#allocation2 + $0x68] sm:$0xff]
  %v2862 = vld [vmem:[#allocation2 + $0x70] sm:$0xff]
  %v2863 = vld [vmem:[#allocation2 + $0x80] sm:$0xff]
  %v2864 = vld [vmem:[#allocation2 + $0x88] sm:$0xff]
  %v2865 = vld [vmem:[#allocation2 + $0x90] sm:$0xff]
  %v2866 = vld [vmem:[#allocation2 + $0x98] sm:$0xff]
  %v2867 = vld [vmem:[#allocation2 + $0xa0] sm:$0xff]
  %v2868 = vld [vmem:[#allocation2 + $0xa8] sm:$0xff]
  %v2869 = vld [vmem:[#allocation2 + $0xb0] sm:$0xff]
  %2891 = vrot.lane.b32.xlu0 %v2849, 28
  %v2892 = vpop.permute.xlu0 %2891
  %2893 = vrot.lane.b32.xlu0 %v2850, 28
  %v2894 = vpop.permute.xlu0 %2893
  %2895 = vrot.lane.b32.xlu0 %v2851, 28
  %v2896 = vpop.permute.xlu0 %2895
  %2897 = vrot.lane.b32.xlu0 %v2852, 28
  %v2898 = vpop.permute.xlu0 %2897
  %2899 = vrot.lane.b32.xlu0 %v2853, 28
  %v2900 = vpop.permute.xlu0 %2899
  %2901 = vrot.lane.b32.xlu0 %v2854, 28
  %v2902 = vpop.permute.xlu0 %2901
  %2903 = vrot.lane.b32.xlu0 %v2855, 28
  %v2904 = vpop.permute.xlu0 %2903
  %2905 = vrot.lane.b32.xlu0 %v2856, 28
  %v2906 = vpop.permute.xlu0 %2905
  %2907 = vrot.lane.b32.xlu0 %v2857, 28
  %v2908 = vpop.permute.xlu0 %2907
  %2909 = vrot.lane.b32.xlu0 %v2858, 28
  %v2910 = vpop.permute.xlu0 %2909
  %2911 = vrot.lane.b32.xlu0 %v2859, 28
  %v2912 = vpop.permute.xlu0 %2911
  %2913 = vrot.lane.b32.xlu0 %v2860, 28
  %v2914 = vpop.permute.xlu0 %2913
  %2915 = vrot.lane.b32.xlu0 %v2861, 28
  %v2916 = vpop.permute.xlu0 %2915
  %2917 = vrot.lane.b32.xlu0 %v2862, 28
  %v2918 = vpop.permute.xlu0 %2917
  %2919 = vrot.lane.b32.xlu0 %v2863, 28
  %v2920 = vpop.permute.xlu0 %2919
  %2921 = vrot.lane.b32.xlu0 %v2864, 28
  %v2922 = vpop.permute.xlu0 %2921
  %2923 = vrot.lane.b32.xlu0 %v2865, 28
  %v2924 = vpop.permute.xlu0 %2923
  %2925 = vrot.lane.b32.xlu0 %v2866, 28
  %v2926 = vpop.permute.xlu0 %2925
  %2927 = vrot.lane.b32.xlu0 %v2867, 28
  %v2928 = vpop.permute.xlu0 %2927
  %2929 = vrot.lane.b32.xlu0 %v2868, 28
  %v2930 = vpop.permute.xlu0 %2929
  %2931 = vrot.lane.b32.xlu0 %v2869, 28
  %v2932 = vpop.permute.xlu0 %2931
  %v2933 = vsel %vm852, %v2892, %v2894
  %v2934 = vsel %vm852, %v2894, %v2896
  %v2935 = vsel %vm852, %v2896, %v2898
  %v2936 = vsel %vm852, %v2898, %v2900
  %v2937 = vsel %vm852, %v2900, %v2902
  %v2938 = vsel %vm852, %v2902, %v2904
  %v2939 = vsel %vm852, %v2906, %v2908
  %v2940 = vsel %vm852, %v2908, %v2910
  %v2941 = vsel %vm852, %v2910, %v2912
  %v2942 = vsel %vm852, %v2912, %v2914
  %v2943 = vsel %vm852, %v2914, %v2916
  %v2944 = vsel %vm852, %v2916, %v2918
  %v2945 = vsel %vm852, %v2920, %v2922
  %v2946 = vsel %vm852, %v2922, %v2924
  %v2947 = vsel %vm852, %v2924, %v2926
  %v2948 = vsel %vm852, %v2926, %v2928
  %v2949 = vsel %vm852, %v2928, %v2930
  %v2950 = vsel %vm852, %v2930, %v2932
  %2972 = vst [vmem:[#allocation3 + $0x1f8] sm:$0xff] %v2933
  %2973 = vst [vmem:[#allocation3 + $0x200] sm:$0xff] %v2934
  %2974 = vst [vmem:[#allocation3 + $0x208] sm:$0xff] %v2935
  %2975 = vst [vmem:[#allocation3 + $0x210] sm:$0xff] %v2936
  %2976 = vst [vmem:[#allocation3 + $0x218] sm:$0xff] %v2937
  %2977 = vst [vmem:[#allocation3 + $0x220] sm:$0xff] %v2938
  %2978 = vst.msk [vmem:[#allocation3 + $0x228] sm:$0xff] %vm179, %v2904
  %2979 = vst [vmem:[#allocation3 + $0x230] sm:$0xff] %v2939
  %2980 = vst [vmem:[#allocation3 + $0x238] sm:$0xff] %v2940
  %2981 = vst [vmem:[#allocation3 + $0x240] sm:$0xff] %v2941
  %2982 = vst [vmem:[#allocation3 + $0x248] sm:$0xff] %v2942
  %2983 = vst [vmem:[#allocation3 + $0x250] sm:$0xff] %v2943
  %2984 = vst [vmem:[#allocation3 + $0x258] sm:$0xff] %v2944
  %2985 = vst.msk [vmem:[#allocation3 + $0x260] sm:$0xff] %vm179, %v2918
  %2986 = vst [vmem:[#allocation3 + $0x268] sm:$0xff] %v2945
  %2987 = vst [vmem:[#allocation3 + $0x270] sm:$0xff] %v2946
  %2988 = vst [vmem:[#allocation3 + $0x278] sm:$0xff] %v2947
  %2989 = vst [vmem:[#allocation3 + $0x280] sm:$0xff] %v2948
  %2990 = vst [vmem:[#allocation3 + $0x288] sm:$0xff] %v2949
  %2991 = vst [vmem:[#allocation3 + $0x290] sm:$0xff] %v2950
  %2992 = vst.msk [vmem:[#allocation3 + $0x298] sm:$0xff] %vm179, %v2932
  %v2993 = vld [vmem:[#allocation2] sm:$0xff]
  %v2994 = vld [vmem:[#allocation2 + $0x8] sm:$0xff]
  %v2995 = vld [vmem:[#allocation2 + $0x10] sm:$0xff]
  %v2996 = vld [vmem:[#allocation2 + $0x18] sm:$0xff]
  %v2997 = vld [vmem:[#allocation2 + $0x20] sm:$0xff]
  %v2998 = vld [vmem:[#allocation2 + $0x28] sm:$0xff]
  %v2999 = vld [vmem:[#allocation2 + $0x30] sm:$0xff]
  %v3000 = vld [vmem:[#allocation2 + $0x40] sm:$0xff]
  %v3001 = vld [vmem:[#allocation2 + $0x48] sm:$0xff]
  %v3002 = vld [vmem:[#allocation2 + $0x50] sm:$0xff]
  %v3003 = vld [vmem:[#allocation2 + $0x58] sm:$0xff]
  %v3004 = vld [vmem:[#allocation2 + $0x60] sm:$0xff]
  %v3005 = vld [vmem:[#allocation2 + $0x68] sm:$0xff]
  %v3006 = vld [vmem:[#allocation2 + $0x70] sm:$0xff]
  %v3007 = vld [vmem:[#allocation2 + $0x80] sm:$0xff]
  %v3008 = vld [vmem:[#allocation2 + $0x88] sm:$0xff]
  %v3009 = vld [vmem:[#allocation2 + $0x90] sm:$0xff]
  %v3010 = vld [vmem:[#allocation2 + $0x98] sm:$0xff]
  %v3011 = vld [vmem:[#allocation2 + $0xa0] sm:$0xff]
  %v3012 = vld [vmem:[#allocation2 + $0xa8] sm:$0xff]
  %v3013 = vld [vmem:[#allocation2 + $0xb0] sm:$0xff]
  %3035 = vrot.lane.b32.xlu0 %v2993, 27
  %v3036 = vpop.permute.xlu0 %3035
  %3037 = vrot.lane.b32.xlu0 %v2994, 27
  %v3038 = vpop.permute.xlu0 %3037
  %3039 = vrot.lane.b32.xlu0 %v2995, 27
  %v3040 = vpop.permute.xlu0 %3039
  %3041 = vrot.lane.b32.xlu0 %v2996, 27
  %v3042 = vpop.permute.xlu0 %3041
  %3043 = vrot.lane.b32.xlu0 %v2997, 27
  %v3044 = vpop.permute.xlu0 %3043
  %3045 = vrot.lane.b32.xlu0 %v2998, 27
  %v3046 = vpop.permute.xlu0 %3045
  %3047 = vrot.lane.b32.xlu0 %v2999, 27
  %v3048 = vpop.permute.xlu0 %3047
  %3049 = vrot.lane.b32.xlu0 %v3000, 27
  %v3050 = vpop.permute.xlu0 %3049
  %3051 = vrot.lane.b32.xlu0 %v3001, 27
  %v3052 = vpop.permute.xlu0 %3051
  %3053 = vrot.lane.b32.xlu0 %v3002, 27
  %v3054 = vpop.permute.xlu0 %3053
  %3055 = vrot.lane.b32.xlu0 %v3003, 27
  %v3056 = vpop.permute.xlu0 %3055
  %3057 = vrot.lane.b32.xlu0 %v3004, 27
  %v3058 = vpop.permute.xlu0 %3057
  %3059 = vrot.lane.b32.xlu0 %v3005, 27
  %v3060 = vpop.permute.xlu0 %3059
  %3061 = vrot.lane.b32.xlu0 %v3006, 27
  %v3062 = vpop.permute.xlu0 %3061
  %3063 = vrot.lane.b32.xlu0 %v3007, 27
  %v3064 = vpop.permute.xlu0 %3063
  %3065 = vrot.lane.b32.xlu0 %v3008, 27
  %v3066 = vpop.permute.xlu0 %3065
  %3067 = vrot.lane.b32.xlu0 %v3009, 27
  %v3068 = vpop.permute.xlu0 %3067
  %3069 = vrot.lane.b32.xlu0 %v3010, 27
  %v3070 = vpop.permute.xlu0 %3069
  %3071 = vrot.lane.b32.xlu0 %v3011, 27
  %v3072 = vpop.permute.xlu0 %3071
  %3073 = vrot.lane.b32.xlu0 %v3012, 27
  %v3074 = vpop.permute.xlu0 %3073
  %3075 = vrot.lane.b32.xlu0 %v3013, 27
  %v3076 = vpop.permute.xlu0 %3075
  %v3077 = vsel %vm1004, %v3036, %v3038
  %v3078 = vsel %vm1004, %v3038, %v3040
  %v3079 = vsel %vm1004, %v3040, %v3042
  %v3080 = vsel %vm1004, %v3042, %v3044
  %v3081 = vsel %vm1004, %v3044, %v3046
  %v3082 = vsel %vm1004, %v3046, %v3048
  %v3083 = vsel %vm1004, %v3050, %v3052
  %v3084 = vsel %vm1004, %v3052, %v3054
  %v3085 = vsel %vm1004, %v3054, %v3056
  %v3086 = vsel %vm1004, %v3056, %v3058
  %v3087 = vsel %vm1004, %v3058, %v3060
  %v3088 = vsel %vm1004, %v3060, %v3062
  %v3089 = vsel %vm1004, %v3064, %v3066
  %v3090 = vsel %vm1004, %v3066, %v3068
  %v3091 = vsel %vm1004, %v3068, %v3070
  %v3092 = vsel %vm1004, %v3070, %v3072
  %v3093 = vsel %vm1004, %v3072, %v3074
  %v3094 = vsel %vm1004, %v3074, %v3076
  %v3116 = vsel %vm934, %v3077, 0.0
  %v3117 = vsel %vm935, %v3078, 0.0
  %v3118 = vsel %vm936, %v3079, 0.0
  %v3119 = vsel %vm937, %v3080, 0.0
  %v3120 = vsel %vm938, %v3081, 0.0
  %v3121 = vsel %vm939, %v3082, 0.0
  %v3122 = vsel %vm940, %v3048, 0.0
  %v3123 = vsel %vm934, %v3083, 0.0
  %v3124 = vsel %vm935, %v3084, 0.0
  %v3125 = vsel %vm936, %v3085, 0.0
  %v3126 = vsel %vm937, %v3086, 0.0
  %v3127 = vsel %vm938, %v3087, 0.0
  %v3128 = vsel %vm939, %v3088, 0.0
  %v3129 = vsel %vm940, %v3062, 0.0
  %v3130 = vsel %vm934, %v3089, 0.0
  %v3131 = vsel %vm935, %v3090, 0.0
  %v3132 = vsel %vm936, %v3091, 0.0
  %v3133 = vsel %vm937, %v3092, 0.0
  %v3134 = vsel %vm938, %v3093, 0.0
  %v3135 = vsel %vm939, %v3094, 0.0
  %v3136 = vsel %vm940, %v3076, 0.0
  %3137 = vst [vmem:[#allocation3 + $0x2a0] sm:$0xff] %v3116
  %3138 = vst [vmem:[#allocation3 + $0x2a8] sm:$0xff] %v3117
  %3139 = vst [vmem:[#allocation3 + $0x2b0] sm:$0xff] %v3118
  %3140 = vst [vmem:[#allocation3 + $0x2b8] sm:$0xff] %v3119
  %3141 = vst [vmem:[#allocation3 + $0x2c0] sm:$0xff] %v3120
  %3142 = vst [vmem:[#allocation3 + $0x2c8] sm:$0xff] %v3121
  %3143 = vst.msk [vmem:[#allocation3 + $0x2d0] sm:$0xff] %vm179, %v3122
  %3144 = vst [vmem:[#allocation3 + $0x2d8] sm:$0xff] %v3123
  %3145 = vst [vmem:[#allocation3 + $0x2e0] sm:$0xff] %v3124
  %3146 = vst [vmem:[#allocation3 + $0x2e8] sm:$0xff] %v3125
  %3147 = vst [vmem:[#allocation3 + $0x2f0] sm:$0xff] %v3126
  %3148 = vst [vmem:[#allocation3 + $0x2f8] sm:$0xff] %v3127
  %3149 = vst [vmem:[#allocation3 + $0x300] sm:$0xff] %v3128
  %3150 = vst.msk [vmem:[#allocation3 + $0x308] sm:$0xff] %vm179, %v3129
  %3151 = vst [vmem:[#allocation3 + $0x310] sm:$0xff] %v3130
  %3152 = vst [vmem:[#allocation3 + $0x318] sm:$0xff] %v3131
  %3153 = vst [vmem:[#allocation3 + $0x320] sm:$0xff] %v3132
  %3154 = vst [vmem:[#allocation3 + $0x328] sm:$0xff] %v3133
  %3155 = vst [vmem:[#allocation3 + $0x330] sm:$0xff] %v3134
  %3156 = vst [vmem:[#allocation3 + $0x338] sm:$0xff] %v3135
  %3157 = vst.msk [vmem:[#allocation3 + $0x340] sm:$0xff] %vm179, %v3136
  %v3158 = vld [vmem:[#allocation2] sm:$0xff]
  %v3159 = vld [vmem:[#allocation2 + $0x8] sm:$0xff]
  %v3160 = vld [vmem:[#allocation2 + $0x10] sm:$0xff]
  %v3161 = vld [vmem:[#allocation2 + $0x18] sm:$0xff]
  %v3162 = vld [vmem:[#allocation2 + $0x20] sm:$0xff]
  %v3163 = vld [vmem:[#allocation2 + $0x28] sm:$0xff]
  %v3164 = vld [vmem:[#allocation2 + $0x30] sm:$0xff]
  %v3165 = vld [vmem:[#allocation2 + $0x40] sm:$0xff]
  %v3166 = vld [vmem:[#allocation2 + $0x48] sm:$0xff]
  %v3167 = vld [vmem:[#allocation2 + $0x50] sm:$0xff]
  %v3168 = vld [vmem:[#allocation2 + $0x58] sm:$0xff]
  %v3169 = vld [vmem:[#allocation2 + $0x60] sm:$0xff]
  %v3170 = vld [vmem:[#allocation2 + $0x68] sm:$0xff]
  %v3171 = vld [vmem:[#allocation2 + $0x70] sm:$0xff]
  %v3172 = vld [vmem:[#allocation2 + $0x80] sm:$0xff]
  %v3173 = vld [vmem:[#allocation2 + $0x88] sm:$0xff]
  %v3174 = vld [vmem:[#allocation2 + $0x90] sm:$0xff]
  %v3175 = vld [vmem:[#allocation2 + $0x98] sm:$0xff]
  %v3176 = vld [vmem:[#allocation2 + $0xa0] sm:$0xff]
  %v3177 = vld [vmem:[#allocation2 + $0xa8] sm:$0xff]
  %v3178 = vld [vmem:[#allocation2 + $0xb0] sm:$0xff]
  %3200 = vrot.lane.b32.xlu0 %v3158, 26
  %v3201 = vpop.permute.xlu0 %3200
  %3202 = vrot.lane.b32.xlu0 %v3159, 26
  %v3203 = vpop.permute.xlu0 %3202
  %3204 = vrot.lane.b32.xlu0 %v3160, 26
  %v3205 = vpop.permute.xlu0 %3204
  %3206 = vrot.lane.b32.xlu0 %v3161, 26
  %v3207 = vpop.permute.xlu0 %3206
  %3208 = vrot.lane.b32.xlu0 %v3162, 26
  %v3209 = vpop.permute.xlu0 %3208
  %3210 = vrot.lane.b32.xlu0 %v3163, 26
  %v3211 = vpop.permute.xlu0 %3210
  %3212 = vrot.lane.b32.xlu0 %v3164, 26
  %v3213 = vpop.permute.xlu0 %3212
  %3214 = vrot.lane.b32.xlu0 %v3165, 26
  %v3215 = vpop.permute.xlu0 %3214
  %3216 = vrot.lane.b32.xlu0 %v3166, 26
  %v3217 = vpop.permute.xlu0 %3216
  %3218 = vrot.lane.b32.xlu0 %v3167, 26
  %v3219 = vpop.permute.xlu0 %3218
  %3220 = vrot.lane.b32.xlu0 %v3168, 26
  %v3221 = vpop.permute.xlu0 %3220
  %3222 = vrot.lane.b32.xlu0 %v3169, 26
  %v3223 = vpop.permute.xlu0 %3222
  %3224 = vrot.lane.b32.xlu0 %v3170, 26
  %v3225 = vpop.permute.xlu0 %3224
  %3226 = vrot.lane.b32.xlu0 %v3171, 26
  %v3227 = vpop.permute.xlu0 %3226
  %3228 = vrot.lane.b32.xlu0 %v3172, 26
  %v3229 = vpop.permute.xlu0 %3228
  %3230 = vrot.lane.b32.xlu0 %v3173, 26
  %v3231 = vpop.permute.xlu0 %3230
  %3232 = vrot.lane.b32.xlu0 %v3174, 26
  %v3233 = vpop.permute.xlu0 %3232
  %3234 = vrot.lane.b32.xlu0 %v3175, 26
  %v3235 = vpop.permute.xlu0 %3234
  %3236 = vrot.lane.b32.xlu0 %v3176, 26
  %v3237 = vpop.permute.xlu0 %3236
  %3238 = vrot.lane.b32.xlu0 %v3177, 26
  %v3239 = vpop.permute.xlu0 %3238
  %3240 = vrot.lane.b32.xlu0 %v3178, 26
  %v3241 = vpop.permute.xlu0 %3240
  %v3242 = vsel %vm1177, %v3201, %v3203
  %v3243 = vsel %vm1177, %v3203, %v3205
  %v3244 = vsel %vm1177, %v3205, %v3207
  %v3245 = vsel %vm1177, %v3207, %v3209
  %v3246 = vsel %vm1177, %v3209, %v3211
  %v3247 = vsel %vm1177, %v3211, %v3213
  %v3248 = vsel %vm1177, %v3215, %v3217
  %v3249 = vsel %vm1177, %v3217, %v3219
  %v3250 = vsel %vm1177, %v3219, %v3221
  %v3251 = vsel %vm1177, %v3221, %v3223
  %v3252 = vsel %vm1177, %v3223, %v3225
  %v3253 = vsel %vm1177, %v3225, %v3227
  %v3254 = vsel %vm1177, %v3229, %v3231
  %v3255 = vsel %vm1177, %v3231, %v3233
  %v3256 = vsel %vm1177, %v3233, %v3235
  %v3257 = vsel %vm1177, %v3235, %v3237
  %v3258 = vsel %vm1177, %v3237, %v3239
  %v3259 = vsel %vm1177, %v3239, %v3241
  %v3281 = vsel %vm1107, %v3242, 0.0
  %v3282 = vsel %vm1108, %v3243, 0.0
  %v3283 = vsel %vm1109, %v3244, 0.0
  %v3284 = vsel %vm1110, %v3245, 0.0
  %v3285 = vsel %vm1111, %v3246, 0.0
  %v3286 = vsel %vm1112, %v3247, 0.0
  %v3287 = vsel %vm1113, %v3213, 0.0
  %v3288 = vsel %vm1107, %v3248, 0.0
  %v3289 = vsel %vm1108, %v3249, 0.0
  %v3290 = vsel %vm1109, %v3250, 0.0
  %v3291 = vsel %vm1110, %v3251, 0.0
  %v3292 = vsel %vm1111, %v3252, 0.0
  %v3293 = vsel %vm1112, %v3253, 0.0
  %v3294 = vsel %vm1113, %v3227, 0.0
  %v3295 = vsel %vm1107, %v3254, 0.0
  %v3296 = vsel %vm1108, %v3255, 0.0
  %v3297 = vsel %vm1109, %v3256, 0.0
  %v3298 = vsel %vm1110, %v3257, 0.0
  %v3299 = vsel %vm1111, %v3258, 0.0
  %v3300 = vsel %vm1112, %v3259, 0.0
  %v3301 = vsel %vm1113, %v3241, 0.0
  %3302 = vst [vmem:[#allocation3 + $0x348] sm:$0xff] %v3281
  %3303 = vst [vmem:[#allocation3 + $0x350] sm:$0xff] %v3282
  %3304 = vst [vmem:[#allocation3 + $0x358] sm:$0xff] %v3283
  %3305 = vst [vmem:[#allocation3 + $0x360] sm:$0xff] %v3284
  %3306 = vst [vmem:[#allocation3 + $0x368] sm:$0xff] %v3285
  %3307 = vst [vmem:[#allocation3 + $0x370] sm:$0xff] %v3286
  %3308 = vst.msk [vmem:[#allocation3 + $0x378] sm:$0xff] %vm179, %v3287
  %3309 = vst [vmem:[#allocation3 + $0x380] sm:$0xff] %v3288
  %3310 = vst [vmem:[#allocation3 + $0x388] sm:$0xff] %v3289
  %3311 = vst [vmem:[#allocation3 + $0x390] sm:$0xff] %v3290
  %3312 = vst [vmem:[#allocation3 + $0x398] sm:$0xff] %v3291
  %3313 = vst [vmem:[#allocation3 + $0x3a0] sm:$0xff] %v3292
  %3314 = vst [vmem:[#allocation3 + $0x3a8] sm:$0xff] %v3293
  %3315 = vst.msk [vmem:[#allocation3 + $0x3b0] sm:$0xff] %vm179, %v3294
  %3316 = vst [vmem:[#allocation3 + $0x3b8] sm:$0xff] %v3295
  %3317 = vst [vmem:[#allocation3 + $0x3c0] sm:$0xff] %v3296
  %3318 = vst [vmem:[#allocation3 + $0x3c8] sm:$0xff] %v3297
  %3319 = vst [vmem:[#allocation3 + $0x3d0] sm:$0xff] %v3298
  %3320 = vst [vmem:[#allocation3 + $0x3d8] sm:$0xff] %v3299
  %3321 = vst [vmem:[#allocation3 + $0x3e0] sm:$0xff] %v3300
  %3322 = vst.msk [vmem:[#allocation3 + $0x3e8] sm:$0xff] %vm179, %v3301
  %v3323 = vld [vmem:[#allocation2] sm:$0xff]
  %v3324 = vld [vmem:[#allocation2 + $0x8] sm:$0xff]
  %v3325 = vld [vmem:[#allocation2 + $0x10] sm:$0xff]
  %v3326 = vld [vmem:[#allocation2 + $0x18] sm:$0xff]
  %v3327 = vld [vmem:[#allocation2 + $0x20] sm:$0xff]
  %v3328 = vld [vmem:[#allocation2 + $0x28] sm:$0xff]
  %v3329 = vld [vmem:[#allocation2 + $0x30] sm:$0xff]
  %v3330 = vld [vmem:[#allocation2 + $0x40] sm:$0xff]
  %v3331 = vld [vmem:[#allocation2 + $0x48] sm:$0xff]
  %v3332 = vld [vmem:[#allocation2 + $0x50] sm:$0xff]
  %v3333 = vld [vmem:[#allocation2 + $0x58] sm:$0xff]
  %v3334 = vld [vmem:[#allocation2 + $0x60] sm:$0xff]
  %v3335 = vld [vmem:[#allocation2 + $0x68] sm:$0xff]
  %v3336 = vld [vmem:[#allocation2 + $0x70] sm:$0xff]
  %v3337 = vld [vmem:[#allocation2 + $0x80] sm:$0xff]
  %v3338 = vld [vmem:[#allocation2 + $0x88] sm:$0xff]
  %v3339 = vld [vmem:[#allocation2 + $0x90] sm:$0xff]
  %v3340 = vld [vmem:[#allocation2 + $0x98] sm:$0xff]
  %v3341 = vld [vmem:[#allocation2 + $0xa0] sm:$0xff]
  %v3342 = vld [vmem:[#allocation2 + $0xa8] sm:$0xff]
  %v3343 = vld [vmem:[#allocation2 + $0xb0] sm:$0xff]
  %3365 = vrot.lane.b32.xlu0 %v3323, 25
  %v3366 = vpop.permute.xlu0 %3365
  %3367 = vrot.lane.b32.xlu0 %v3324, 25
  %v3368 = vpop.permute.xlu0 %3367
  %3369 = vrot.lane.b32.xlu0 %v3325, 25
  %v3370 = vpop.permute.xlu0 %3369
  %3371 = vrot.lane.b32.xlu0 %v3326, 25
  %v3372 = vpop.permute.xlu0 %3371
  %3373 = vrot.lane.b32.xlu0 %v3327, 25
  %v3374 = vpop.permute.xlu0 %3373
  %3375 = vrot.lane.b32.xlu0 %v3328, 25
  %v3376 = vpop.permute.xlu0 %3375
  %3377 = vrot.lane.b32.xlu0 %v3329, 25
  %v3378 = vpop.permute.xlu0 %3377
  %3379 = vrot.lane.b32.xlu0 %v3330, 25
  %v3380 = vpop.permute.xlu0 %3379
  %3381 = vrot.lane.b32.xlu0 %v3331, 25
  %v3382 = vpop.permute.xlu0 %3381
  %3383 = vrot.lane.b32.xlu0 %v3332, 25
  %v3384 = vpop.permute.xlu0 %3383
  %3385 = vrot.lane.b32.xlu0 %v3333, 25
  %v3386 = vpop.permute.xlu0 %3385
  %3387 = vrot.lane.b32.xlu0 %v3334, 25
  %v3388 = vpop.permute.xlu0 %3387
  %3389 = vrot.lane.b32.xlu0 %v3335, 25
  %v3390 = vpop.permute.xlu0 %3389
  %3391 = vrot.lane.b32.xlu0 %v3336, 25
  %v3392 = vpop.permute.xlu0 %3391
  %3393 = vrot.lane.b32.xlu0 %v3337, 25
  %v3394 = vpop.permute.xlu0 %3393
  %3395 = vrot.lane.b32.xlu0 %v3338, 25
  %v3396 = vpop.permute.xlu0 %3395
  %3397 = vrot.lane.b32.xlu0 %v3339, 25
  %v3398 = vpop.permute.xlu0 %3397
  %3399 = vrot.lane.b32.xlu0 %v3340, 25
  %v3400 = vpop.permute.xlu0 %3399
  %3401 = vrot.lane.b32.xlu0 %v3341, 25
  %v3402 = vpop.permute.xlu0 %3401
  %3403 = vrot.lane.b32.xlu0 %v3342, 25
  %v3404 = vpop.permute.xlu0 %3403
  %3405 = vrot.lane.b32.xlu0 %v3343, 25
  %v3406 = vpop.permute.xlu0 %3405
  %v3407 = vsel %vm1350, %v3366, %v3368
  %v3408 = vsel %vm1350, %v3368, %v3370
  %v3409 = vsel %vm1350, %v3370, %v3372
  %v3410 = vsel %vm1350, %v3372, %v3374
  %v3411 = vsel %vm1350, %v3374, %v3376
  %v3412 = vsel %vm1350, %v3376, %v3378
  %v3413 = vsel %vm1350, %v3380, %v3382
  %v3414 = vsel %vm1350, %v3382, %v3384
  %v3415 = vsel %vm1350, %v3384, %v3386
  %v3416 = vsel %vm1350, %v3386, %v3388
  %v3417 = vsel %vm1350, %v3388, %v3390
  %v3418 = vsel %vm1350, %v3390, %v3392
  %v3419 = vsel %vm1350, %v3394, %v3396
  %v3420 = vsel %vm1350, %v3396, %v3398
  %v3421 = vsel %vm1350, %v3398, %v3400
  %v3422 = vsel %vm1350, %v3400, %v3402
  %v3423 = vsel %vm1350, %v3402, %v3404
  %v3424 = vsel %vm1350, %v3404, %v3406
  %v3446 = vsel %vm1280, %v3407, 0.0
  %v3447 = vsel %vm1281, %v3408, 0.0
  %v3448 = vsel %vm1282, %v3409, 0.0
  %v3449 = vsel %vm1283, %v3410, 0.0
  %v3450 = vsel %vm1284, %v3411, 0.0
  %v3451 = vsel %vm1285, %v3412, 0.0
  %v3452 = vsel %vm1286, %v3378, 0.0
  %v3453 = vsel %vm1280, %v3413, 0.0
  %v3454 = vsel %vm1281, %v3414, 0.0
  %v3455 = vsel %vm1282, %v3415, 0.0
  %v3456 = vsel %vm1283, %v3416, 0.0
  %v3457 = vsel %vm1284, %v3417, 0.0
  %v3458 = vsel %vm1285, %v3418, 0.0
  %v3459 = vsel %vm1286, %v3392, 0.0
  %v3460 = vsel %vm1280, %v3419, 0.0
  %v3461 = vsel %vm1281, %v3420, 0.0
  %v3462 = vsel %vm1282, %v3421, 0.0
  %v3463 = vsel %vm1283, %v3422, 0.0
  %v3464 = vsel %vm1284, %v3423, 0.0
  %v3465 = vsel %vm1285, %v3424, 0.0
  %v3466 = vsel %vm1286, %v3406, 0.0
  %3467 = vst [vmem:[#allocation3 + $0x3f0] sm:$0xff] %v3446
  %3468 = vst [vmem:[#allocation3 + $0x3f8] sm:$0xff] %v3447
  %3469 = vst [vmem:[#allocation3 + $0x400] sm:$0xff] %v3448
  %3470 = vst [vmem:[#allocation3 + $0x408] sm:$0xff] %v3449
  %3471 = vst [vmem:[#allocation3 + $0x410] sm:$0xff] %v3450
  %3472 = vst [vmem:[#allocation3 + $0x418] sm:$0xff] %v3451
  %3473 = vst.msk [vmem:[#allocation3 + $0x420] sm:$0xff] %vm179, %v3452
  %3474 = vst [vmem:[#allocation3 + $0x428] sm:$0xff] %v3453
  %3475 = vst [vmem:[#allocation3 + $0x430] sm:$0xff] %v3454
  %3476 = vst [vmem:[#allocation3 + $0x438] sm:$0xff] %v3455
  %3477 = vst [vmem:[#allocation3 + $0x440] sm:$0xff] %v3456
  %3478 = vst [vmem:[#allocation3 + $0x448] sm:$0xff] %v3457
  %3479 = vst [vmem:[#allocation3 + $0x450] sm:$0xff] %v3458
  %3480 = vst.msk [vmem:[#allocation3 + $0x458] sm:$0xff] %vm179, %v3459
  %3481 = vst [vmem:[#allocation3 + $0x460] sm:$0xff] %v3460
  %3482 = vst [vmem:[#allocation3 + $0x468] sm:$0xff] %v3461
  %3483 = vst [vmem:[#allocation3 + $0x470] sm:$0xff] %v3462
  %3484 = vst [vmem:[#allocation3 + $0x478] sm:$0xff] %v3463
  %3485 = vst [vmem:[#allocation3 + $0x480] sm:$0xff] %v3464
  %3486 = vst [vmem:[#allocation3 + $0x488] sm:$0xff] %v3465
  %3487 = vst.msk [vmem:[#allocation3 + $0x490] sm:$0xff] %vm179, %v3466
  %v3488 = vld [vmem:[%s1] sm:$0xff]
  %v3489 = vld [vmem:[%s1 + $0x8] sm:$0xff]
  %v3490 = vld [vmem:[%s1 + $0x10] sm:$0xff]
  %v3491 = vld [vmem:[%s1 + $0x18] sm:$0xff]
  %v3492 = vld [vmem:[%s1 + $0x20] sm:$0xff]
  %v3493 = vld [vmem:[%s1 + $0x28] sm:$0xff]
  %v3494 = vld [vmem:[%s1 + $0x30] sm:$0xff]
  %v3495 = vld [vmem:[%s1 + $0x38] sm:$0xff]
  %v3496 = vld [vmem:[%s1 + $0x40] sm:$0xff]
  %v3497 = vld [vmem:[%s1 + $0x48] sm:$0xff]
  %v3498 = vld [vmem:[%s1 + $0x50] sm:$0xff]
  %v3499 = vld [vmem:[%s1 + $0x58] sm:$0xff]
  %v3500 = vld [vmem:[%s1 + $0x60] sm:$0xff]
  %v3501 = vld [vmem:[%s1 + $0x68] sm:$0xff]
  %v3502 = vld [vmem:[%s1 + $0x70] sm:$0xff]
  %v3503 = vld [vmem:[%s1 + $0x78] sm:$0xff]
  %v3504 = vld [vmem:[%s1 + $0x80] sm:$0xff]
  %v3505 = vld [vmem:[%s1 + $0x88] sm:$0xff]
  %v3506 = vld [vmem:[%s1 + $0x90] sm:$0xff]
  %v3507 = vld [vmem:[%s1 + $0x98] sm:$0xff]
  %v3508 = vld [vmem:[%s1 + $0xa0] sm:$0xff]
  %v3509 = vld [vmem:[%s1 + $0xa8] sm:$0xff]
  %v3510 = vld [vmem:[%s1 + $0xb0] sm:$0xff]
  %v3511 = vld [vmem:[%s1 + $0xb8] sm:$0xff]
  %v3512 = vld [vmem:[#allocation3] sm:$0xff]
  %v3513 = vld [vmem:[#allocation3 + $0x8] sm:$0xff]
  %v3514 = vld [vmem:[#allocation3 + $0x10] sm:$0xff]
  %v3515 = vld [vmem:[#allocation3 + $0x18] sm:$0xff]
  %v3516 = vld [vmem:[#allocation3 + $0x20] sm:$0xff]
  %v3517 = vld [vmem:[#allocation3 + $0x28] sm:$0xff]
  %v3518 = vld [vmem:[#allocation3 + $0x30] sm:$0xff]
  %v3519 = vld [vmem:[#allocation3 + $0x38] sm:$0xff]
  %v3520 = vld [vmem:[#allocation3 + $0x40] sm:$0xff]
  %v3521 = vld [vmem:[#allocation3 + $0x48] sm:$0xff]
  %v3522 = vld [vmem:[#allocation3 + $0x50] sm:$0xff]
  %v3523 = vld [vmem:[#allocation3 + $0x58] sm:$0xff]
  %v3524 = vld [vmem:[#allocation3 + $0x60] sm:$0xff]
  %v3525 = vld [vmem:[#allocation3 + $0x68] sm:$0xff]
  %v3526 = vld [vmem:[#allocation3 + $0x70] sm:$0xff]
  %v3527 = vld [vmem:[#allocation3 + $0x78] sm:$0xff]
  %v3528 = vld [vmem:[#allocation3 + $0x80] sm:$0xff]
  %v3529 = vld [vmem:[#allocation3 + $0x88] sm:$0xff]
  %v3530 = vld [vmem:[#allocation3 + $0x90] sm:$0xff]
  %v3531 = vld [vmem:[#allocation3 + $0x98] sm:$0xff]
  %v3532 = vld [vmem:[#allocation3 + $0xa0] sm:$0xff]
  %v3533 = vld [vmem:[#allocation3 + $0xa8] sm:$0xff]
  %v3534 = vld [vmem:[#allocation3 + $0xb0] sm:$0xff]
  %v3535 = vld [vmem:[#allocation3 + $0xb8] sm:$0xff]
  %v3536 = vld [vmem:[#allocation3 + $0xc0] sm:$0xff]
  %v3537 = vld [vmem:[#allocation3 + $0xc8] sm:$0xff]
  %v3538 = vld [vmem:[#allocation3 + $0xd0] sm:$0xff]
  %v3539 = vld [vmem:[#allocation3 + $0xd8] sm:$0xff]
  %v3540 = vld [vmem:[#allocation3 + $0xe0] sm:$0xff]
  %v3541 = vld [vmem:[#allocation3 + $0xe8] sm:$0xff]
  %v3542 = vld [vmem:[#allocation3 + $0xf0] sm:$0xff]
  %v3543 = vld [vmem:[#allocation3 + $0xf8] sm:$0xff]
  %v3544 = vld [vmem:[#allocation3 + $0x100] sm:$0xff]
  %v3545 = vld [vmem:[#allocation3 + $0x108] sm:$0xff]
  %v3546 = vld [vmem:[#allocation3 + $0x110] sm:$0xff]
  %v3547 = vld [vmem:[#allocation3 + $0x118] sm:$0xff]
  %v3548 = vld [vmem:[#allocation3 + $0x120] sm:$0xff]
  %v3549 = vld [vmem:[#allocation3 + $0x128] sm:$0xff]
  %v3550 = vld [vmem:[#allocation3 + $0x130] sm:$0xff]
  %v3551 = vld [vmem:[#allocation3 + $0x138] sm:$0xff]
  %v3552 = vld [vmem:[#allocation3 + $0x140] sm:$0xff]
  %v3553 = vld [vmem:[#allocation3 + $0x148] sm:$0xff]
  %v3554 = vld [vmem:[#allocation3 + $0x150] sm:$0xff]
  %v3555 = vld [vmem:[#allocation3 + $0x158] sm:$0xff]
  %v3556 = vld [vmem:[#allocation3 + $0x160] sm:$0xff]
  %v3557 = vld [vmem:[#allocation3 + $0x168] sm:$0xff]
  %v3558 = vld [vmem:[#allocation3 + $0x170] sm:$0xff]
  %v3559 = vld [vmem:[#allocation3 + $0x178] sm:$0xff]
  %v3560 = vld [vmem:[#allocation3 + $0x180] sm:$0xff]
  %v3561 = vld [vmem:[#allocation3 + $0x188] sm:$0xff]
  %v3562 = vld [vmem:[#allocation3 + $0x190] sm:$0xff]
  %v3563 = vld [vmem:[#allocation3 + $0x198] sm:$0xff]
  %v3564 = vld [vmem:[#allocation3 + $0x1a0] sm:$0xff]
  %v3565 = vld [vmem:[#allocation3 + $0x1a8] sm:$0xff]
  %v3566 = vld [vmem:[#allocation3 + $0x1b0] sm:$0xff]
  %v3567 = vld [vmem:[#allocation3 + $0x1b8] sm:$0xff]
  %v3568 = vld [vmem:[#allocation3 + $0x1c0] sm:$0xff]
  %v3569 = vld [vmem:[#allocation3 + $0x1c8] sm:$0xff]
  %v3570 = vld [vmem:[#allocation3 + $0x1d0] sm:$0xff]
  %v3571 = vld [vmem:[#allocation3 + $0x1d8] sm:$0xff]
  %v3572 = vld [vmem:[#allocation3 + $0x1e0] sm:$0xff]
  %v3573 = vld [vmem:[#allocation3 + $0x1e8] sm:$0xff]
  %v3574 = vld [vmem:[#allocation3 + $0x1f0] sm:$0xff]
  %v3575 = vld [vmem:[#allocation3 + $0x1f8] sm:$0xff]
  %v3576 = vld [vmem:[#allocation3 + $0x200] sm:$0xff]
  %v3577 = vld [vmem:[#allocation3 + $0x208] sm:$0xff]
  %v3578 = vld [vmem:[#allocation3 + $0x210] sm:$0xff]
  %v3579 = vld [vmem:[#allocation3 + $0x218] sm:$0xff]
  %v3580 = vld [vmem:[#allocation3 + $0x220] sm:$0xff]
  %v3581 = vld [vmem:[#allocation3 + $0x228] sm:$0xff]
  %v3582 = vld [vmem:[#allocation3 + $0x230] sm:$0xff]
  %v3583 = vld [vmem:[#allocation3 + $0x238] sm:$0xff]
  %v3584 = vld [vmem:[#allocation3 + $0x240] sm:$0xff]
  %v3585 = vld [vmem:[#allocation3 + $0x248] sm:$0xff]
  %v3586 = vld [vmem:[#allocation3 + $0x250] sm:$0xff]
  %v3587 = vld [vmem:[#allocation3 + $0x258] sm:$0xff]
  %v3588 = vld [vmem:[#allocation3 + $0x260] sm:$0xff]
  %v3589 = vld [vmem:[#allocation3 + $0x268] sm:$0xff]
  %v3590 = vld [vmem:[#allocation3 + $0x270] sm:$0xff]
  %v3591 = vld [vmem:[#allocation3 + $0x278] sm:$0xff]
  %v3592 = vld [vmem:[#allocation3 + $0x280] sm:$0xff]
  %v3593 = vld [vmem:[#allocation3 + $0x288] sm:$0xff]
  %v3594 = vld [vmem:[#allocation3 + $0x290] sm:$0xff]
  %v3595 = vld [vmem:[#allocation3 + $0x298] sm:$0xff]
  %v3596 = vld [vmem:[#allocation3 + $0x2a0] sm:$0xff]
  %v3597 = vld [vmem:[#allocation3 + $0x2a8] sm:$0xff]
  %v3598 = vld [vmem:[#allocation3 + $0x2b0] sm:$0xff]
  %v3599 = vld [vmem:[#allocation3 + $0x2b8] sm:$0xff]
  %v3600 = vld [vmem:[#allocation3 + $0x2c0] sm:$0xff]
  %v3601 = vld [vmem:[#allocation3 + $0x2c8] sm:$0xff]
  %v3602 = vld [vmem:[#allocation3 + $0x2d0] sm:$0xff]
  %v3603 = vld [vmem:[#allocation3 + $0x2d8] sm:$0xff]
  %v3604 = vld [vmem:[#allocation3 + $0x2e0] sm:$0xff]
  %v3605 = vld [vmem:[#allocation3 + $0x2e8] sm:$0xff]
  %v3606 = vld [vmem:[#allocation3 + $0x2f0] sm:$0xff]
  %v3607 = vld [vmem:[#allocation3 + $0x2f8] sm:$0xff]
  %v3608 = vld [vmem:[#allocation3 + $0x300] sm:$0xff]
  %v3609 = vld [vmem:[#allocation3 + $0x308] sm:$0xff]
  %v3610 = vld [vmem:[#allocation3 + $0x310] sm:$0xff]
  %v3611 = vld [vmem:[#allocation3 + $0x318] sm:$0xff]
  %v3612 = vld [vmem:[#allocation3 + $0x320] sm:$0xff]
  %v3613 = vld [vmem:[#allocation3 + $0x328] sm:$0xff]
  %v3614 = vld [vmem:[#allocation3 + $0x330] sm:$0xff]
  %v3615 = vld [vmem:[#allocation3 + $0x338] sm:$0xff]
  %v3616 = vld [vmem:[#allocation3 + $0x340] sm:$0xff]
  %v3617 = vld [vmem:[#allocation3 + $0x348] sm:$0xff]
  %v3618 = vld [vmem:[#allocation3 + $0x350] sm:$0xff]
  %v3619 = vld [vmem:[#allocation3 + $0x358] sm:$0xff]
  %v3620 = vld [vmem:[#allocation3 + $0x360] sm:$0xff]
  %v3621 = vld [vmem:[#allocation3 + $0x368] sm:$0xff]
  %v3622 = vld [vmem:[#allocation3 + $0x370] sm:$0xff]
  %v3623 = vld [vmem:[#allocation3 + $0x378] sm:$0xff]
  %v3624 = vld [vmem:[#allocation3 + $0x380] sm:$0xff]
  %v3625 = vld [vmem:[#allocation3 + $0x388] sm:$0xff]
  %v3626 = vld [vmem:[#allocation3 + $0x390] sm:$0xff]
  %v3627 = vld [vmem:[#allocation3 + $0x398] sm:$0xff]
  %v3628 = vld [vmem:[#allocation3 + $0x3a0] sm:$0xff]
  %v3629 = vld [vmem:[#allocation3 + $0x3a8] sm:$0xff]
  %v3630 = vld [vmem:[#allocation3 + $0x3b0] sm:$0xff]
  %v3631 = vld [vmem:[#allocation3 + $0x3b8] sm:$0xff]
  %v3632 = vld [vmem:[#allocation3 + $0x3c0] sm:$0xff]
  %v3633 = vld [vmem:[#allocation3 + $0x3c8] sm:$0xff]
  %v3634 = vld [vmem:[#allocation3 + $0x3d0] sm:$0xff]
  %v3635 = vld [vmem:[#allocation3 + $0x3d8] sm:$0xff]
  %v3636 = vld [vmem:[#allocation3 + $0x3e0] sm:$0xff]
  %v3637 = vld [vmem:[#allocation3 + $0x3e8] sm:$0xff]
  %v3638 = vld [vmem:[#allocation3 + $0x3f0] sm:$0xff]
  %v3639 = vld [vmem:[#allocation3 + $0x3f8] sm:$0xff]
  %v3640 = vld [vmem:[#allocation3 + $0x400] sm:$0xff]
  %v3641 = vld [vmem:[#allocation3 + $0x408] sm:$0xff]
  %v3642 = vld [vmem:[#allocation3 + $0x410] sm:$0xff]
  %v3643 = vld [vmem:[#allocation3 + $0x418] sm:$0xff]
  %v3644 = vld [vmem:[#allocation3 + $0x420] sm:$0xff]
  %v3645 = vld [vmem:[#allocation3 + $0x428] sm:$0xff]
  %v3646 = vld [vmem:[#allocation3 + $0x430] sm:$0xff]
  %v3647 = vld [vmem:[#allocation3 + $0x438] sm:$0xff]
  %v3648 = vld [vmem:[#allocation3 + $0x440] sm:$0xff]
  %v3649 = vld [vmem:[#allocation3 + $0x448] sm:$0xff]
  %v3650 = vld [vmem:[#allocation3 + $0x450] sm:$0xff]
  %v3651 = vld [vmem:[#allocation3 + $0x458] sm:$0xff]
  %v3652 = vld [vmem:[#allocation3 + $0x460] sm:$0xff]
  %v3653 = vld [vmem:[#allocation3 + $0x468] sm:$0xff]
  %v3654 = vld [vmem:[#allocation3 + $0x470] sm:$0xff]
  %v3655 = vld [vmem:[#allocation3 + $0x478] sm:$0xff]
  %v3656 = vld [vmem:[#allocation3 + $0x480] sm:$0xff]
  %v3657 = vld [vmem:[#allocation3 + $0x488] sm:$0xff]
  %v3658 = vld [vmem:[#allocation3 + $0x490] sm:$0xff]
  %v3660 = vsel %vm1603, %v3489, 0
  %v3663 = vsel %vm1603, %v3491, 0
  %v3666 = vsel %vm1603, %v3493, 0
  %v3669 = vsel %vm1603, %v3495, 0
  %v3672 = vsel %vm1603, %v3497, 0
  %v3675 = vsel %vm1603, %v3499, 0
  %v3678 = vsel %vm1603, %v3501, 0
  %v3681 = vsel %vm1603, %v3503, 0
  %v3684 = vsel %vm1603, %v3505, 0
  %v3687 = vsel %vm1603, %v3507, 0
  %v3690 = vsel %vm1603, %v3509, 0
  %v3693 = vsel %vm1603, %v3511, 0
  %3695 = vmatprep.subr.mxu0 %v3618
  %3696 = vmatpush1.msra.mxu0 %v3617
  %3697 = vmatprep.subr.mxu0 %v3611
  %3698 = vmatpush1.msra.mxu0 %v3610
  %3699 = vmatprep.subr.mxu0 %v3604
  %3700 = vmatpush1.msra.mxu0 %v3603
  %3701 = vmatprep.subr.mxu0 %v3597
  %3702 = vmatpush1.msra.mxu0 %v3596
  %3703 = vmatprep.subr.mxu0 %v3590
  %3704 = vmatpush1.msra.mxu0 %v3589
  %3705 = vmatprep.subr.mxu0 %v3583
  %3706 = vmatpush1.msra.mxu0 %v3582
  %3707 = vmatprep.subr.mxu0 %v3576
  %3708 = vmatpush1.msra.mxu0 %v3575
  %3709 = vmatprep.subr.mxu0 %v3569
  %3710 = vmatpush1.msra.mxu0 %v3568
  %3711 = vmatprep.subr.mxu0 %v3562
  %3712 = vmatpush1.msra.mxu0 %v3561
  %3713 = vmatprep.subr.mxu0 %v3555
  %3714 = vmatpush1.msra.mxu0 %v3554
  %3715 = vmatprep.subr.mxu0 %v3548
  %3716 = vmatpush1.msra.mxu0 %v3547
  %3717 = vmatprep.subr.mxu0 %v3541
  %3718 = vmatpush1.msra.mxu0 %v3540
  %3719 = vmatprep.subr.mxu0 %v3534
  %3720 = vmatpush1.msra.mxu0 %v3533
  %3721 = vmatprep.subr.mxu0 %v3527
  %3722 = vmatpush1.msra.mxu0 %v3526
  %3723 = vmatprep.subr.mxu0 %v3520
  %3724 = vmatpush1.msra.mxu0 %v3519
  %3725 = vmatprep.subr.mxu0 %v3513
  %3726 = vmatpush1.msra.mxu0 %v3512
  %3727 = vmatprep.subr.mxu0 0.0
  %3728 = vmatpush2.msra.mxu0 0.0
  %3729 = vmatprep.subr.mxu0 0.0
  %3730 = vmatpush2.msra.mxu0 0.0
  %3731 = vmatprep.subr.mxu0 0.0
  %3732 = vmatpush2.msra.mxu0 0.0
  %3733 = vmatprep.subr.mxu0 0.0
  %3734 = vmatpush2.msra.mxu0 0.0
  %3735 = vmatprep.subr.mxu0 0.0
  %3736 = vmatpush2.msra.mxu0 0.0
  %3737 = vmatprep.subr.mxu0 0.0
  %3738 = vmatpush2.msra.mxu0 0.0
  %3739 = vmatprep.subr.mxu0 0.0
  %3740 = vmatpush2.msra.mxu0 0.0
  %3741 = vmatprep.subr.mxu0 0.0
  %3742 = vmatpush2.msra.mxu0 0.0
  %3743 = vmatprep.subr.mxu0 0.0
  %3744 = vmatpush2.msra.mxu0 0.0
  %3745 = vmatprep.subr.mxu0 0.0
  %3746 = vmatpush2.msra.mxu0 0.0
  %3747 = vmatprep.subr.mxu0 0.0
  %3748 = vmatpush2.msra.mxu0 0.0
  %3749 = vmatprep.subr.mxu0 %v3653
  %3750 = vmatpush2.msra.mxu0 %v3652
  %3751 = vmatprep.subr.mxu0 %v3646
  %3752 = vmatpush2.msra.mxu0 %v3645
  %3753 = vmatprep.subr.mxu0 %v3639
  %3754 = vmatpush2.msra.mxu0 %v3638
  %3755 = vmatprep.subr.mxu0 %v3632
  %3756 = vmatpush2.msra.mxu0 %v3631
  %3757 = vmatprep.subr.mxu0 %v3625
  %3758 = vmatpush2.msra.mxu0 %v3624
  %3759 = vmatprep.mubr.f32.mxu0 %v3660
  %3760 = vmatmul.mubr.f32.gmra.mxu0 %v3488
  %v3761 = vpop.f32.mrf.mxu0
  %v3762 = vadd.f32 0.0, %v3761
  %v3763 = vpop.f32.mrf.mxu0
  %v3764 = vadd.f32 0.0, %v3763
  %3765 = vmatprep.mubr.f32.mxu0 %v3663
  %3766 = vmatmul.mubr.f32.gmra.mxu0 %v3490
  %v3767 = vpop.f32.mrf.mxu0
  %v3768 = vadd.f32 0.0, %v3767
  %v3769 = vpop.f32.mrf.mxu0
  %v3770 = vadd.f32 0.0, %v3769
  %3771 = vmatprep.mubr.f32.mxu0 %v3666
  %3772 = vmatmul.mubr.f32.gmra.mxu0 %v3492
  %v3773 = vpop.f32.mrf.mxu0
  %v3774 = vadd.f32 0.0, %v3773
  %v3775 = vpop.f32.mrf.mxu0
  %v3776 = vadd.f32 0.0, %v3775
  %3777 = vmatprep.mubr.f32.mxu0 %v3669
  %3778 = vmatmul.mubr.f32.gmra.mxu0 %v3494
  %v3779 = vpop.f32.mrf.mxu0
  %v3780 = vadd.f32 0.0, %v3779
  %v3781 = vpop.f32.mrf.mxu0
  %v3782 = vadd.f32 0.0, %v3781
  %3783 = vmatprep.mubr.f32.mxu0 %v3672
  %3784 = vmatmul.mubr.f32.gmra.mxu0 %v3496
  %v3785 = vpop.f32.mrf.mxu0
  %v3786 = vadd.f32 0.0, %v3785
  %v3787 = vpop.f32.mrf.mxu0
  %v3788 = vadd.f32 0.0, %v3787
  %3789 = vmatprep.mubr.f32.mxu0 %v3675
  %3790 = vmatmul.mubr.f32.gmra.mxu0 %v3498
  %v3791 = vpop.f32.mrf.mxu0
  %v3792 = vadd.f32 0.0, %v3791
  %v3793 = vpop.f32.mrf.mxu0
  %v3794 = vadd.f32 0.0, %v3793
  %3795 = vmatprep.mubr.f32.mxu0 %v3678
  %3796 = vmatmul.mubr.f32.gmra.mxu0 %v3500
  %v3797 = vpop.f32.mrf.mxu0
  %v3798 = vadd.f32 0.0, %v3797
  %v3799 = vpop.f32.mrf.mxu0
  %v3800 = vadd.f32 0.0, %v3799
  %3801 = vmatprep.mubr.f32.mxu0 %v3681
  %3802 = vmatmul.mubr.f32.gmra.mxu0 %v3502
  %v3803 = vpop.f32.mrf.mxu0
  %v3804 = vadd.f32 0.0, %v3803
  %v3805 = vpop.f32.mrf.mxu0
  %v3806 = vadd.f32 0.0, %v3805
  %3807 = vmatprep.mubr.f32.mxu0 %v3684
  %3808 = vmatmul.mubr.f32.gmra.mxu0 %v3504
  %v3809 = vpop.f32.mrf.mxu0
  %v3810 = vadd.f32 0.0, %v3809
  %v3811 = vpop.f32.mrf.mxu0
  %v3812 = vadd.f32 0.0, %v3811
  %3813 = vmatprep.mubr.f32.mxu0 %v3687
  %3814 = vmatmul.mubr.f32.gmra.mxu0 %v3506
  %v3815 = vpop.f32.mrf.mxu0
  %v3816 = vadd.f32 0.0, %v3815
  %v3817 = vpop.f32.mrf.mxu0
  %v3818 = vadd.f32 0.0, %v3817
  %3819 = vmatprep.mubr.f32.mxu0 %v3690
  %3820 = vmatmul.mubr.f32.gmra.mxu0 %v3508
  %v3821 = vpop.f32.mrf.mxu0
  %v3822 = vadd.f32 0.0, %v3821
  %v3823 = vpop.f32.mrf.mxu0
  %v3824 = vadd.f32 0.0, %v3823
  %3825 = vmatprep.mubr.f32.mxu0 %v3693
  %3826 = vmatmul.mubr.f32.gmra.mxu0 %v3510
  %v3827 = vpop.f32.mrf.mxu0
  %v3828 = vadd.f32 0.0, %v3827
  %v3829 = vpop.f32.mrf.mxu0
  %v3830 = vadd.f32 0.0, %v3829
  %3831 = vdwg.mxu0
  %3832 = vmatprep.subr.mxu0 %v3620
  %3833 = vmatpush1.msra.mxu0 %v3619
  %3834 = vmatprep.subr.mxu0 %v3613
  %3835 = vmatpush1.msra.mxu0 %v3612
  %3836 = vmatprep.subr.mxu0 %v3606
  %3837 = vmatpush1.msra.mxu0 %v3605
  %3838 = vmatprep.subr.mxu0 %v3599
  %3839 = vmatpush1.msra.mxu0 %v3598
  %3840 = vmatprep.subr.mxu0 %v3592
  %3841 = vmatpush1.msra.mxu0 %v3591
  %3842 = vmatprep.subr.mxu0 %v3585
  %3843 = vmatpush1.msra.mxu0 %v3584
  %3844 = vmatprep.subr.mxu0 %v3578
  %3845 = vmatpush1.msra.mxu0 %v3577
  %3846 = vmatprep.subr.mxu0 %v3571
  %3847 = vmatpush1.msra.mxu0 %v3570
  %3848 = vmatprep.subr.mxu0 %v3564
  %3849 = vmatpush1.msra.mxu0 %v3563
  %3850 = vmatprep.subr.mxu0 %v3557
  %3851 = vmatpush1.msra.mxu0 %v3556
  %3852 = vmatprep.subr.mxu0 %v3550
  %3853 = vmatpush1.msra.mxu0 %v3549
  %3854 = vmatprep.subr.mxu0 %v3543
  %3855 = vmatpush1.msra.mxu0 %v3542
  %3856 = vmatprep.subr.mxu0 %v3536
  %3857 = vmatpush1.msra.mxu0 %v3535
  %3858 = vmatprep.subr.mxu0 %v3529
  %3859 = vmatpush1.msra.mxu0 %v3528
  %3860 = vmatprep.subr.mxu0 %v3522
  %3861 = vmatpush1.msra.mxu0 %v3521
  %3862 = vmatprep.subr.mxu0 %v3515
  %3863 = vmatpush1.msra.mxu0 %v3514
  %3864 = vmatprep.subr.mxu0 0.0
  %3865 = vmatpush2.msra.mxu0 0.0
  %3866 = vmatprep.subr.mxu0 0.0
  %3867 = vmatpush2.msra.mxu0 0.0
  %3868 = vmatprep.subr.mxu0 0.0
  %3869 = vmatpush2.msra.mxu0 0.0
  %3870 = vmatprep.subr.mxu0 0.0
  %3871 = vmatpush2.msra.mxu0 0.0
  %3872 = vmatprep.subr.mxu0 0.0
  %3873 = vmatpush2.msra.mxu0 0.0
  %3874 = vmatprep.subr.mxu0 0.0
  %3875 = vmatpush2.msra.mxu0 0.0
  %3876 = vmatprep.subr.mxu0 0.0
  %3877 = vmatpush2.msra.mxu0 0.0
  %3878 = vmatprep.subr.mxu0 0.0
  %3879 = vmatpush2.msra.mxu0 0.0
  %3880 = vmatprep.subr.mxu0 0.0
  %3881 = vmatpush2.msra.mxu0 0.0
  %3882 = vmatprep.subr.mxu0 0.0
  %3883 = vmatpush2.msra.mxu0 0.0
  %3884 = vmatprep.subr.mxu0 0.0
  %3885 = vmatpush2.msra.mxu0 0.0
  %3886 = vmatprep.subr.mxu0 %v3655
  %3887 = vmatpush2.msra.mxu0 %v3654
  %3888 = vmatprep.subr.mxu0 %v3648
  %3889 = vmatpush2.msra.mxu0 %v3647
  %3890 = vmatprep.subr.mxu0 %v3641
  %3891 = vmatpush2.msra.mxu0 %v3640
  %3892 = vmatprep.subr.mxu0 %v3634
  %3893 = vmatpush2.msra.mxu0 %v3633
  %3894 = vmatprep.subr.mxu0 %v3627
  %3895 = vmatpush2.msra.mxu0 %v3626
  %3896 = vmatprep.mubr.f32.mxu0 %v3660
  %3897 = vmatmul.mubr.f32.gmra.mxu0 %v3488
  %v3898 = vpop.f32.mrf.mxu0
  %v3899 = vadd.f32 0.0, %v3898
  %v3900 = vpop.f32.mrf.mxu0
  %v3901 = vadd.f32 0.0, %v3900
  %3902 = vmatprep.mubr.f32.mxu0 %v3663
  %3903 = vmatmul.mubr.f32.gmra.mxu0 %v3490
  %v3904 = vpop.f32.mrf.mxu0
  %v3905 = vadd.f32 0.0, %v3904
  %v3906 = vpop.f32.mrf.mxu0
  %v3907 = vadd.f32 0.0, %v3906
  %3908 = vmatprep.mubr.f32.mxu0 %v3666
  %3909 = vmatmul.mubr.f32.gmra.mxu0 %v3492
  %v3910 = vpop.f32.mrf.mxu0
  %v3911 = vadd.f32 0.0, %v3910
  %v3912 = vpop.f32.mrf.mxu0
  %v3913 = vadd.f32 0.0, %v3912
  %3914 = vmatprep.mubr.f32.mxu0 %v3669
  %3915 = vmatmul.mubr.f32.gmra.mxu0 %v3494
  %v3916 = vpop.f32.mrf.mxu0
  %v3917 = vadd.f32 0.0, %v3916
  %v3918 = vpop.f32.mrf.mxu0
  %v3919 = vadd.f32 0.0, %v3918
  %3920 = vmatprep.mubr.f32.mxu0 %v3672
  %3921 = vmatmul.mubr.f32.gmra.mxu0 %v3496
  %v3922 = vpop.f32.mrf.mxu0
  %v3923 = vadd.f32 0.0, %v3922
  %v3924 = vpop.f32.mrf.mxu0
  %v3925 = vadd.f32 0.0, %v3924
  %3926 = vmatprep.mubr.f32.mxu0 %v3675
  %3927 = vmatmul.mubr.f32.gmra.mxu0 %v3498
  %v3928 = vpop.f32.mrf.mxu0
  %v3929 = vadd.f32 0.0, %v3928
  %v3930 = vpop.f32.mrf.mxu0
  %v3931 = vadd.f32 0.0, %v3930
  %3932 = vmatprep.mubr.f32.mxu0 %v3678
  %3933 = vmatmul.mubr.f32.gmra.mxu0 %v3500
  %v3934 = vpop.f32.mrf.mxu0
  %v3935 = vadd.f32 0.0, %v3934
  %v3936 = vpop.f32.mrf.mxu0
  %v3937 = vadd.f32 0.0, %v3936
  %3938 = vmatprep.mubr.f32.mxu0 %v3681
  %3939 = vmatmul.mubr.f32.gmra.mxu0 %v3502
  %v3940 = vpop.f32.mrf.mxu0
  %v3941 = vadd.f32 0.0, %v3940
  %v3942 = vpop.f32.mrf.mxu0
  %v3943 = vadd.f32 0.0, %v3942
  %3944 = vmatprep.mubr.f32.mxu0 %v3684
  %3945 = vmatmul.mubr.f32.gmra.mxu0 %v3504
  %v3946 = vpop.f32.mrf.mxu0
  %v3947 = vadd.f32 0.0, %v3946
  %v3948 = vpop.f32.mrf.mxu0
  %v3949 = vadd.f32 0.0, %v3948
  %3950 = vmatprep.mubr.f32.mxu0 %v3687
  %3951 = vmatmul.mubr.f32.gmra.mxu0 %v3506
  %v3952 = vpop.f32.mrf.mxu0
  %v3953 = vadd.f32 0.0, %v3952
  %v3954 = vpop.f32.mrf.mxu0
  %v3955 = vadd.f32 0.0, %v3954
  %3956 = vmatprep.mubr.f32.mxu0 %v3690
  %3957 = vmatmul.mubr.f32.gmra.mxu0 %v3508
  %v3958 = vpop.f32.mrf.mxu0
  %v3959 = vadd.f32 0.0, %v3958
  %v3960 = vpop.f32.mrf.mxu0
  %v3961 = vadd.f32 0.0, %v3960
  %3962 = vmatprep.mubr.f32.mxu0 %v3693
  %3963 = vmatmul.mubr.f32.gmra.mxu0 %v3510
  %v3964 = vpop.f32.mrf.mxu0
  %v3965 = vadd.f32 0.0, %v3964
  %v3966 = vpop.f32.mrf.mxu0
  %v3967 = vadd.f32 0.0, %v3966
  %3968 = vdwg.mxu0
  %3969 = vmatprep.subr.mxu0 %v3622
  %3970 = vmatpush1.msra.mxu0 %v3621
  %3971 = vmatprep.subr.mxu0 %v3615
  %3972 = vmatpush1.msra.mxu0 %v3614
  %3973 = vmatprep.subr.mxu0 %v3608
  %3974 = vmatpush1.msra.mxu0 %v3607
  %3975 = vmatprep.subr.mxu0 %v3601
  %3976 = vmatpush1.msra.mxu0 %v3600
  %3977 = vmatprep.subr.mxu0 %v3594
  %3978 = vmatpush1.msra.mxu0 %v3593
  %3979 = vmatprep.subr.mxu0 %v3587
  %3980 = vmatpush1.msra.mxu0 %v3586
  %3981 = vmatprep.subr.mxu0 %v3580
  %3982 = vmatpush1.msra.mxu0 %v3579
  %3983 = vmatprep.subr.mxu0 %v3573
  %3984 = vmatpush1.msra.mxu0 %v3572
  %3985 = vmatprep.subr.mxu0 %v3566
  %3986 = vmatpush1.msra.mxu0 %v3565
  %3987 = vmatprep.subr.mxu0 %v3559
  %3988 = vmatpush1.msra.mxu0 %v3558
  %3989 = vmatprep.subr.mxu0 %v3552
  %3990 = vmatpush1.msra.mxu0 %v3551
  %3991 = vmatprep.subr.mxu0 %v3545
  %3992 = vmatpush1.msra.mxu0 %v3544
  %3993 = vmatprep.subr.mxu0 %v3538
  %3994 = vmatpush1.msra.mxu0 %v3537
  %3995 = vmatprep.subr.mxu0 %v3531
  %3996 = vmatpush1.msra.mxu0 %v3530
  %3997 = vmatprep.subr.mxu0 %v3524
  %3998 = vmatpush1.msra.mxu0 %v3523
  %3999 = vmatprep.subr.mxu0 %v3517
  %4000 = vmatpush1.msra.mxu0 %v3516
  %4001 = vmatprep.subr.mxu0 0.0
  %4002 = vmatpush2.msra.mxu0 0.0
  %4003 = vmatprep.subr.mxu0 0.0
  %4004 = vmatpush2.msra.mxu0 0.0
  %4005 = vmatprep.subr.mxu0 0.0
  %4006 = vmatpush2.msra.mxu0 0.0
  %4007 = vmatprep.subr.mxu0 0.0
  %4008 = vmatpush2.msra.mxu0 0.0
  %4009 = vmatprep.subr.mxu0 0.0
  %4010 = vmatpush2.msra.mxu0 0.0
  %4011 = vmatprep.subr.mxu0 0.0
  %4012 = vmatpush2.msra.mxu0 0.0
  %4013 = vmatprep.subr.mxu0 0.0
  %4014 = vmatpush2.msra.mxu0 0.0
  %4015 = vmatprep.subr.mxu0 0.0
  %4016 = vmatpush2.msra.mxu0 0.0
  %4017 = vmatprep.subr.mxu0 0.0
  %4018 = vmatpush2.msra.mxu0 0.0
  %4019 = vmatprep.subr.mxu0 0.0
  %4020 = vmatpush2.msra.mxu0 0.0
  %4021 = vmatprep.subr.mxu0 0.0
  %4022 = vmatpush2.msra.mxu0 0.0
  %4023 = vmatprep.subr.mxu0 %v3657
  %4024 = vmatpush2.msra.mxu0 %v3656
  %4025 = vmatprep.subr.mxu0 %v3650
  %4026 = vmatpush2.msra.mxu0 %v3649
  %4027 = vmatprep.subr.mxu0 %v3643
  %4028 = vmatpush2.msra.mxu0 %v3642
  %4029 = vmatprep.subr.mxu0 %v3636
  %4030 = vmatpush2.msra.mxu0 %v3635
  %4031 = vmatprep.subr.mxu0 %v3629
  %4032 = vmatpush2.msra.mxu0 %v3628
  %4033 = vmatprep.mubr.f32.mxu0 %v3660
  %4034 = vmatmul.mubr.f32.gmra.mxu0 %v3488
  %v4035 = vpop.f32.mrf.mxu0
  %v4036 = vadd.f32 0.0, %v4035
  %v4037 = vpop.f32.mrf.mxu0
  %v4038 = vadd.f32 0.0, %v4037
  %4039 = vmatprep.mubr.f32.mxu0 %v3663
  %4040 = vmatmul.mubr.f32.gmra.mxu0 %v3490
  %v4041 = vpop.f32.mrf.mxu0
  %v4042 = vadd.f32 0.0, %v4041
  %v4043 = vpop.f32.mrf.mxu0
  %v4044 = vadd.f32 0.0, %v4043
  %4045 = vmatprep.mubr.f32.mxu0 %v3666
  %4046 = vmatmul.mubr.f32.gmra.mxu0 %v3492
  %v4047 = vpop.f32.mrf.mxu0
  %v4048 = vadd.f32 0.0, %v4047
  %v4049 = vpop.f32.mrf.mxu0
  %v4050 = vadd.f32 0.0, %v4049
  %4051 = vmatprep.mubr.f32.mxu0 %v3669
  %4052 = vmatmul.mubr.f32.gmra.mxu0 %v3494
  %v4053 = vpop.f32.mrf.mxu0
  %v4054 = vadd.f32 0.0, %v4053
  %v4055 = vpop.f32.mrf.mxu0
  %v4056 = vadd.f32 0.0, %v4055
  %4057 = vmatprep.mubr.f32.mxu0 %v3672
  %4058 = vmatmul.mubr.f32.gmra.mxu0 %v3496
  %v4059 = vpop.f32.mrf.mxu0
  %v4060 = vadd.f32 0.0, %v4059
  %v4061 = vpop.f32.mrf.mxu0
  %v4062 = vadd.f32 0.0, %v4061
  %4063 = vmatprep.mubr.f32.mxu0 %v3675
  %4064 = vmatmul.mubr.f32.gmra.mxu0 %v3498
  %v4065 = vpop.f32.mrf.mxu0
  %v4066 = vadd.f32 0.0, %v4065
  %v4067 = vpop.f32.mrf.mxu0
  %v4068 = vadd.f32 0.0, %v4067
  %4069 = vmatprep.mubr.f32.mxu0 %v3678
  %4070 = vmatmul.mubr.f32.gmra.mxu0 %v3500
  %v4071 = vpop.f32.mrf.mxu0
  %v4072 = vadd.f32 0.0, %v4071
  %v4073 = vpop.f32.mrf.mxu0
  %v4074 = vadd.f32 0.0, %v4073
  %4075 = vmatprep.mubr.f32.mxu0 %v3681
  %4076 = vmatmul.mubr.f32.gmra.mxu0 %v3502
  %v4077 = vpop.f32.mrf.mxu0
  %v4078 = vadd.f32 0.0, %v4077
  %v4079 = vpop.f32.mrf.mxu0
  %v4080 = vadd.f32 0.0, %v4079
  %4081 = vmatprep.mubr.f32.mxu0 %v3684
  %4082 = vmatmul.mubr.f32.gmra.mxu0 %v3504
  %v4083 = vpop.f32.mrf.mxu0
  %v4084 = vadd.f32 0.0, %v4083
  %v4085 = vpop.f32.mrf.mxu0
  %v4086 = vadd.f32 0.0, %v4085
  %4087 = vmatprep.mubr.f32.mxu0 %v3687
  %4088 = vmatmul.mubr.f32.gmra.mxu0 %v3506
  %v4089 = vpop.f32.mrf.mxu0
  %v4090 = vadd.f32 0.0, %v4089
  %v4091 = vpop.f32.mrf.mxu0
  %v4092 = vadd.f32 0.0, %v4091
  %4093 = vmatprep.mubr.f32.mxu0 %v3690
  %4094 = vmatmul.mubr.f32.gmra.mxu0 %v3508
  %v4095 = vpop.f32.mrf.mxu0
  %v4096 = vadd.f32 0.0, %v4095
  %v4097 = vpop.f32.mrf.mxu0
  %v4098 = vadd.f32 0.0, %v4097
  %4099 = vmatprep.mubr.f32.mxu0 %v3693
  %4100 = vmatmul.mubr.f32.gmra.mxu0 %v3510
  %v4101 = vpop.f32.mrf.mxu0
  %v4102 = vadd.f32 0.0, %v4101
  %v4103 = vpop.f32.mrf.mxu0
  %v4104 = vadd.f32 0.0, %v4103
  %4105 = vdwg.mxu0
  %4106 = vmatprep.subr.mxu0 0.0
  %4107 = vmatpush1.msra.mxu0 %v3623
  %4108 = vmatprep.subr.mxu0 0.0
  %4109 = vmatpush1.msra.mxu0 %v3616
  %4110 = vmatprep.subr.mxu0 0.0
  %4111 = vmatpush1.msra.mxu0 %v3609
  %4112 = vmatprep.subr.mxu0 0.0
  %4113 = vmatpush1.msra.mxu0 %v3602
  %4114 = vmatprep.subr.mxu0 0.0
  %4115 = vmatpush1.msra.mxu0 %v3595
  %4116 = vmatprep.subr.mxu0 0.0
  %4117 = vmatpush1.msra.mxu0 %v3588
  %4118 = vmatprep.subr.mxu0 0.0
  %4119 = vmatpush1.msra.mxu0 %v3581
  %4120 = vmatprep.subr.mxu0 0.0
  %4121 = vmatpush1.msra.mxu0 %v3574
  %4122 = vmatprep.subr.mxu0 0.0
  %4123 = vmatpush1.msra.mxu0 %v3567
  %4124 = vmatprep.subr.mxu0 0.0
  %4125 = vmatpush1.msra.mxu0 %v3560
  %4126 = vmatprep.subr.mxu0 0.0
  %4127 = vmatpush1.msra.mxu0 %v3553
  %4128 = vmatprep.subr.mxu0 0.0
  %4129 = vmatpush1.msra.mxu0 %v3546
  %4130 = vmatprep.subr.mxu0 0.0
  %4131 = vmatpush1.msra.mxu0 %v3539
  %4132 = vmatprep.subr.mxu0 0.0
  %4133 = vmatpush1.msra.mxu0 %v3532
  %4134 = vmatprep.subr.mxu0 0.0
  %4135 = vmatpush1.msra.mxu0 %v3525
  %4136 = vmatprep.subr.mxu0 0.0
  %4137 = vmatpush1.msra.mxu0 %v3518
  %4138 = vmatprep.subr.mxu0 0.0
  %4139 = vmatpush2.msra.mxu0 0.0
  %4140 = vmatprep.subr.mxu0 0.0
  %4141 = vmatpush2.msra.mxu0 0.0
  %4142 = vmatprep.subr.mxu0 0.0
  %4143 = vmatpush2.msra.mxu0 0.0
  %4144 = vmatprep.subr.mxu0 0.0
  %4145 = vmatpush2.msra.mxu0 0.0
  %4146 = vmatprep.subr.mxu0 0.0
  %4147 = vmatpush2.msra.mxu0 0.0
  %4148 = vmatprep.subr.mxu0 0.0
  %4149 = vmatpush2.msra.mxu0 0.0
  %4150 = vmatprep.subr.mxu0 0.0
  %4151 = vmatpush2.msra.mxu0 0.0
  %4152 = vmatprep.subr.mxu0 0.0
  %4153 = vmatpush2.msra.mxu0 0.0
  %4154 = vmatprep.subr.mxu0 0.0
  %4155 = vmatpush2.msra.mxu0 0.0
  %4156 = vmatprep.subr.mxu0 0.0
  %4157 = vmatpush2.msra.mxu0 0.0
  %4158 = vmatprep.subr.mxu0 0.0
  %4159 = vmatpush2.msra.mxu0 0.0
  %4160 = vmatprep.subr.mxu0 0.0
  %4161 = vmatpush2.msra.mxu0 %v3658
  %4162 = vmatprep.subr.mxu0 0.0
  %4163 = vmatpush2.msra.mxu0 %v3651
  %4164 = vmatprep.subr.mxu0 0.0
  %4165 = vmatpush2.msra.mxu0 %v3644
  %4166 = vmatprep.subr.mxu0 0.0
  %4167 = vmatpush2.msra.mxu0 %v3637
  %4168 = vmatprep.subr.mxu0 0.0
  %4169 = vmatpush2.msra.mxu0 %v3630
  %4170 = vmatprep.mubr.f32.mxu0 %v3660
  %4171 = vmatmul.mubr.f32.gmra.mxu0 %v3488
  %v4172 = vpop.f32.mrf.mxu0
  %v4173 = vadd.f32 0.0, %v4172
  %v4174 = vpop.f32.mrf.mxu0
  %4175 = vmatprep.mubr.f32.mxu0 %v3663
  %4176 = vmatmul.mubr.f32.gmra.mxu0 %v3490
  %v4177 = vpop.f32.mrf.mxu0
  %v4178 = vadd.f32 0.0, %v4177
  %v4179 = vpop.f32.mrf.mxu0
  %4180 = vmatprep.mubr.f32.mxu0 %v3666
  %4181 = vmatmul.mubr.f32.gmra.mxu0 %v3492
  %v4182 = vpop.f32.mrf.mxu0
  %v4183 = vadd.f32 0.0, %v4182
  %v4184 = vpop.f32.mrf.mxu0
  %4185 = vmatprep.mubr.f32.mxu0 %v3669
  %4186 = vmatmul.mubr.f32.gmra.mxu0 %v3494
  %v4187 = vpop.f32.mrf.mxu0
  %v4188 = vadd.f32 0.0, %v4187
  %v4189 = vpop.f32.mrf.mxu0
  %4190 = vmatprep.mubr.f32.mxu0 %v3672
  %4191 = vmatmul.mubr.f32.gmra.mxu0 %v3496
  %v4192 = vpop.f32.mrf.mxu0
  %v4193 = vadd.f32 0.0, %v4192
  %v4194 = vpop.f32.mrf.mxu0
  %4195 = vmatprep.mubr.f32.mxu0 %v3675
  %4196 = vmatmul.mubr.f32.gmra.mxu0 %v3498
  %v4197 = vpop.f32.mrf.mxu0
  %v4198 = vadd.f32 0.0, %v4197
  %v4199 = vpop.f32.mrf.mxu0
  %4200 = vmatprep.mubr.f32.mxu0 %v3678
  %4201 = vmatmul.mubr.f32.gmra.mxu0 %v3500
  %v4202 = vpop.f32.mrf.mxu0
  %v4203 = vadd.f32 0.0, %v4202
  %v4204 = vpop.f32.mrf.mxu0
  %4205 = vmatprep.mubr.f32.mxu0 %v3681
  %4206 = vmatmul.mubr.f32.gmra.mxu0 %v3502
  %v4207 = vpop.f32.mrf.mxu0
  %v4208 = vadd.f32 0.0, %v4207
  %v4209 = vpop.f32.mrf.mxu0
  %4210 = vmatprep.mubr.f32.mxu0 %v3684
  %4211 = vmatmul.mubr.f32.gmra.mxu0 %v3504
  %v4212 = vpop.f32.mrf.mxu0
  %v4213 = vadd.f32 0.0, %v4212
  %v4214 = vpop.f32.mrf.mxu0
  %4215 = vmatprep.mubr.f32.mxu0 %v3687
  %4216 = vmatmul.mubr.f32.gmra.mxu0 %v3506
  %v4217 = vpop.f32.mrf.mxu0
  %v4218 = vadd.f32 0.0, %v4217
  %v4219 = vpop.f32.mrf.mxu0
  %4220 = vmatprep.mubr.f32.mxu0 %v3690
  %4221 = vmatmul.mubr.f32.gmra.mxu0 %v3508
  %v4222 = vpop.f32.mrf.mxu0
  %v4223 = vadd.f32 0.0, %v4222
  %v4224 = vpop.f32.mrf.mxu0
  %4225 = vmatprep.mubr.f32.mxu0 %v3693
  %4226 = vmatmul.mubr.f32.gmra.mxu0 %v3510
  %v4227 = vpop.f32.mrf.mxu0
  %v4228 = vadd.f32 0.0, %v4227
  %v4229 = vpop.f32.mrf.mxu0
  %4230 = vdwg.mxu0
  %s4231 = scalar_lea.vmem %s2, 672
  %4232 = vst [vmem:[%s4231] sm:$0xff] %v3762
  %4233 = vst [vmem:[%s4231 + $0x8] sm:$0xff] %v3764
  %4234 = vst [vmem:[%s4231 + $0x10] sm:$0xff] %v3899
  %4235 = vst [vmem:[%s4231 + $0x18] sm:$0xff] %v3901
  %4236 = vst [vmem:[%s4231 + $0x20] sm:$0xff] %v4036
  %4237 = vst [vmem:[%s4231 + $0x28] sm:$0xff] %v4038
  %4238 = vst.msk [vmem:[%s4231 + $0x30] sm:$0xff] %vm179, %v4173
  %4239 = vst [vmem:[%s4231 + $0x38] sm:$0xff] %v3768
  %4240 = vst [vmem:[%s4231 + $0x40] sm:$0xff] %v3770
  %4241 = vst [vmem:[%s4231 + $0x48] sm:$0xff] %v3905
  %4242 = vst [vmem:[%s4231 + $0x50] sm:$0xff] %v3907
  %4243 = vst [vmem:[%s4231 + $0x58] sm:$0xff] %v4042
  %4244 = vst [vmem:[%s4231 + $0x60] sm:$0xff] %v4044
  %4245 = vst.msk [vmem:[%s4231 + $0x68] sm:$0xff] %vm179, %v4178
  %4246 = vst [vmem:[%s4231 + $0x70] sm:$0xff] %v3774
  %4247 = vst [vmem:[%s4231 + $0x78] sm:$0xff] %v3776
  %4248 = vst [vmem:[%s4231 + $0x80] sm:$0xff] %v3911
  %4249 = vst [vmem:[%s4231 + $0x88] sm:$0xff] %v3913
  %4250 = vst [vmem:[%s4231 + $0x90] sm:$0xff] %v4048
  %4251 = vst [vmem:[%s4231 + $0x98] sm:$0xff] %v4050
  %4252 = vst.msk [vmem:[%s4231 + $0xa0] sm:$0xff] %vm179, %v4183
  %4253 = vst [vmem:[%s4231 + $0xa8] sm:$0xff] %v3780
  %4254 = vst [vmem:[%s4231 + $0xb0] sm:$0xff] %v3782
  %4255 = vst [vmem:[%s4231 + $0xb8] sm:$0xff] %v3917
  %4256 = vst [vmem:[%s4231 + $0xc0] sm:$0xff] %v3919
  %4257 = vst [vmem:[%s4231 + $0xc8] sm:$0xff] %v4054
  %4258 = vst [vmem:[%s4231 + $0xd0] sm:$0xff] %v4056
  %4259 = vst.msk [vmem:[%s4231 + $0xd8] sm:$0xff] %vm179, %v4188
  %4260 = vst [vmem:[%s4231 + $0xe0] sm:$0xff] %v3786
  %4261 = vst [vmem:[%s4231 + $0xe8] sm:$0xff] %v3788
  %4262 = vst [vmem:[%s4231 + $0xf0] sm:$0xff] %v3923
  %4263 = vst [vmem:[%s4231 + $0xf8] sm:$0xff] %v3925
  %4264 = vst [vmem:[%s4231 + $0x100] sm:$0xff] %v4060
  %4265 = vst [vmem:[%s4231 + $0x108] sm:$0xff] %v4062
  %4266 = vst.msk [vmem:[%s4231 + $0x110] sm:$0xff] %vm179, %v4193
  %4267 = vst [vmem:[%s4231 + $0x118] sm:$0xff] %v3792
  %4268 = vst [vmem:[%s4231 + $0x120] sm:$0xff] %v3794
  %4269 = vst [vmem:[%s4231 + $0x128] sm:$0xff] %v3929
  %4270 = vst [vmem:[%s4231 + $0x130] sm:$0xff] %v3931
  %4271 = vst [vmem:[%s4231 + $0x138] sm:$0xff] %v4066
  %4272 = vst [vmem:[%s4231 + $0x140] sm:$0xff] %v4068
  %4273 = vst.msk [vmem:[%s4231 + $0x148] sm:$0xff] %vm179, %v4198
  %4274 = vst [vmem:[%s4231 + $0x150] sm:$0xff] %v3798
  %4275 = vst [vmem:[%s4231 + $0x158] sm:$0xff] %v3800
  %4276 = vst [vmem:[%s4231 + $0x160] sm:$0xff] %v3935
  %4277 = vst [vmem:[%s4231 + $0x168] sm:$0xff] %v3937
  %4278 = vst [vmem:[%s4231 + $0x170] sm:$0xff] %v4072
  %4279 = vst [vmem:[%s4231 + $0x178] sm:$0xff] %v4074
  %4280 = vst.msk [vmem:[%s4231 + $0x180] sm:$0xff] %vm179, %v4203
  %4281 = vst [vmem:[%s4231 + $0x188] sm:$0xff] %v3804
  %4282 = vst [vmem:[%s4231 + $0x190] sm:$0xff] %v3806
  %4283 = vst [vmem:[%s4231 + $0x198] sm:$0xff] %v3941
  %4284 = vst [vmem:[%s4231 + $0x1a0] sm:$0xff] %v3943
  %4285 = vst [vmem:[%s4231 + $0x1a8] sm:$0xff] %v4078
  %4286 = vst [vmem:[%s4231 + $0x1b0] sm:$0xff] %v4080
  %4287 = vst.msk [vmem:[%s4231 + $0x1b8] sm:$0xff] %vm179, %v4208
  %4288 = vst [vmem:[%s4231 + $0x1c0] sm:$0xff] %v3810
  %4289 = vst [vmem:[%s4231 + $0x1c8] sm:$0xff] %v3812
  %4290 = vst [vmem:[%s4231 + $0x1d0] sm:$0xff] %v3947
  %4291 = vst [vmem:[%s4231 + $0x1d8] sm:$0xff] %v3949
  %4292 = vst [vmem:[%s4231 + $0x1e0] sm:$0xff] %v4084
  %4293 = vst [vmem:[%s4231 + $0x1e8] sm:$0xff] %v4086
  %4294 = vst.msk [vmem:[%s4231 + $0x1f0] sm:$0xff] %vm179, %v4213
  %4295 = vst [vmem:[%s4231 + $0x1f8] sm:$0xff] %v3816
  %4296 = vst [vmem:[%s4231 + $0x200] sm:$0xff] %v3818
  %4297 = vst [vmem:[%s4231 + $0x208] sm:$0xff] %v3953
  %4298 = vst [vmem:[%s4231 + $0x210] sm:$0xff] %v3955
  %4299 = vst [vmem:[%s4231 + $0x218] sm:$0xff] %v4090
  %4300 = vst [vmem:[%s4231 + $0x220] sm:$0xff] %v4092
  %4301 = vst.msk [vmem:[%s4231 + $0x228] sm:$0xff] %vm179, %v4218
  %4302 = vst [vmem:[%s4231 + $0x230] sm:$0xff] %v3822
  %4303 = vst [vmem:[%s4231 + $0x238] sm:$0xff] %v3824
  %4304 = vst [vmem:[%s4231 + $0x240] sm:$0xff] %v3959
  %4305 = vst [vmem:[%s4231 + $0x248] sm:$0xff] %v3961
  %4306 = vst [vmem:[%s4231 + $0x250] sm:$0xff] %v4096
  %4307 = vst [vmem:[%s4231 + $0x258] sm:$0xff] %v4098
  %4308 = vst.msk [vmem:[%s4231 + $0x260] sm:$0xff] %vm179, %v4223
  %4309 = vst [vmem:[%s4231 + $0x268] sm:$0xff] %v3828
  %4310 = vst [vmem:[%s4231 + $0x270] sm:$0xff] %v3830
  %4311 = vst [vmem:[%s4231 + $0x278] sm:$0xff] %v3965
  %4312 = vst [vmem:[%s4231 + $0x280] sm:$0xff] %v3967
  %4313 = vst [vmem:[%s4231 + $0x288] sm:$0xff] %v4102
  %4314 = vst [vmem:[%s4231 + $0x290] sm:$0xff] %v4104
  %4315 = vst.msk [vmem:[%s4231 + $0x298] sm:$0xff] %vm179, %v4228
  // Predicated region
  $region10: #{kernel_generated_3_forward.1} parent=0 // pred_check
    _
  $region11: #{kernel_generated_3_forward.1} parent=0 // pred_check_branch
    %4317 = sbr.rel (0) target = $region13
  $region12: #{kernel_generated_3_forward.1} parent=0 // pred_region
    _
  $region13: #{kernel_generated_3_forward.1} parent=0 // pred_fallthru
    _
  // Predicated region
  $region14: #{kernel_generated_3_forward.1} parent=0 // pred_check
    _
  $region15: #{kernel_generated_3_forward.1} parent=0 // pred_check_branch
    %4319 = sbr.rel (0) target = $region17
  $region16: #{kernel_generated_3_forward.1} parent=0 // pred_region
    _
  $region17: #{kernel_generated_3_forward.1} parent=0 // pred_fallthru
    _

</llo_original>
